<compile_context>
chip_gen: v5e
topology: v5e:2x2
jax: 0.10.0
libtpu: 0.0.40
codegen_flags: <defaults>
</compile_context>

<pallas_src>
import functools

import jax
import jax.numpy as jnp
from jax.experimental import pallas as pl
from jax.experimental.pallas import tpu as pltpu


def _vmem_limit_bytes():
  # v7x has only 64 MiB of VMEM per TensorCore; v5e/v6e have 128 MiB.  Query
  # when possible, otherwise fall back to a value that is safe everywhere.
  try:
    cap = pltpu.get_tpu_info().vmem_capacity_bytes
    return int(min(96 * 1024 * 1024, cap * 3 // 4))
  except Exception:  # pylint: disable=broad-except
    return 48 * 1024 * 1024


_VMEM_LIMIT = _vmem_limit_bytes()


def _cp(sem):
  return pltpu.CompilerParams(dimension_semantics=sem,
                              vmem_limit_bytes=_VMEM_LIMIT)


def _lane_tile(n, cap):
  """Lane tile: the full dim if it fits under `cap`, else a multiple-of-128
  tile (the grid is then pl.cdiv(n, tile) with in-kernel tail masking)."""
  if n <= cap:
    return n
  return max(128, cap - cap % 128)


# ----------------------------------------------------------------------------
# Fused per-resolution loss stage.
#   lanes of the (8,128) partial block:
#     0: sum|x_o - gt|          1: sum m*|x_o - gt|
#     2: sum|f_out - f_gt|      3: sum|f_comp - f_gt|
#     4: sum|out - gt|  (A)     5: sum m*|out - gt|  (A)
#     6: discriminator sum (A)  7: style sum (out)     8: style sum (comp)
# ----------------------------------------------------------------------------
def _stage_kernel(*refs, n_conv, full_res, hw_total, hw_t, gram_scale):
  m_ref, in_ref, out_ref, gt_ref, xo_ref = refs[:5]
  w_refs = refs[5:5 + n_conv]
  pos = 5 + n_conv
  wd_ref = refs[pos] if full_res else None
  pos += 1 if full_res else 0
  part_ref = refs[pos]
  g_scr = refs[pos + 1]

  t = pl.program_id(1)
  nt = pl.num_programs(1)

  m = m_ref[0]          # (1, hw_t) mask -- broadcast over channels in-register
  x_in = in_ref[0]      # (C, hw_t)
  x_out = out_ref[0]
  x_gt = gt_ref[0]
  x_o = xo_ref[0]

  if hw_total % hw_t:   # ragged tail -> zero out-of-range lanes (NaN-safe)
    lane = jax.lax.broadcasted_iota(jnp.int32, (1, hw_t), 1)
    ok = (t * hw_t + lane) < hw_total
    m = jnp.where(ok, m, 0.0)
    x_in = jnp.where(ok, x_in, 0.0)
    x_out = jnp.where(ok, x_out, 0.0)
    x_gt = jnp.where(ok, x_gt, 0.0)
    x_o = jnp.where(ok, x_o, 0.0)

  # ---- masked L1 of this resolution (hole = total - valid in the wrapper) --
  d_xo = jnp.abs(x_o - x_gt)
  tot_xo = jnp.sum(d_xo)
  val_xo = jnp.sum(m * d_xo)

  # ---- composite + extractor chain (features never leave VMEM) ------------
  comp = m * x_in + (1.0 - m) * x_out

  def chain(x):
    f = x
    for w_ref in w_refs:
      w = w_ref[...]                       # (c_out, c_in)
      c_in = w.shape[1]
      if c_in < 16:                        # tiny K: lane-dense VPU FMAs
        acc = w[:, 0:1] * f[0:1, :]
        for k in range(1, c_in):
          acc = acc + w[:, k:k + 1] * f[k:k + 1, :]
      else:                                # K >= 16: MXU matmul (f32)
        acc = jnp.dot(w, f, preferred_element_type=jnp.float32)
      f = jnp.maximum(acc, 0.0)            # ReLU
    return f

  f_comp = chain(comp)
  f_out = chain(x_out)
  f_gt = chain(x_gt)

  p_out = jnp.sum(jnp.abs(f_out - f_gt))
  p_comp = jnp.sum(jnp.abs(f_comp - f_gt))

  # ---- per-batch gram accumulation in VMEM scratch (channel-major) --------
  @pl.when(t == 0)
  def _():
    g_scr[...] = jnp.zeros_like(g_scr)

  for k, f in enumerate((f_comp, f_out, f_gt)):
    g_scr[k] = g_scr[k] + jax.lax.dot_general(
        f, f, (((1,), (1,)), ((), ())), preferred_element_type=jnp.float32)

  # ---- per-block partial sums into a lane-padded (8, 128) output ----------
  row = jax.lax.broadcasted_iota(jnp.int32, (8, 128), 0)
  lane2 = jax.lax.broadcasted_iota(jnp.int32, (8, 128), 1)

  def put(vec, i, v):
    return vec + jnp.where(jnp.logical_and(row == 0, lane2 == i), v, 0.0)

  vec = jnp.zeros((8, 128), jnp.float32)
  vec = put(vec, 0, tot_xo)
  vec = put(vec, 1, val_xo)
  vec = put(vec, 2, p_out)
  vec = put(vec, 3, p_comp)

  if full_res:
    d_out = jnp.abs(x_out - x_gt)
    vec = put(vec, 4, jnp.sum(d_out))
    vec = put(vec, 5, jnp.sum(m * d_out))
    # Discriminator stand-in: mask * 1x1 conv * leakyReLU, mean fused here.
    wd = wd_ref[...]                       # (Nd, C)
    xm = m * x_out
    dacc = wd[:, 0:1] * xm[0:1, :]
    for k in range(1, wd.shape[1]):
      dacc = dacc + wd[:, k:k + 1] * xm[k:k + 1, :]
    dacc = jnp.where(dacc >= 0.0, dacc, 0.2 * dacc)
    vec = put(vec, 6, jnp.sum(dacc))

  part_ref[0, 0] = vec

  @pl.when(t == nt - 1)                    # gram finalize -> style partials
  def _():
    g = g_scr[...]
    s_out = gram_scale * jnp.sum(jnp.abs(g[1] - g[2]))
    s_comp = gram_scale * jnp.sum(jnp.abs(g[0] - g[2]))
    part_ref[0, 0] = put(put(part_ref[0, 0], 7, s_out), 8, s_comp)


def fused_stage(mask_f, in_f, out_f, gt_f, cand_f, ws, wd, lane_cap):
  """Runs one fused loss stage; returns a (128,) vector of summed partials."""
  B, C, hw = gt_f.shape
  hw_t = _lane_tile(hw, lane_cap)
  nt = pl.cdiv(hw, hw_t)
  c_last = ws[-1].shape[0]
  full_res = wd is not None

  img_spec = pl.BlockSpec((1, C, hw_t), lambda b, t: (b, 0, t))
  in_specs = [pl.BlockSpec((1, 1, hw_t), lambda b, t: (b, 0, t)),
              img_spec, img_spec, img_spec, img_spec]
  args = [mask_f, in_f, out_f, gt_f, cand_f]
  for w in ws:
    in_specs.append(pl.BlockSpec(w.shape, lambda b, t: (0, 0)))
    args.append(w)
  if full_res:
    in_specs.append(pl.BlockSpec(wd.shape, lambda b, t: (0, 0)))
    args.append(wd)

  parts = pl.pallas_call(
      functools.partial(_stage_kernel, n_conv=len(ws), full_res=full_res,
                        hw_total=hw, hw_t=hw_t,
                        gram_scale=1.0 / (c_last * hw)),
      grid=(B, nt),
      in_specs=in_specs,
      out_specs=pl.BlockSpec((1, 1, 8, 128), lambda b, t: (b, t, 0, 0)),
      out_shape=jax.ShapeDtypeStruct((B, nt, 8, 128), jnp.float32),
      scratch_shapes=[pltpu.VMEM((3, c_last, c_last), jnp.float32)],
      # batch axis "parallel" (v7x megacore); the hw axis feeds the gram
      # scratch so it stays "arbitrary".
      compiler_params=_cp(("parallel", "arbitrary")),
  )(*args)
  return parts.sum(axis=(0, 1, 2))


# ----------------------------------------------------------------------------
# Dice loss: tiled over HW, per-block partials of (a, b, c); complement of the
# mask and the sigmoid are computed in-kernel.
# ----------------------------------------------------------------------------
def _dice_kernel(mm_ref, m_ref, part_ref, *, hw_total, hw_t):
  t = pl.program_id(1)
  x = jax.nn.sigmoid(mm_ref[0])            # (1, hw_t)
  tgt = 1.0 - m_ref[0]                     # dice_loss(mm, 1 - mask)
  if hw_total % hw_t:
    lane = jax.lax.broadcasted_iota(jnp.int32, (1, hw_t), 1)
    ok = (t * hw_t + lane) < hw_total
    x = jnp.where(ok, x, 0.0)
    tgt = jnp.where(ok, tgt, 0.0)
  row = jax.lax.broadcasted_iota(jnp.int32, (8, 128), 0)
  lane2 = jax.lax.broadcasted_iota(jnp.int32, (8, 128), 1)

  def put(vec, i, v):
    return vec + jnp.where(jnp.logical_and(row == 0, lane2 == i), v, 0.0)

  vec = jnp.zeros((8, 128), jnp.float32)
  vec = put(vec, 0, jnp.sum(x * tgt))
  vec = put(vec, 1, jnp.sum(x * x))
  vec = put(vec, 2, jnp.sum(tgt * tgt))
  part_ref[0, 0] = vec


def dice_loss(mm, mask, lane_cap=32768):
  B = mm.shape[0]
  x = mm.reshape(B, 1, -1).astype(jnp.float32)
  m = mask.reshape(B, 1, -1).astype(jnp.float32)
  hw = x.shape[2]
  hw_t = _lane_tile(hw, lane_cap)
  nt = pl.cdiv(hw, hw_t)
  parts = pl.pallas_call(
      functools.partial(_dice_kernel, hw_total=hw, hw_t=hw_t),
      grid=(B, nt),
      in_specs=[pl.BlockSpec((1, 1, hw_t), lambda b, t: (b, 0, t))] * 2,
      out_specs=pl.BlockSpec((1, 1, 8, 128), lambda b, t: (b, t, 0, 0)),
      out_shape=jax.ShapeDtypeStruct((B, nt, 8, 128), jnp.float32),
      compiler_params=_cp(("parallel", "parallel")),
  )(x, m)
  s = parts.sum(axis=(1, 2))               # (B, 128) per-batch sums
  a = s[:, 0]
  bb = s[:, 1] + 0.001
  cc = s[:, 2] + 0.001
  return 1.0 - jnp.mean(2.0 * a / (bb + cc))


# ----------------------------------------------------------------------------
# Full Loss.forward
# ----------------------------------------------------------------------------
def loss_forward(params, input_, mask, x_o1, x_o2, x_o3, output, mm, gt):
  f32 = jnp.float32
  B, C, H, W = gt.shape
  hw = H * W

  # TODO(synk): the real VGG-style `extractor` is an external dependency; the
  # stand-in is a chain of 1x1 convs (stored (C_out, C_in)) with 2x nearest
  # pooling, folded into each stage since 1x1 conv/ReLU commute with nearest
  # downsampling.
  w0t, w1t, w2t = [w.astype(f32) for w in params["ext_ws"]]
  wd = params["disc_w"].astype(f32)
  c0, c1, c2 = w0t.shape[0], w1t.shape[0], w2t.shape[0]

  flat = lambda x: x.reshape(x.shape[0], x.shape[1], -1).astype(f32)

  # Nearest-neighbour pyramid of the raw images (== F.interpolate(nearest)).
  # TODO(synk): these ::2/::4 slices are plain XLA slices; they could be
  # folded into the full-res kernel as extra strided outputs.
  ds2 = lambda x: x[:, :, ::2, ::2]
  ds4 = lambda x: x[:, :, ::4, ::4]
  mask2, in2, out2, gt2 = map(ds2, (mask, input_, output, gt))
  mask4, in4, out4, gt4 = map(ds4, (mask, input_, output, gt))
  hw2 = gt2.shape[2] * gt2.shape[3]
  hw4 = gt4.shape[2] * gt4.shape[3]

  # ---- three fused stages cover every masked-L1 / prc / style / D term ----
  pA = fused_stage(flat(mask), flat(input_), flat(output), flat(gt),
                   flat(x_o3), [w0t], wd, lane_cap=16384)
  pB = fused_stage(flat(mask2), flat(in2), flat(out2), flat(gt2),
                   flat(x_o2), [w0t, w1t], None, lane_cap=8192)
  pC = fused_stage(flat(mask4), flat(in4), flat(out4), flat(gt4),
                   flat(x_o1), [w0t, w1t, w2t], None, lane_cap=4096)

  n0, n2, n4 = B * C * hw, B * C * hw2, B * C * hw4

  tot_x3, val_x3 = pA[0], pA[1]
  tot_out, val_out = pA[4], pA[5]
  tot_x2, val_x2 = pB[0], pB[1]
  tot_x1, val_x1 = pC[0], pC[1]

  holeLoss = 10.0 * (tot_out - val_out) / n0
  validAreaLoss = 2.0 * val_out / n0
  msrloss = (8.0 * (tot_x3 - val_x3) / n0 + 0.8 * val_x3 / n0
             + 6.0 * (tot_x2 - val_x2) / n2 + 1.0 * val_x2 / n2
             + 5.0 * (tot_x1 - val_x1) / n4 + 0.8 * val_x1 / n4)

  prcLoss = 0.01 * ((pA[2] + pA[3]) / (B * c0 * hw)
                    + (pB[2] + pB[3]) / (B * c1 * hw2)
                    + (pC[2] + pC[3]) / (B * c2 * hw4))
  styleLoss = 120.0 * ((pA[7] + pA[8]) / (B * c0 * c0)
                       + (pB[7] + pB[8]) / (B * c1 * c1)
                       + (pC[7] + pC[8]) / (B * c2 * c2))

  # TODO(synk): Discriminator_STE is an external module (stand-in: masked 1x1
  # conv + leaky ReLU fused into stage A); D_real / D_loss / the Adam
  # discriminator update are training-time in-place side effects that do not
  # affect the returned GLoss.
  D_fake = -pA[6] / (B * wd.shape[0] * hw)

  mask_loss = dice_loss(mm, mask)          # == dice_loss(mm, 1 - mask)

  GLoss = (msrloss + holeLoss + validAreaLoss + prcLoss + styleLoss
           + 0.1 * D_fake + mask_loss)
  return GLoss                             # .sum() on a scalar is a no-op


# ----------------------------------------------------------------------------
# Pure-JAX reference (same stand-ins), for validation.
# ----------------------------------------------------------------------------
def _reference_loss(params, input_, mask, x_o1, x_o2, x_o3, output, mm, gt):
  f32 = jnp.float32
  mask, input_, output, gt = (a.astype(f32) for a in (mask, input_, output, gt))
  x_o1, x_o2, x_o3, mm = (a.astype(f32) for a in (x_o1, x_o2, x_o3, mm))
  l1 = lambda a, b: jnp.mean(jnp.abs(a - b))
  conv = lambda w, x: jax.nn.relu(jnp.einsum("oi,bihw->bohw", w, x))

  def extractor(x):
    w0, w1, w2 = params["ext_ws"]
    f0 = conv(w0, x)
    f1 = conv(w1, f0[:, :, ::2, ::2])
    f2 = conv(w2, f1[:, :, ::2, ::2])
    return [f0, f1, f2]

  def gram(f):
    b, ch, h, w = f.shape
    ff = f.reshape(b, ch, h * w)
    return jnp.einsum("bcm,bdm->bcd", ff, ff) / (ch * h * w)

  def dice(inp, target):
    x = jax.nn.sigmoid(inp).reshape(inp.shape[0], -1)
    t = target.reshape(target.shape[0], -1)
    a = jnp.sum(x * t, 1)
    b = jnp.sum(x * x, 1) + 0.001
    c = jnp.sum(t * t, 1) + 0.001
    return 1.0 - jnp.mean(2.0 * a / (b + c))

  wd = params["disc_w"]
  dmap = jnp.einsum("oi,bihw->bohw", wd, mask * output)
  dmap = jnp.where(dmap >= 0.0, dmap, 0.2 * dmap)
  D_fake = -jnp.mean(dmap)

  output_comp = mask * input_ + (1.0 - mask) * output
  holeLoss = 10.0 * l1((1 - mask) * output, (1 - mask) * gt)
  validAreaLoss = 2.0 * l1(mask * output, mask * gt)
  mask_loss = dice(mm, 1.0 - mask)

  masks_a, masks_b = mask[:, :, ::4, ::4], mask[:, :, ::2, ::2]
  imgs1, imgs2 = gt[:, :, ::4, ::4], gt[:, :, ::2, ::2]
  msrloss = (8.0 * l1((1 - mask) * x_o3, (1 - mask) * gt)
             + 0.8 * l1(mask * x_o3, mask * gt)
             + 6.0 * l1((1 - masks_b) * x_o2, (1 - masks_b) * imgs2)
             + 1.0 * l1(masks_b * x_o2, masks_b * imgs2)
             + 5.0 * l1((1 - masks_a) * x_o1, (1 - masks_a) * imgs1)
             + 0.8 * l1(masks_a * x_o1, masks_a * imgs1))

  feat_comp, feat_out, feat_gt = (extractor(output_comp), extractor(output),
                                  extractor(gt))
  prcLoss = 0.0
  styleLoss = 0.0
  for i in range(3):
    prcLoss += 0.01 * (l1(feat_out[i], feat_gt[i])
                       + l1(feat_comp[i], feat_gt[i]))
    styleLoss += 120.0 * (l1(gram(feat_out[i]), gram(feat_gt[i]))
                          + l1(gram(feat_comp[i]), gram(feat_gt[i])))

  return (msrloss + holeLoss + validAreaLoss + prcLoss + styleLoss
          + 0.1 * D_fake + mask_loss)


if __name__ == "__main__":
  B, C, H, W = 2, 3, 16, 16
  key = jax.random.PRNGKey(0)
  ks = jax.random.split(key, 12)

  input_ = jax.random.normal(ks[0], (B, C, H, W), jnp.float32)
  gt = jax.random.normal(ks[1], (B, C, H, W), jnp.float32)
  output = jax.random.normal(ks[2], (B, C, H, W), jnp.float32)
  x_o3 = jax.random.normal(ks[3], (B, C, H, W), jnp.float32)
  x_o2 = jax.random.normal(ks[4], (B, C, H // 2, W // 2), jnp.float32)
  x_o1 = jax.random.normal(ks[5], (B, C, H // 4, W // 4), jnp.float32)
  mask = (jax.random.uniform(ks[6], (B, 1, H, W)) > 0.5).astype(jnp.float32)
  mm = jax.random.normal(ks[7], (B, 1, H, W), jnp.float32)

  params = {
      # stand-in extractor: 1x1 convs 3->16->32->64 (stored (C_out, C_in)),
      # nearest 2x pooling between stages (folded into the fused kernels).
      "ext_ws": [
          0.1 * jax.random.normal(ks[8], (16, 3), jnp.float32),
          0.1 * jax.random.normal(ks[9], (32, 16), jnp.float32),
          0.1 * jax.random.normal(ks[10], (64, 32), jnp.float32),
      ],
      # stand-in Discriminator_STE(3): masked input -> 1x1 conv 3->8 + lrelu
      "disc_w": 0.1 * jax.random.normal(ks[11], (8, 3), jnp.float32),
  }

  loss_fn = jax.jit(loss_forward)
  gloss = jax.block_until_ready(
      loss_fn(params, input_, mask, x_o1, x_o2, x_o3, output, mm, gt))
  ref = jax.block_until_ready(
      jax.jit(_reference_loss)(params, input_, mask, x_o1, x_o2, x_o3,
                               output, mm, gt))

  assert gloss.shape == () and bool(jnp.isfinite(gloss))
  rel = abs(float(gloss) - float(ref)) / max(1.0, abs(float(ref)))
  assert rel < 2e-2, f"mismatch: pallas={float(gloss)} ref={float(ref)}"
  print("KERNEL_OK")
</pallas_src>

<mosaic_0001>
module attributes {stable_mosaic.version = 11 : i64} {
  func.func @_dice_kernel(%arg0: i32, %arg1: i32, %arg2: memref<1x1x256xf32, #tpu.memory_space<vmem>>, %arg3: memref<1x1x256xf32, #tpu.memory_space<vmem>>, %arg4: memref<1x1x8x128xf32, #tpu.memory_space<vmem>>) attributes {dimension_semantics = [#tpu.dimension_semantics<parallel>, #tpu.dimension_semantics<parallel>], iteration_bounds = array<i64: 2, 1>, scalar_prefetch = 0 : i64, scratch_operands = 0 : i64, tpu.core_type = #tpu.core_type<tc>, window_params = [{transform_indices = @transform_0, window_bounds = array<i64: 1, 1, 256>}, {transform_indices = @transform_1, window_bounds = array<i64: 1, 1, 256>}, {transform_indices = @transform_2, window_bounds = array<i64: 1, 1, 8, 128>}]} {
    %c0 = arith.constant 0 : index
    %c0_0 = arith.constant 0 : index
    %c0_1 = arith.constant 0 : index
    %0 = vector.load %arg2[%c0, %c0_0, %c0_1] : memref<1x1x256xf32, #tpu.memory_space<vmem>>, vector<1x1x256xf32>
    %1 = vector.shape_cast %0 : vector<1x1x256xf32> to vector<1x256xf32>
    %2 = arith.negf %1 : vector<1x256xf32>
    %3 = math.exp %2 : vector<1x256xf32>
    %cst = arith.constant 1.000000e+00 : f32
    %4 = vector.broadcast %cst : f32 to vector<1x256xf32>
    %5 = arith.addf %4, %3 : vector<1x256xf32>
    %6 = arith.divf %4, %5 : vector<1x256xf32>
    %c0_2 = arith.constant 0 : index
    %c0_3 = arith.constant 0 : index
    %c0_4 = arith.constant 0 : index
    %7 = vector.load %arg3[%c0_2, %c0_3, %c0_4] : memref<1x1x256xf32, #tpu.memory_space<vmem>>, vector<1x1x256xf32>
    %8 = vector.shape_cast %7 : vector<1x1x256xf32> to vector<1x256xf32>
    %cst_5 = arith.constant 1.000000e+00 : f32
    %9 = vector.broadcast %cst_5 : f32 to vector<1x256xf32>
    %10 = arith.subf %9, %8 : vector<1x256xf32>
    %11 = tpu.iota {dimensions = array<i32: 0>} : vector<8x128xi32>
    %12 = tpu.iota {dimensions = array<i32: 1>} : vector<8x128xi32>
    %cst_6 = arith.constant 0.000000e+00 : f32
    %13 = vector.broadcast %cst_6 : f32 to vector<8x128xf32>
    %14 = arith.mulf %6, %10 : vector<1x256xf32>
    %15 = vector.shape_cast %14 : vector<1x256xf32> to vector<1x1x256xf32>
    %cst_7 = arith.constant dense<0.000000e+00> : vector<1xf32>
    %16 = vector.multi_reduction <add>, %15, %cst_7 [1, 2] : vector<1x1x256xf32> to vector<1xf32>
    %17 = vector.shape_cast %16 : vector<1xf32> to vector<1x1x1xf32>
    %18 = vector.extract %17[0, 0, 0] : f32 from vector<1x1x1xf32>
    %c0_i32 = arith.constant 0 : i32
    %19 = vector.broadcast %c0_i32 : i32 to vector<8x128xi32>
    %20 = arith.cmpi eq, %11, %19 : vector<8x128xi32>
    %c0_i32_8 = arith.constant 0 : i32
    %21 = vector.broadcast %c0_i32_8 : i32 to vector<8x128xi32>
    %22 = arith.cmpi eq, %12, %21 : vector<8x128xi32>
    %23 = arith.andi %20, %22 : vector<8x128xi1>
    %cst_9 = arith.constant 0.000000e+00 : f32
    %24 = vector.broadcast %18 : f32 to vector<8x128xf32>
    %25 = vector.broadcast %cst_9 : f32 to vector<8x128xf32>
    %26 = arith.select %23, %24, %25 : vector<8x128xi1>, vector<8x128xf32>
    %27 = arith.addf %13, %26 : vector<8x128xf32>
    %28 = arith.mulf %6, %6 : vector<1x256xf32>
    %29 = vector.shape_cast %28 : vector<1x256xf32> to vector<1x1x256xf32>
    %cst_10 = arith.constant dense<0.000000e+00> : vector<1xf32>
    %30 = vector.multi_reduction <add>, %29, %cst_10 [1, 2] : vector<1x1x256xf32> to vector<1xf32>
    %31 = vector.shape_cast %30 : vector<1xf32> to vector<1x1x1xf32>
    %32 = vector.extract %31[0, 0, 0] : f32 from vector<1x1x1xf32>
    %c0_i32_11 = arith.constant 0 : i32
    %33 = vector.broadcast %c0_i32_11 : i32 to vector<8x128xi32>
    %34 = arith.cmpi eq, %11, %33 : vector<8x128xi32>
    %c1_i32 = arith.constant 1 : i32
    %35 = vector.broadcast %c1_i32 : i32 to vector<8x128xi32>
    %36 = arith.cmpi eq, %12, %35 : vector<8x128xi32>
    %37 = arith.andi %34, %36 : vector<8x128xi1>
    %cst_12 = arith.constant 0.000000e+00 : f32
    %38 = vector.broadcast %32 : f32 to vector<8x128xf32>
    %39 = vector.broadcast %cst_12 : f32 to vector<8x128xf32>
    %40 = arith.select %37, %38, %39 : vector<8x128xi1>, vector<8x128xf32>
    %41 = arith.addf %27, %40 : vector<8x128xf32>
    %42 = arith.mulf %10, %10 : vector<1x256xf32>
    %43 = vector.shape_cast %42 : vector<1x256xf32> to vector<1x1x256xf32>
    %cst_13 = arith.constant dense<0.000000e+00> : vector<1xf32>
    %44 = vector.multi_reduction <add>, %43, %cst_13 [1, 2] : vector<1x1x256xf32> to vector<1xf32>
    %45 = vector.shape_cast %44 : vector<1xf32> to vector<1x1x1xf32>
    %46 = vector.extract %45[0, 0, 0] : f32 from vector<1x1x1xf32>
    %c0_i32_14 = arith.constant 0 : i32
    %47 = vector.broadcast %c0_i32_14 : i32 to vector<8x128xi32>
    %48 = arith.cmpi eq, %11, %47 : vector<8x128xi32>
    %c2_i32 = arith.constant 2 : i32
    %49 = vector.broadcast %c2_i32 : i32 to vector<8x128xi32>
    %50 = arith.cmpi eq, %12, %49 : vector<8x128xi32>
    %51 = arith.andi %48, %50 : vector<8x128xi1>
    %cst_15 = arith.constant 0.000000e+00 : f32
    %52 = vector.broadcast %46 : f32 to vector<8x128xf32>
    %53 = vector.broadcast %cst_15 : f32 to vector<8x128xf32>
    %54 = arith.select %51, %52, %53 : vector<8x128xi1>, vector<8x128xf32>
    %55 = arith.addf %41, %54 : vector<8x128xf32>
    %c0_16 = arith.constant 0 : index
    %c0_17 = arith.constant 0 : index
    %c0_18 = arith.constant 0 : index
    %c0_19 = arith.constant 0 : index
    %56 = vector.load %arg4[%c0_16, %c0_17, %c0_18, %c0_19] : memref<1x1x8x128xf32, #tpu.memory_space<vmem>>, vector<1x1x8x128xf32>
    %57 = vector.shape_cast %56 : vector<1x1x8x128xf32> to vector<8x128xf32>
    %58 = vector.shape_cast %55 : vector<8x128xf32> to vector<1x1x8x128xf32>
    tpu.vector_store %arg4[%c0_16, %c0_17, %c0_18, %c0_19], %58 {strides = array<i32>} : memref<1x1x8x128xf32, #tpu.memory_space<vmem>>, vector<1x1x8x128xf32>,
    return
  }
  func.func @transform_0(%arg0: i32, %arg1: i32) -> (i32, i32, i32) {
    %c0_i32 = arith.constant 0 : i32
    %c0_i32_0 = arith.constant 0 : i32
    return %arg0, %c0_i32, %arg1 : i32, i32, i32
  }
  func.func @transform_1(%arg0: i32, %arg1: i32) -> (i32, i32, i32) {
    %c0_i32 = arith.constant 0 : i32
    %c0_i32_0 = arith.constant 0 : i32
    return %arg0, %c0_i32, %arg1 : i32, i32, i32
  }
  func.func @transform_2(%arg0: i32, %arg1: i32) -> (i32, i32, i32, i32) {
    %c0_i32 = arith.constant 0 : i32
    %c0_i32_0 = arith.constant 0 : i32
    %c0_i32_1 = arith.constant 0 : i32
    return %arg0, %arg1, %c0_i32, %c0_i32_0 : i32, i32, i32, i32
  }
}

module attributes {stable_mosaic.version = 11 : i64} {
  func.func @_stage_kernel(%arg0: i32, %arg1: i32, %arg2: memref<1x1x256xf32, #tpu.memory_space<vmem>>, %arg3: memref<1x3x256xf32, #tpu.memory_space<vmem>>, %arg4: memref<1x3x256xf32, #tpu.memory_space<vmem>>, %arg5: memref<1x3x256xf32, #tpu.memory_space<vmem>>, %arg6: memref<1x3x256xf32, #tpu.memory_space<vmem>>, %arg7: memref<16x3xf32, #tpu.memory_space<vmem>>, %arg8: memref<8x3xf32, #tpu.memory_space<vmem>>, %arg9: memref<1x1x8x128xf32, #tpu.memory_space<vmem>>, %arg10: memref<3x16x16xf32, #tpu.memory_space<vmem>>) attributes {dimension_semantics = [#tpu.dimension_semantics<parallel>, #tpu.dimension_semantics<arbitrary>], iteration_bounds = array<i64: 2, 1>, scalar_prefetch = 0 : i64, scratch_operands = 1 : i64, tpu.core_type = #tpu.core_type<tc>, window_params = [{transform_indices = @transform_0, window_bounds = array<i64: 1, 1, 256>}, {transform_indices = @transform_1, window_bounds = array<i64: 1, 3, 256>}, {transform_indices = @transform_2, window_bounds = array<i64: 1, 3, 256>}, {transform_indices = @transform_3, window_bounds = array<i64: 1, 3, 256>}, {transform_indices = @transform_4, window_bounds = array<i64: 1, 3, 256>}, {pipeline_mode = #tpu.pipeline_mode<synchronous>, transform_indices = @transform_5, window_bounds = array<i64: 16, 3>}, {pipeline_mode = #tpu.pipeline_mode<synchronous>, transform_indices = @transform_6, window_bounds = array<i64: 8, 3>}, {transform_indices = @transform_7, window_bounds = array<i64: 1, 1, 8, 128>}]} {
    %c0 = arith.constant 0 : index
    %c0_0 = arith.constant 0 : index
    %c0_1 = arith.constant 0 : index
    %0 = vector.load %arg2[%c0, %c0_0, %c0_1] : memref<1x1x256xf32, #tpu.memory_space<vmem>>, vector<1x1x256xf32>
    %1 = vector.shape_cast %0 : vector<1x1x256xf32> to vector<1x256xf32>
    %c0_2 = arith.constant 0 : index
    %c0_3 = arith.constant 0 : index
    %c0_4 = arith.constant 0 : index
    %2 = vector.load %arg3[%c0_2, %c0_3, %c0_4] : memref<1x3x256xf32, #tpu.memory_space<vmem>>, vector<1x3x256xf32>
    %3 = vector.shape_cast %2 : vector<1x3x256xf32> to vector<3x256xf32>
    %c0_5 = arith.constant 0 : index
    %c0_6 = arith.constant 0 : index
    %c0_7 = arith.constant 0 : index
    %4 = vector.load %arg4[%c0_5, %c0_6, %c0_7] : memref<1x3x256xf32, #tpu.memory_space<vmem>>, vector<1x3x256xf32>
    %5 = vector.shape_cast %4 : vector<1x3x256xf32> to vector<3x256xf32>
    %c0_8 = arith.constant 0 : index
    %c0_9 = arith.constant 0 : index
    %c0_10 = arith.constant 0 : index
    %6 = vector.load %arg5[%c0_8, %c0_9, %c0_10] : memref<1x3x256xf32, #tpu.memory_space<vmem>>, vector<1x3x256xf32>
    %7 = vector.shape_cast %6 : vector<1x3x256xf32> to vector<3x256xf32>
    %c0_11 = arith.constant 0 : index
    %c0_12 = arith.constant 0 : index
    %c0_13 = arith.constant 0 : index
    %8 = vector.load %arg6[%c0_11, %c0_12, %c0_13] : memref<1x3x256xf32, #tpu.memory_space<vmem>>, vector<1x3x256xf32>
    %9 = vector.shape_cast %8 : vector<1x3x256xf32> to vector<3x256xf32>
    %10 = arith.subf %9, %7 : vector<3x256xf32>
    %11 = math.absf %10 : vector<3x256xf32>
    %12 = vector.shape_cast %11 : vector<3x256xf32> to vector<1x3x256xf32>
    %cst = arith.constant dense<0.000000e+00> : vector<1xf32>
    %13 = vector.multi_reduction <add>, %12, %cst [1, 2] : vector<1x3x256xf32> to vector<1xf32>
    %14 = vector.shape_cast %13 : vector<1xf32> to vector<1x1x1xf32>
    %15 = vector.extract %14[0, 0, 0] : f32 from vector<1x1x1xf32>
    %16 = vector.broadcast %1 : vector<1x256xf32> to vector<3x256xf32>
    %17 = arith.mulf %16, %11 : vector<3x256xf32>
    %18 = vector.shape_cast %17 : vector<3x256xf32> to vector<1x3x256xf32>
    %cst_14 = arith.constant dense<0.000000e+00> : vector<1xf32>
    %19 = vector.multi_reduction <add>, %18, %cst_14 [1, 2] : vector<1x3x256xf32> to vector<1xf32>
    %20 = vector.shape_cast %19 : vector<1xf32> to vector<1x1x1xf32>
    %21 = vector.extract %20[0, 0, 0] : f32 from vector<1x1x1xf32>
    %22 = vector.broadcast %1 : vector<1x256xf32> to vector<3x256xf32>
    %23 = arith.mulf %22, %3 : vector<3x256xf32>
    %cst_15 = arith.constant 1.000000e+00 : f32
    %24 = vector.broadcast %cst_15 : f32 to vector<1x256xf32>
    %25 = arith.subf %24, %1 : vector<1x256xf32>
    %26 = vector.broadcast %25 : vector<1x256xf32> to vector<3x256xf32>
    %27 = arith.mulf %26, %5 : vector<3x256xf32>
    %28 = arith.addf %23, %27 : vector<3x256xf32>
    %c0_16 = arith.constant 0 : index
    %c0_17 = arith.constant 0 : index
    %29 = vector.load %arg7[%c0_16, %c0_17] : memref<16x3xf32, #tpu.memory_space<vmem>>, vector<16x3xf32>
    %30 = vector.extract_strided_slice %29 {offsets = [0, 0], sizes = [16, 1], strides = [1, 1]} : vector<16x3xf32> to vector<16x1xf32>
    %31 = vector.extract_strided_slice %28 {offsets = [0, 0], sizes = [1, 256], strides = [1, 1]} : vector<3x256xf32> to vector<1x256xf32>
    %32 = vector.broadcast %30 : vector<16x1xf32> to vector<16x256xf32>
    %33 = vector.broadcast %31 : vector<1x256xf32> to vector<16x256xf32>
    %34 = arith.mulf %32, %33 : vector<16x256xf32>
    %35 = vector.extract_strided_slice %29 {offsets = [0, 1], sizes = [16, 1], strides = [1, 1]} : vector<16x3xf32> to vector<16x1xf32>
    %36 = vector.extract_strided_slice %28 {offsets = [1, 0], sizes = [1, 256], strides = [1, 1]} : vector<3x256xf32> to vector<1x256xf32>
    %37 = vector.broadcast %35 : vector<16x1xf32> to vector<16x256xf32>
    %38 = vector.broadcast %36 : vector<1x256xf32> to vector<16x256xf32>
    %39 = arith.mulf %37, %38 : vector<16x256xf32>
    %40 = arith.addf %34, %39 : vector<16x256xf32>
    %41 = vector.extract_strided_slice %29 {offsets = [0, 2], sizes = [16, 1], strides = [1, 1]} : vector<16x3xf32> to vector<16x1xf32>
    %42 = vector.extract_strided_slice %28 {offsets = [2, 0], sizes = [1, 256], strides = [1, 1]} : vector<3x256xf32> to vector<1x256xf32>
    %43 = vector.broadcast %41 : vector<16x1xf32> to vector<16x256xf32>
    %44 = vector.broadcast %42 : vector<1x256xf32> to vector<16x256xf32>
    %45 = arith.mulf %43, %44 : vector<16x256xf32>
    %46 = arith.addf %40, %45 : vector<16x256xf32>
    %cst_18 = arith.constant 0.000000e+00 : f32
    %47 = vector.broadcast %cst_18 : f32 to vector<16x256xf32>
    %48 = arith.maximumf %46, %47 : vector<16x256xf32>
    %c0_19 = arith.constant 0 : index
    %c0_20 = arith.constant 0 : index
    %49 = vector.load %arg7[%c0_19, %c0_20] : memref<16x3xf32, #tpu.memory_space<vmem>>, vector<16x3xf32>
    %50 = vector.extract_strided_slice %49 {offsets = [0, 0], sizes = [16, 1], strides = [1, 1]} : vector<16x3xf32> to vector<16x1xf32>
    %51 = vector.extract_strided_slice %5 {offsets = [0, 0], sizes = [1, 256], strides = [1, 1]} : vector<3x256xf32> to vector<1x256xf32>
    %52 = vector.broadcast %50 : vector<16x1xf32> to vector<16x256xf32>
    %53 = vector.broadcast %51 : vector<1x256xf32> to vector<16x256xf32>
    %54 = arith.mulf %52, %53 : vector<16x256xf32>
    %55 = vector.extract_strided_slice %49 {offsets = [0, 1], sizes = [16, 1], strides = [1, 1]} : vector<16x3xf32> to vector<16x1xf32>
    %56 = vector.extract_strided_slice %5 {offsets = [1, 0], sizes = [1, 256], strides = [1, 1]} : vector<3x256xf32> to vector<1x256xf32>
    %57 = vector.broadcast %55 : vector<16x1xf32> to vector<16x256xf32>
    %58 = vector.broadcast %56 : vector<1x256xf32> to vector<16x256xf32>
    %59 = arith.mulf %57, %58 : vector<16x256xf32>
    %60 = arith.addf %54, %59 : vector<16x256xf32>
    %61 = vector.extract_strided_slice %49 {offsets = [0, 2], sizes = [16, 1], strides = [1, 1]} : vector<16x3xf32> to vector<16x1xf32>
    %62 = vector.extract_strided_slice %5 {offsets = [2, 0], sizes = [1, 256], strides = [1, 1]} : vector<3x256xf32> to vector<1x256xf32>
    %63 = vector.broadcast %61 : vector<16x1xf32> to vector<16x256xf32>
    %64 = vector.broadcast %62 : vector<1x256xf32> to vector<16x256xf32>
    %65 = arith.mulf %63, %64 : vector<16x256xf32>
    %66 = arith.addf %60, %65 : vector<16x256xf32>
    %cst_21 = arith.constant 0.000000e+00 : f32
    %67 = vector.broadcast %cst_21 : f32 to vector<16x256xf32>
    %68 = arith.maximumf %66, %67 : vector<16x256xf32>
    %c0_22 = arith.constant 0 : index
    %c0_23 = arith.constant 0 : index
    %69 = vector.load %arg7[%c0_22, %c0_23] : memref<16x3xf32, #tpu.memory_space<vmem>>, vector<16x3xf32>
    %70 = vector.extract_strided_slice %69 {offsets = [0, 0], sizes = [16, 1], strides = [1, 1]} : vector<16x3xf32> to vector<16x1xf32>
    %71 = vector.extract_strided_slice %7 {offsets = [0, 0], sizes = [1, 256], strides = [1, 1]} : vector<3x256xf32> to vector<1x256xf32>
    %72 = vector.broadcast %70 : vector<16x1xf32> to vector<16x256xf32>
    %73 = vector.broadcast %71 : vector<1x256xf32> to vector<16x256xf32>
    %74 = arith.mulf %72, %73 : vector<16x256xf32>
    %75 = vector.extract_strided_slice %69 {offsets = [0, 1], sizes = [16, 1], strides = [1, 1]} : vector<16x3xf32> to vector<16x1xf32>
    %76 = vector.extract_strided_slice %7 {offsets = [1, 0], sizes = [1, 256], strides = [1, 1]} : vector<3x256xf32> to vector<1x256xf32>
    %77 = vector.broadcast %75 : vector<16x1xf32> to vector<16x256xf32>
    %78 = vector.broadcast %76 : vector<1x256xf32> to vector<16x256xf32>
    %79 = arith.mulf %77, %78 : vector<16x256xf32>
    %80 = arith.addf %74, %79 : vector<16x256xf32>
    %81 = vector.extract_strided_slice %69 {offsets = [0, 2], sizes = [16, 1], strides = [1, 1]} : vector<16x3xf32> to vector<16x1xf32>
    %82 = vector.extract_strided_slice %7 {offsets = [2, 0], sizes = [1, 256], strides = [1, 1]} : vector<3x256xf32> to vector<1x256xf32>
    %83 = vector.broadcast %81 : vector<16x1xf32> to vector<16x256xf32>
    %84 = vector.broadcast %82 : vector<1x256xf32> to vector<16x256xf32>
    %85 = arith.mulf %83, %84 : vector<16x256xf32>
    %86 = arith.addf %80, %85 : vector<16x256xf32>
    %cst_24 = arith.constant 0.000000e+00 : f32
    %87 = vector.broadcast %cst_24 : f32 to vector<16x256xf32>
    %88 = arith.maximumf %86, %87 : vector<16x256xf32>
    %89 = arith.subf %68, %88 : vector<16x256xf32>
    %90 = math.absf %89 : vector<16x256xf32>
    %91 = vector.shape_cast %90 : vector<16x256xf32> to vector<1x16x256xf32>
    %cst_25 = arith.constant dense<0.000000e+00> : vector<1xf32>
    %92 = vector.multi_reduction <add>, %91, %cst_25 [1, 2] : vector<1x16x256xf32> to vector<1xf32>
    %93 = vector.shape_cast %92 : vector<1xf32> to vector<1x1x1xf32>
    %94 = vector.extract %93[0, 0, 0] : f32 from vector<1x1x1xf32>
    %95 = arith.subf %48, %88 : vector<16x256xf32>
    %96 = math.absf %95 : vector<16x256xf32>
    %97 = vector.shape_cast %96 : vector<16x256xf32> to vector<1x16x256xf32>
    %cst_26 = arith.constant dense<0.000000e+00> : vector<1xf32>
    %98 = vector.multi_reduction <add>, %97, %cst_26 [1, 2] : vector<1x16x256xf32> to vector<1xf32>
    %99 = vector.shape_cast %98 : vector<1xf32> to vector<1x1x1xf32>
    %100 = vector.extract %99[0, 0, 0] : f32 from vector<1x1x1xf32>
    %c0_i32 = arith.constant 0 : i32
    %101 = arith.cmpi eq, %arg1, %c0_i32 : i32
    %102 = arith.extui %101 : i1 to i32
    %c0_i32_27 = arith.constant 0 : i32
    %103 = arith.cmpi ne, %102, %c0_i32_27 : i32
    scf.if %103 {
      %cst_76 = arith.constant 0.000000e+00 : f32
      %238 = vector.broadcast %cst_76 : f32 to vector<3x16x16xf32>
      %c0_77 = arith.constant 0 : index
      %c0_78 = arith.constant 0 : index
      %c0_79 = arith.constant 0 : index
      %239 = vector.load %arg10[%c0_77, %c0_78, %c0_79] : memref<3x16x16xf32, #tpu.memory_space<vmem>>, vector<3x16x16xf32>
      tpu.vector_store %arg10[%c0_77, %c0_78, %c0_79], %238 {strides = array<i32>} : memref<3x16x16xf32, #tpu.memory_space<vmem>>, vector<3x16x16xf32>,
    } else {
    }
    %c0_28 = arith.constant 0 : index
    %c0_29 = arith.constant 0 : index
    %c0_30 = arith.constant 0 : index
    %104 = vector.load %arg10[%c0_28, %c0_29, %c0_30] : memref<3x16x16xf32, #tpu.memory_space<vmem>>, vector<1x16x16xf32>
    %105 = vector.shape_cast %104 : vector<1x16x16xf32> to vector<16x16xf32>
    %cst_31 = arith.constant dense<0.000000e+00> : vector<16x16xf32>
    %106 = tpu.matmul %48, %48, %cst_31 {dimension_numbers = #tpu.dot_dimension_numbers<[1], [1], [0], [0], [0, 0, 1, 0], [], []>} : vector<16x256xf32>, vector<16x256xf32>, vector<16x16xf32> -> vector<16x16xf32>
    %107 = arith.addf %105, %106 : vector<16x16xf32>
    %c0_32 = arith.constant 0 : index
    %c0_33 = arith.constant 0 : index
    %c0_34 = arith.constant 0 : index
    %108 = vector.load %arg10[%c0_32, %c0_33, %c0_34] : memref<3x16x16xf32, #tpu.memory_space<vmem>>, vector<1x16x16xf32>
    %109 = vector.shape_cast %108 : vector<1x16x16xf32> to vector<16x16xf32>
    %110 = vector.shape_cast %107 : vector<16x16xf32> to vector<1x16x16xf32>
    tpu.vector_store %arg10[%c0_32, %c0_33, %c0_34], %110 {strides = array<i32>} : memref<3x16x16xf32, #tpu.memory_space<vmem>>, vector<1x16x16xf32>,
    %c1 = arith.constant 1 : index
    %c0_35 = arith.constant 0 : index
    %c0_36 = arith.constant 0 : index
    %111 = vector.load %arg10[%c1, %c0_35, %c0_36] : memref<3x16x16xf32, #tpu.memory_space<vmem>>, vector<1x16x16xf32>
    %112 = vector.shape_cast %111 : vector<1x16x16xf32> to vector<16x16xf32>
    %cst_37 = arith.constant dense<0.000000e+00> : vector<16x16xf32>
    %113 = tpu.matmul %68, %68, %cst_37 {dimension_numbers = #tpu.dot_dimension_numbers<[1], [1], [0], [0], [0, 0, 1, 0], [], []>} : vector<16x256xf32>, vector<16x256xf32>, vector<16x16xf32> -> vector<16x16xf32>
    %114 = arith.addf %112, %113 : vector<16x16xf32>
    %c1_38 = arith.constant 1 : index
    %c0_39 = arith.constant 0 : index
    %c0_40 = arith.constant 0 : index
    %115 = vector.load %arg10[%c1_38, %c0_39, %c0_40] : memref<3x16x16xf32, #tpu.memory_space<vmem>>, vector<1x16x16xf32>
    %116 = vector.shape_cast %115 : vector<1x16x16xf32> to vector<16x16xf32>
    %117 = vector.shape_cast %114 : vector<16x16xf32> to vector<1x16x16xf32>
    tpu.vector_store %arg10[%c1_38, %c0_39, %c0_40], %117 {strides = array<i32>} : memref<3x16x16xf32, #tpu.memory_space<vmem>>, vector<1x16x16xf32>,
    %c2 = arith.constant 2 : index
    %c0_41 = arith.constant 0 : index
    %c0_42 = arith.constant 0 : index
    %118 = vector.load %arg10[%c2, %c0_41, %c0_42] : memref<3x16x16xf32, #tpu.memory_space<vmem>>, vector<1x16x16xf32>
    %119 = vector.shape_cast %118 : vector<1x16x16xf32> to vector<16x16xf32>
    %cst_43 = arith.constant dense<0.000000e+00> : vector<16x16xf32>
    %120 = tpu.matmul %88, %88, %cst_43 {dimension_numbers = #tpu.dot_dimension_numbers<[1], [1], [0], [0], [0, 0, 1, 0], [], []>} : vector<16x256xf32>, vector<16x256xf32>, vector<16x16xf32> -> vector<16x16xf32>
    %121 = arith.addf %119, %120 : vector<16x16xf32>
    %c2_44 = arith.constant 2 : index
    %c0_45 = arith.constant 0 : index
    %c0_46 = arith.constant 0 : index
    %122 = vector.load %arg10[%c2_44, %c0_45, %c0_46] : memref<3x16x16xf32, #tpu.memory_space<vmem>>, vector<1x16x16xf32>
    %123 = vector.shape_cast %122 : vector<1x16x16xf32> to vector<16x16xf32>
    %124 = vector.shape_cast %121 : vector<16x16xf32> to vector<1x16x16xf32>
    tpu.vector_store %arg10[%c2_44, %c0_45, %c0_46], %124 {strides = array<i32>} : memref<3x16x16xf32, #tpu.memory_space<vmem>>, vector<1x16x16xf32>,
    %125 = tpu.iota {dimensions = array<i32: 0>} : vector<8x128xi32>
    %126 = tpu.iota {dimensions = array<i32: 1>} : vector<8x128xi32>
    %cst_47 = arith.constant 0.000000e+00 : f32
    %127 = vector.broadcast %cst_47 : f32 to vector<8x128xf32>
    %c0_i32_48 = arith.constant 0 : i32
    %128 = vector.broadcast %c0_i32_48 : i32 to vector<8x128xi32>
    %129 = arith.cmpi eq, %125, %128 : vector<8x128xi32>
    %c0_i32_49 = arith.constant 0 : i32
    %130 = vector.broadcast %c0_i32_49 : i32 to vector<8x128xi32>
    %131 = arith.cmpi eq, %126, %130 : vector<8x128xi32>
    %132 = arith.andi %129, %131 : vector<8x128xi1>
    %cst_50 = arith.constant 0.000000e+00 : f32
    %133 = vector.broadcast %15 : f32 to vector<8x128xf32>
    %134 = vector.broadcast %cst_50 : f32 to vector<8x128xf32>
    %135 = arith.select %132, %133, %134 : vector<8x128xi1>, vector<8x128xf32>
    %136 = arith.addf %127, %135 : vector<8x128xf32>
    %c0_i32_51 = arith.constant 0 : i32
    %137 = vector.broadcast %c0_i32_51 : i32 to vector<8x128xi32>
    %138 = arith.cmpi eq, %125, %137 : vector<8x128xi32>
    %c1_i32 = arith.constant 1 : i32
    %139 = vector.broadcast %c1_i32 : i32 to vector<8x128xi32>
    %140 = arith.cmpi eq, %126, %139 : vector<8x128xi32>
    %141 = arith.andi %138, %140 : vector<8x128xi1>
    %cst_52 = arith.constant 0.000000e+00 : f32
    %142 = vector.broadcast %21 : f32 to vector<8x128xf32>
    %143 = vector.broadcast %cst_52 : f32 to vector<8x128xf32>
    %144 = arith.select %141, %142, %143 : vector<8x128xi1>, vector<8x128xf32>
    %145 = arith.addf %136, %144 : vector<8x128xf32>
    %c0_i32_53 = arith.constant 0 : i32
    %146 = vector.broadcast %c0_i32_53 : i32 to vector<8x128xi32>
    %147 = arith.cmpi eq, %125, %146 : vector<8x128xi32>
    %c2_i32 = arith.constant 2 : i32
    %148 = vector.broadcast %c2_i32 : i32 to vector<8x128xi32>
    %149 = arith.cmpi eq, %126, %148 : vector<8x128xi32>
    %150 = arith.andi %147, %149 : vector<8x128xi1>
    %cst_54 = arith.constant 0.000000e+00 : f32
    %151 = vector.broadcast %94 : f32 to vector<8x128xf32>
    %152 = vector.broadcast %cst_54 : f32 to vector<8x128xf32>
    %153 = arith.select %150, %151, %152 : vector<8x128xi1>, vector<8x128xf32>
    %154 = arith.addf %145, %153 : vector<8x128xf32>
    %c0_i32_55 = arith.constant 0 : i32
    %155 = vector.broadcast %c0_i32_55 : i32 to vector<8x128xi32>
    %156 = arith.cmpi eq, %125, %155 : vector<8x128xi32>
    %c3_i32 = arith.constant 3 : i32
    %157 = vector.broadcast %c3_i32 : i32 to vector<8x128xi32>
    %158 = arith.cmpi eq, %126, %157 : vector<8x128xi32>
    %159 = arith.andi %156, %158 : vector<8x128xi1>
    %cst_56 = arith.constant 0.000000e+00 : f32
    %160 = vector.broadcast %100 : f32 to vector<8x128xf32>
    %161 = vector.broadcast %cst_56 : f32 to vector<8x128xf32>
    %162 = arith.select %159, %160, %161 : vector<8x128xi1>, vector<8x128xf32>
    %163 = arith.addf %154, %162 : vector<8x128xf32>
    %164 = arith.subf %5, %7 : vector<3x256xf32>
    %165 = math.absf %164 : vector<3x256xf32>
    %166 = vector.shape_cast %165 : vector<3x256xf32> to vector<1x3x256xf32>
    %cst_57 = arith.constant dense<0.000000e+00> : vector<1xf32>
    %167 = vector.multi_reduction <add>, %166, %cst_57 [1, 2] : vector<1x3x256xf32> to vector<1xf32>
    %168 = vector.shape_cast %167 : vector<1xf32> to vector<1x1x1xf32>
    %169 = vector.extract %168[0, 0, 0] : f32 from vector<1x1x1xf32>
    %c0_i32_58 = arith.constant 0 : i32
    %170 = vector.broadcast %c0_i32_58 : i32 to vector<8x128xi32>
    %171 = arith.cmpi eq, %125, %170 : vector<8x128xi32>
    %c4_i32 = arith.constant 4 : i32
    %172 = vector.broadcast %c4_i32 : i32 to vector<8x128xi32>
    %173 = arith.cmpi eq, %126, %172 : vector<8x128xi32>
    %174 = arith.andi %171, %173 : vector<8x128xi1>
    %cst_59 = arith.constant 0.000000e+00 : f32
    %175 = vector.broadcast %169 : f32 to vector<8x128xf32>
    %176 = vector.broadcast %cst_59 : f32 to vector<8x128xf32>
    %177 = arith.select %174, %175, %176 : vector<8x128xi1>, vector<8x128xf32>
    %178 = arith.addf %163, %177 : vector<8x128xf32>
    %179 = vector.broadcast %1 : vector<1x256xf32> to vector<3x256xf32>
    %180 = arith.mulf %179, %165 : vector<3x256xf32>
    %181 = vector.shape_cast %180 : vector<3x256xf32> to vector<1x3x256xf32>
    %cst_60 = arith.constant dense<0.000000e+00> : vector<1xf32>
    %182 = vector.multi_reduction <add>, %181, %cst_60 [1, 2] : vector<1x3x256xf32> to vector<1xf32>
    %183 = vector.shape_cast %182 : vector<1xf32> to vector<1x1x1xf32>
    %184 = vector.extract %183[0, 0, 0] : f32 from vector<1x1x1xf32>
    %c0_i32_61 = arith.constant 0 : i32
    %185 = vector.broadcast %c0_i32_61 : i32 to vector<8x128xi32>
    %186 = arith.cmpi eq, %125, %185 : vector<8x128xi32>
    %c5_i32 = arith.constant 5 : i32
    %187 = vector.broadcast %c5_i32 : i32 to vector<8x128xi32>
    %188 = arith.cmpi eq, %126, %187 : vector<8x128xi32>
    %189 = arith.andi %186, %188 : vector<8x128xi1>
    %cst_62 = arith.constant 0.000000e+00 : f32
    %190 = vector.broadcast %184 : f32 to vector<8x128xf32>
    %191 = vector.broadcast %cst_62 : f32 to vector<8x128xf32>
    %192 = arith.select %189, %190, %191 : vector<8x128xi1>, vector<8x128xf32>
    %193 = arith.addf %178, %192 : vector<8x128xf32>
    %c0_63 = arith.constant 0 : index
    %c0_64 = arith.constant 0 : index
    %194 = vector.load %arg8[%c0_63, %c0_64] : memref<8x3xf32, #tpu.memory_space<vmem>>, vector<8x3xf32>
    %195 = vector.broadcast %1 : vector<1x256xf32> to vector<3x256xf32>
    %196 = arith.mulf %195, %5 : vector<3x256xf32>
    %197 = vector.extract_strided_slice %194 {offsets = [0, 0], sizes = [8, 1], strides = [1, 1]} : vector<8x3xf32> to vector<8x1xf32>
    %198 = vector.extract_strided_slice %196 {offsets = [0, 0], sizes = [1, 256], strides = [1, 1]} : vector<3x256xf32> to vector<1x256xf32>
    %199 = vector.broadcast %197 : vector<8x1xf32> to vector<8x256xf32>
    %200 = vector.broadcast %198 : vector<1x256xf32> to vector<8x256xf32>
    %201 = arith.mulf %199, %200 : vector<8x256xf32>
    %202 = vector.extract_strided_slice %194 {offsets = [0, 1], sizes = [8, 1], strides = [1, 1]} : vector<8x3xf32> to vector<8x1xf32>
    %203 = vector.extract_strided_slice %196 {offsets = [1, 0], sizes = [1, 256], strides = [1, 1]} : vector<3x256xf32> to vector<1x256xf32>
    %204 = vector.broadcast %202 : vector<8x1xf32> to vector<8x256xf32>
    %205 = vector.broadcast %203 : vector<1x256xf32> to vector<8x256xf32>
    %206 = arith.mulf %204, %205 : vector<8x256xf32>
    %207 = arith.addf %201, %206 : vector<8x256xf32>
    %208 = vector.extract_strided_slice %194 {offsets = [0, 2], sizes = [8, 1], strides = [1, 1]} : vector<8x3xf32> to vector<8x1xf32>
    %209 = vector.extract_strided_slice %196 {offsets = [2, 0], sizes = [1, 256], strides = [1, 1]} : vector<3x256xf32> to vector<1x256xf32>
    %210 = vector.broadcast %208 : vector<8x1xf32> to vector<8x256xf32>
    %211 = vector.broadcast %209 : vector<1x256xf32> to vector<8x256xf32>
    %212 = arith.mulf %210, %211 : vector<8x256xf32>
    %213 = arith.addf %207, %212 : vector<8x256xf32>
    %cst_65 = arith.constant 0.000000e+00 : f32
    %214 = vector.broadcast %cst_65 : f32 to vector<8x256xf32>
    %215 = arith.cmpf oge, %213, %214 : vector<8x256xf32>
    %cst_66 = arith.constant 2.000000e-01 : f32
    %216 = vector.broadcast %cst_66 : f32 to vector<8x256xf32>
    %217 = arith.mulf %216, %213 : vector<8x256xf32>
    %218 = arith.select %215, %213, %217 : vector<8x256xi1>, vector<8x256xf32>
    %219 = vector.shape_cast %218 : vector<8x256xf32> to vector<1x8x256xf32>
    %cst_67 = arith.constant dense<0.000000e+00> : vector<1xf32>
    %220 = vector.multi_reduction <add>, %219, %cst_67 [1, 2] : vector<1x8x256xf32> to vector<1xf32>
    %221 = vector.shape_cast %220 : vector<1xf32> to vector<1x1x1xf32>
    %222 = vector.extract %221[0, 0, 0] : f32 from vector<1x1x1xf32>
    %c0_i32_68 = arith.constant 0 : i32
    %223 = vector.broadcast %c0_i32_68 : i32 to vector<8x128xi32>
    %224 = arith.cmpi eq, %125, %223 : vector<8x128xi32>
    %c6_i32 = arith.constant 6 : i32
    %225 = vector.broadcast %c6_i32 : i32 to vector<8x128xi32>
    %226 = arith.cmpi eq, %126, %225 : vector<8x128xi32>
    %227 = arith.andi %224, %226 : vector<8x128xi1>
    %cst_69 = arith.constant 0.000000e+00 : f32
    %228 = vector.broadcast %222 : f32 to vector<8x128xf32>
    %229 = vector.broadcast %cst_69 : f32 to vector<8x128xf32>
    %230 = arith.select %227, %228, %229 : vector<8x128xi1>, vector<8x128xf32>
    %231 = arith.addf %193, %230 : vector<8x128xf32>
    %c0_70 = arith.constant 0 : index
    %c0_71 = arith.constant 0 : index
    %c0_72 = arith.constant 0 : index
    %c0_73 = arith.constant 0 : index
    %232 = vector.load %arg9[%c0_70, %c0_71, %c0_72, %c0_73] : memref<1x1x8x128xf32, #tpu.memory_space<vmem>>, vector<1x1x8x128xf32>
    %233 = vector.shape_cast %232 : vector<1x1x8x128xf32> to vector<8x128xf32>
    %234 = vector.shape_cast %231 : vector<8x128xf32> to vector<1x1x8x128xf32>
    tpu.vector_store %arg9[%c0_70, %c0_71, %c0_72, %c0_73], %234 {strides = array<i32>} : memref<1x1x8x128xf32, #tpu.memory_space<vmem>>, vector<1x1x8x128xf32>,
    %c0_i32_74 = arith.constant 0 : i32
    %235 = arith.cmpi eq, %arg1, %c0_i32_74 : i32
    %236 = arith.extui %235 : i1 to i32
    %c0_i32_75 = arith.constant 0 : i32
    %237 = arith.cmpi ne, %236, %c0_i32_75 : i32
    scf.if %237 {
      %c0_76 = arith.constant 0 : index
      %c0_77 = arith.constant 0 : index
      %c0_78 = arith.constant 0 : index
      %238 = vector.load %arg10[%c0_76, %c0_77, %c0_78] : memref<3x16x16xf32, #tpu.memory_space<vmem>>, vector<3x16x16xf32>
      %239 = vector.extract_strided_slice %238 {offsets = [1, 0, 0], sizes = [1, 16, 16], strides = [1, 1, 1]} : vector<3x16x16xf32> to vector<1x16x16xf32>
      %240 = vector.shape_cast %239 : vector<1x16x16xf32> to vector<16x16xf32>
      %241 = vector.extract_strided_slice %238 {offsets = [2, 0, 0], sizes = [1, 16, 16], strides = [1, 1, 1]} : vector<3x16x16xf32> to vector<1x16x16xf32>
      %242 = vector.shape_cast %241 : vector<1x16x16xf32> to vector<16x16xf32>
      %243 = arith.subf %240, %242 : vector<16x16xf32>
      %244 = math.absf %243 : vector<16x16xf32>
      %245 = vector.shape_cast %244 : vector<16x16xf32> to vector<1x16x16xf32>
      %cst_79 = arith.constant dense<0.000000e+00> : vector<1xf32>
      %246 = vector.multi_reduction <add>, %245, %cst_79 [1, 2] : vector<1x16x16xf32> to vector<1xf32>
      %247 = vector.shape_cast %246 : vector<1xf32> to vector<1x1x1xf32>
      %248 = vector.extract %247[0, 0, 0] : f32 from vector<1x1x1xf32>
      %cst_80 = arith.constant 2.44140625E-4 : f32
      %249 = arith.mulf %cst_80, %248 : f32
      %250 = vector.extract_strided_slice %238 {offsets = [0, 0, 0], sizes = [1, 16, 16], strides = [1, 1, 1]} : vector<3x16x16xf32> to vector<1x16x16xf32>
      %251 = vector.shape_cast %250 : vector<1x16x16xf32> to vector<16x16xf32>
      %252 = vector.extract_strided_slice %238 {offsets = [2, 0, 0], sizes = [1, 16, 16], strides = [1, 1, 1]} : vector<3x16x16xf32> to vector<1x16x16xf32>
      %253 = vector.shape_cast %252 : vector<1x16x16xf32> to vector<16x16xf32>
      %254 = arith.subf %251, %253 : vector<16x16xf32>
      %255 = math.absf %254 : vector<16x16xf32>
      %256 = vector.shape_cast %255 : vector<16x16xf32> to vector<1x16x16xf32>
      %cst_81 = arith.constant dense<0.000000e+00> : vector<1xf32>
      %257 = vector.multi_reduction <add>, %256, %cst_81 [1, 2] : vector<1x16x16xf32> to vector<1xf32>
      %258 = vector.shape_cast %257 : vector<1xf32> to vector<1x1x1xf32>
      %259 = vector.extract %258[0, 0, 0] : f32 from vector<1x1x1xf32>
      %cst_82 = arith.constant 2.44140625E-4 : f32
      %260 = arith.mulf %cst_82, %259 : f32
      %c0_83 = arith.constant 0 : index
      %c0_84 = arith.constant 0 : index
      %c0_85 = arith.constant 0 : index
      %c0_86 = arith.constant 0 : index
      %261 = vector.load %arg9[%c0_83, %c0_84, %c0_85, %c0_86] : memref<1x1x8x128xf32, #tpu.memory_space<vmem>>, vector<1x1x8x128xf32>
      %262 = vector.shape_cast %261 : vector<1x1x8x128xf32> to vector<8x128xf32>
      %c0_i32_87 = arith.constant 0 : i32
      %263 = vector.broadcast %c0_i32_87 : i32 to vector<8x128xi32>
      %264 = arith.cmpi eq, %125, %263 : vector<8x128xi32>
      %c7_i32 = arith.constant 7 : i32
      %265 = vector.broadcast %c7_i32 : i32 to vector<8x128xi32>
      %266 = arith.cmpi eq, %126, %265 : vector<8x128xi32>
      %267 = arith.andi %264, %266 : vector<8x128xi1>
      %cst_88 = arith.constant 0.000000e+00 : f32
      %268 = vector.broadcast %249 : f32 to vector<8x128xf32>
      %269 = vector.broadcast %cst_88 : f32 to vector<8x128xf32>
      %270 = arith.select %267, %268, %269 : vector<8x128xi1>, vector<8x128xf32>
      %271 = arith.addf %262, %270 : vector<8x128xf32>
      %c0_i32_89 = arith.constant 0 : i32
      %272 = vector.broadcast %c0_i32_89 : i32 to vector<8x128xi32>
      %273 = arith.cmpi eq, %125, %272 : vector<8x128xi32>
      %c8_i32 = arith.constant 8 : i32
      %274 = vector.broadcast %c8_i32 : i32 to vector<8x128xi32>
      %275 = arith.cmpi eq, %126, %274 : vector<8x128xi32>
      %276 = arith.andi %273, %275 : vector<8x128xi1>
      %cst_90 = arith.constant 0.000000e+00 : f32
      %277 = vector.broadcast %260 : f32 to vector<8x128xf32>
      %278 = vector.broadcast %cst_90 : f32 to vector<8x128xf32>
      %279 = arith.select %276, %277, %278 : vector<8x128xi1>, vector<8x128xf32>
      %280 = arith.addf %271, %279 : vector<8x128xf32>
      %c0_91 = arith.constant 0 : index
      %c0_92 = arith.constant 0 : index
      %c0_93 = arith.constant 0 : index
      %c0_94 = arith.constant 0 : index
      %281 = vector.load %arg9[%c0_91, %c0_92, %c0_93, %c0_94] : memref<1x1x8x128xf32, #tpu.memory_space<vmem>>, vector<1x1x8x128xf32>
      %282 = vector.shape_cast %281 : vector<1x1x8x128xf32> to vector<8x128xf32>
      %283 = vector.shape_cast %280 : vector<8x128xf32> to vector<1x1x8x128xf32>
      tpu.vector_store %arg9[%c0_91, %c0_92, %c0_93, %c0_94], %283 {strides = array<i32>} : memref<1x1x8x128xf32, #tpu.memory_space<vmem>>, vector<1x1x8x128xf32>,
    } else {
    }
    return
  }
  func.func @transform_0(%arg0: i32, %arg1: i32) -> (i32, i32, i32) {
    %c0_i32 = arith.constant 0 : i32
    %c0_i32_0 = arith.constant 0 : i32
    return %arg0, %c0_i32, %arg1 : i32, i32, i32
  }
  func.func @transform_1(%arg0: i32, %arg1: i32) -> (i32, i32, i32) {
    %c0_i32 = arith.constant 0 : i32
    %c0_i32_0 = arith.constant 0 : i32
    return %arg0, %c0_i32, %arg1 : i32, i32, i32
  }
  func.func @transform_2(%arg0: i32, %arg1: i32) -> (i32, i32, i32) {
    %c0_i32 = arith.constant 0 : i32
    %c0_i32_0 = arith.constant 0 : i32
    return %arg0, %c0_i32, %arg1 : i32, i32, i32
  }
  func.func @transform_3(%arg0: i32, %arg1: i32) -> (i32, i32, i32) {
    %c0_i32 = arith.constant 0 : i32
    %c0_i32_0 = arith.constant 0 : i32
    return %arg0, %c0_i32, %arg1 : i32, i32, i32
  }
  func.func @transform_4(%arg0: i32, %arg1: i32) -> (i32, i32, i32) {
    %c0_i32 = arith.constant 0 : i32
    %c0_i32_0 = arith.constant 0 : i32
    return %arg0, %c0_i32, %arg1 : i32, i32, i32
  }
  func.func @transform_5(%arg0: i32, %arg1: i32) -> (i32, i32) {
    %c0_i32 = arith.constant 0 : i32
    %c0_i32_0 = arith.constant 0 : i32
    %c0_i32_1 = arith.constant 0 : i32
    return %c0_i32, %c0_i32_0 : i32, i32
  }
  func.func @transform_6(%arg0: i32, %arg1: i32) -> (i32, i32) {
    %c0_i32 = arith.constant 0 : i32
    %c0_i32_0 = arith.constant 0 : i32
    %c0_i32_1 = arith.constant 0 : i32
    return %c0_i32, %c0_i32_0 : i32, i32
  }
  func.func @transform_7(%arg0: i32, %arg1: i32) -> (i32, i32, i32, i32) {
    %c0_i32 = arith.constant 0 : i32
    %c0_i32_0 = arith.constant 0 : i32
    %c0_i32_1 = arith.constant 0 : i32
    return %arg0, %arg1, %c0_i32, %c0_i32_0 : i32, i32, i32, i32
  }
}

module attributes {stable_mosaic.version = 11 : i64} {
  func.func @_stage_kernel(%arg0: i32, %arg1: i32, %arg2: memref<1x1x64xf32, #tpu.memory_space<vmem>>, %arg3: memref<1x3x64xf32, #tpu.memory_space<vmem>>, %arg4: memref<1x3x64xf32, #tpu.memory_space<vmem>>, %arg5: memref<1x3x64xf32, #tpu.memory_space<vmem>>, %arg6: memref<1x3x64xf32, #tpu.memory_space<vmem>>, %arg7: memref<16x3xf32, #tpu.memory_space<vmem>>, %arg8: memref<32x16xf32, #tpu.memory_space<vmem>>, %arg9: memref<1x1x8x128xf32, #tpu.memory_space<vmem>>, %arg10: memref<3x32x32xf32, #tpu.memory_space<vmem>>) attributes {dimension_semantics = [#tpu.dimension_semantics<parallel>, #tpu.dimension_semantics<arbitrary>], iteration_bounds = array<i64: 2, 1>, scalar_prefetch = 0 : i64, scratch_operands = 1 : i64, tpu.core_type = #tpu.core_type<tc>, window_params = [{transform_indices = @transform_0, window_bounds = array<i64: 1, 1, 64>}, {transform_indices = @transform_1, window_bounds = array<i64: 1, 3, 64>}, {transform_indices = @transform_2, window_bounds = array<i64: 1, 3, 64>}, {transform_indices = @transform_3, window_bounds = array<i64: 1, 3, 64>}, {transform_indices = @transform_4, window_bounds = array<i64: 1, 3, 64>}, {pipeline_mode = #tpu.pipeline_mode<synchronous>, transform_indices = @transform_5, window_bounds = array<i64: 16, 3>}, {pipeline_mode = #tpu.pipeline_mode<synchronous>, transform_indices = @transform_6, window_bounds = array<i64: 32, 16>}, {transform_indices = @transform_7, window_bounds = array<i64: 1, 1, 8, 128>}]} {
    %c0 = arith.constant 0 : index
    %c0_0 = arith.constant 0 : index
    %c0_1 = arith.constant 0 : index
    %0 = vector.load %arg2[%c0, %c0_0, %c0_1] : memref<1x1x64xf32, #tpu.memory_space<vmem>>, vector<1x1x64xf32>
    %1 = vector.shape_cast %0 : vector<1x1x64xf32> to vector<1x64xf32>
    %c0_2 = arith.constant 0 : index
    %c0_3 = arith.constant 0 : index
    %c0_4 = arith.constant 0 : index
    %2 = vector.load %arg3[%c0_2, %c0_3, %c0_4] : memref<1x3x64xf32, #tpu.memory_space<vmem>>, vector<1x3x64xf32>
    %3 = vector.shape_cast %2 : vector<1x3x64xf32> to vector<3x64xf32>
    %c0_5 = arith.constant 0 : index
    %c0_6 = arith.constant 0 : index
    %c0_7 = arith.constant 0 : index
    %4 = vector.load %arg4[%c0_5, %c0_6, %c0_7] : memref<1x3x64xf32, #tpu.memory_space<vmem>>, vector<1x3x64xf32>
    %5 = vector.shape_cast %4 : vector<1x3x64xf32> to vector<3x64xf32>
    %c0_8 = arith.constant 0 : index
    %c0_9 = arith.constant 0 : index
    %c0_10 = arith.constant 0 : index
    %6 = vector.load %arg5[%c0_8, %c0_9, %c0_10] : memref<1x3x64xf32, #tpu.memory_space<vmem>>, vector<1x3x64xf32>
    %7 = vector.shape_cast %6 : vector<1x3x64xf32> to vector<3x64xf32>
    %c0_11 = arith.constant 0 : index
    %c0_12 = arith.constant 0 : index
    %c0_13 = arith.constant 0 : index
    %8 = vector.load %arg6[%c0_11, %c0_12, %c0_13] : memref<1x3x64xf32, #tpu.memory_space<vmem>>, vector<1x3x64xf32>
    %9 = vector.shape_cast %8 : vector<1x3x64xf32> to vector<3x64xf32>
    %10 = arith.subf %9, %7 : vector<3x64xf32>
    %11 = math.absf %10 : vector<3x64xf32>
    %12 = vector.shape_cast %11 : vector<3x64xf32> to vector<1x3x64xf32>
    %cst = arith.constant dense<0.000000e+00> : vector<1xf32>
    %13 = vector.multi_reduction <add>, %12, %cst [1, 2] : vector<1x3x64xf32> to vector<1xf32>
    %14 = vector.shape_cast %13 : vector<1xf32> to vector<1x1x1xf32>
    %15 = vector.extract %14[0, 0, 0] : f32 from vector<1x1x1xf32>
    %16 = vector.broadcast %1 : vector<1x64xf32> to vector<3x64xf32>
    %17 = arith.mulf %16, %11 : vector<3x64xf32>
    %18 = vector.shape_cast %17 : vector<3x64xf32> to vector<1x3x64xf32>
    %cst_14 = arith.constant dense<0.000000e+00> : vector<1xf32>
    %19 = vector.multi_reduction <add>, %18, %cst_14 [1, 2] : vector<1x3x64xf32> to vector<1xf32>
    %20 = vector.shape_cast %19 : vector<1xf32> to vector<1x1x1xf32>
    %21 = vector.extract %20[0, 0, 0] : f32 from vector<1x1x1xf32>
    %22 = vector.broadcast %1 : vector<1x64xf32> to vector<3x64xf32>
    %23 = arith.mulf %22, %3 : vector<3x64xf32>
    %cst_15 = arith.constant 1.000000e+00 : f32
    %24 = vector.broadcast %cst_15 : f32 to vector<1x64xf32>
    %25 = arith.subf %24, %1 : vector<1x64xf32>
    %26 = vector.broadcast %25 : vector<1x64xf32> to vector<3x64xf32>
    %27 = arith.mulf %26, %5 : vector<3x64xf32>
    %28 = arith.addf %23, %27 : vector<3x64xf32>
    %c0_16 = arith.constant 0 : index
    %c0_17 = arith.constant 0 : index
    %29 = vector.load %arg7[%c0_16, %c0_17] : memref<16x3xf32, #tpu.memory_space<vmem>>, vector<16x3xf32>
    %30 = vector.extract_strided_slice %29 {offsets = [0, 0], sizes = [16, 1], strides = [1, 1]} : vector<16x3xf32> to vector<16x1xf32>
    %31 = vector.extract_strided_slice %28 {offsets = [0, 0], sizes = [1, 64], strides = [1, 1]} : vector<3x64xf32> to vector<1x64xf32>
    %32 = vector.broadcast %30 : vector<16x1xf32> to vector<16x64xf32>
    %33 = vector.broadcast %31 : vector<1x64xf32> to vector<16x64xf32>
    %34 = arith.mulf %32, %33 : vector<16x64xf32>
    %35 = vector.extract_strided_slice %29 {offsets = [0, 1], sizes = [16, 1], strides = [1, 1]} : vector<16x3xf32> to vector<16x1xf32>
    %36 = vector.extract_strided_slice %28 {offsets = [1, 0], sizes = [1, 64], strides = [1, 1]} : vector<3x64xf32> to vector<1x64xf32>
    %37 = vector.broadcast %35 : vector<16x1xf32> to vector<16x64xf32>
    %38 = vector.broadcast %36 : vector<1x64xf32> to vector<16x64xf32>
    %39 = arith.mulf %37, %38 : vector<16x64xf32>
    %40 = arith.addf %34, %39 : vector<16x64xf32>
    %41 = vector.extract_strided_slice %29 {offsets = [0, 2], sizes = [16, 1], strides = [1, 1]} : vector<16x3xf32> to vector<16x1xf32>
    %42 = vector.extract_strided_slice %28 {offsets = [2, 0], sizes = [1, 64], strides = [1, 1]} : vector<3x64xf32> to vector<1x64xf32>
    %43 = vector.broadcast %41 : vector<16x1xf32> to vector<16x64xf32>
    %44 = vector.broadcast %42 : vector<1x64xf32> to vector<16x64xf32>
    %45 = arith.mulf %43, %44 : vector<16x64xf32>
    %46 = arith.addf %40, %45 : vector<16x64xf32>
    %cst_18 = arith.constant 0.000000e+00 : f32
    %47 = vector.broadcast %cst_18 : f32 to vector<16x64xf32>
    %48 = arith.maximumf %46, %47 : vector<16x64xf32>
    %c0_19 = arith.constant 0 : index
    %c0_20 = arith.constant 0 : index
    %49 = vector.load %arg8[%c0_19, %c0_20] : memref<32x16xf32, #tpu.memory_space<vmem>>, vector<32x16xf32>
    %cst_21 = arith.constant dense<0.000000e+00> : vector<32x64xf32>
    %50 = tpu.matmul %49, %48, %cst_21 {dimension_numbers = #tpu.dot_dimension_numbers<[1], [0], [0], [1], [0, 0, 1, 1], [], []>} : vector<32x16xf32>, vector<16x64xf32>, vector<32x64xf32> -> vector<32x64xf32>
    %cst_22 = arith.constant 0.000000e+00 : f32
    %51 = vector.broadcast %cst_22 : f32 to vector<32x64xf32>
    %52 = arith.maximumf %50, %51 : vector<32x64xf32>
    %c0_23 = arith.constant 0 : index
    %c0_24 = arith.constant 0 : index
    %53 = vector.load %arg7[%c0_23, %c0_24] : memref<16x3xf32, #tpu.memory_space<vmem>>, vector<16x3xf32>
    %54 = vector.extract_strided_slice %53 {offsets = [0, 0], sizes = [16, 1], strides = [1, 1]} : vector<16x3xf32> to vector<16x1xf32>
    %55 = vector.extract_strided_slice %5 {offsets = [0, 0], sizes = [1, 64], strides = [1, 1]} : vector<3x64xf32> to vector<1x64xf32>
    %56 = vector.broadcast %54 : vector<16x1xf32> to vector<16x64xf32>
    %57 = vector.broadcast %55 : vector<1x64xf32> to vector<16x64xf32>
    %58 = arith.mulf %56, %57 : vector<16x64xf32>
    %59 = vector.extract_strided_slice %53 {offsets = [0, 1], sizes = [16, 1], strides = [1, 1]} : vector<16x3xf32> to vector<16x1xf32>
    %60 = vector.extract_strided_slice %5 {offsets = [1, 0], sizes = [1, 64], strides = [1, 1]} : vector<3x64xf32> to vector<1x64xf32>
    %61 = vector.broadcast %59 : vector<16x1xf32> to vector<16x64xf32>
    %62 = vector.broadcast %60 : vector<1x64xf32> to vector<16x64xf32>
    %63 = arith.mulf %61, %62 : vector<16x64xf32>
    %64 = arith.addf %58, %63 : vector<16x64xf32>
    %65 = vector.extract_strided_slice %53 {offsets = [0, 2], sizes = [16, 1], strides = [1, 1]} : vector<16x3xf32> to vector<16x1xf32>
    %66 = vector.extract_strided_slice %5 {offsets = [2, 0], sizes = [1, 64], strides = [1, 1]} : vector<3x64xf32> to vector<1x64xf32>
    %67 = vector.broadcast %65 : vector<16x1xf32> to vector<16x64xf32>
    %68 = vector.broadcast %66 : vector<1x64xf32> to vector<16x64xf32>
    %69 = arith.mulf %67, %68 : vector<16x64xf32>
    %70 = arith.addf %64, %69 : vector<16x64xf32>
    %cst_25 = arith.constant 0.000000e+00 : f32
    %71 = vector.broadcast %cst_25 : f32 to vector<16x64xf32>
    %72 = arith.maximumf %70, %71 : vector<16x64xf32>
    %c0_26 = arith.constant 0 : index
    %c0_27 = arith.constant 0 : index
    %73 = vector.load %arg8[%c0_26, %c0_27] : memref<32x16xf32, #tpu.memory_space<vmem>>, vector<32x16xf32>
    %cst_28 = arith.constant dense<0.000000e+00> : vector<32x64xf32>
    %74 = tpu.matmul %73, %72, %cst_28 {dimension_numbers = #tpu.dot_dimension_numbers<[1], [0], [0], [1], [0, 0, 1, 1], [], []>} : vector<32x16xf32>, vector<16x64xf32>, vector<32x64xf32> -> vector<32x64xf32>
    %cst_29 = arith.constant 0.000000e+00 : f32
    %75 = vector.broadcast %cst_29 : f32 to vector<32x64xf32>
    %76 = arith.maximumf %74, %75 : vector<32x64xf32>
    %c0_30 = arith.constant 0 : index
    %c0_31 = arith.constant 0 : index
    %77 = vector.load %arg7[%c0_30, %c0_31] : memref<16x3xf32, #tpu.memory_space<vmem>>, vector<16x3xf32>
    %78 = vector.extract_strided_slice %77 {offsets = [0, 0], sizes = [16, 1], strides = [1, 1]} : vector<16x3xf32> to vector<16x1xf32>
    %79 = vector.extract_strided_slice %7 {offsets = [0, 0], sizes = [1, 64], strides = [1, 1]} : vector<3x64xf32> to vector<1x64xf32>
    %80 = vector.broadcast %78 : vector<16x1xf32> to vector<16x64xf32>
    %81 = vector.broadcast %79 : vector<1x64xf32> to vector<16x64xf32>
    %82 = arith.mulf %80, %81 : vector<16x64xf32>
    %83 = vector.extract_strided_slice %77 {offsets = [0, 1], sizes = [16, 1], strides = [1, 1]} : vector<16x3xf32> to vector<16x1xf32>
    %84 = vector.extract_strided_slice %7 {offsets = [1, 0], sizes = [1, 64], strides = [1, 1]} : vector<3x64xf32> to vector<1x64xf32>
    %85 = vector.broadcast %83 : vector<16x1xf32> to vector<16x64xf32>
    %86 = vector.broadcast %84 : vector<1x64xf32> to vector<16x64xf32>
    %87 = arith.mulf %85, %86 : vector<16x64xf32>
    %88 = arith.addf %82, %87 : vector<16x64xf32>
    %89 = vector.extract_strided_slice %77 {offsets = [0, 2], sizes = [16, 1], strides = [1, 1]} : vector<16x3xf32> to vector<16x1xf32>
    %90 = vector.extract_strided_slice %7 {offsets = [2, 0], sizes = [1, 64], strides = [1, 1]} : vector<3x64xf32> to vector<1x64xf32>
    %91 = vector.broadcast %89 : vector<16x1xf32> to vector<16x64xf32>
    %92 = vector.broadcast %90 : vector<1x64xf32> to vector<16x64xf32>
    %93 = arith.mulf %91, %92 : vector<16x64xf32>
    %94 = arith.addf %88, %93 : vector<16x64xf32>
    %cst_32 = arith.constant 0.000000e+00 : f32
    %95 = vector.broadcast %cst_32 : f32 to vector<16x64xf32>
    %96 = arith.maximumf %94, %95 : vector<16x64xf32>
    %c0_33 = arith.constant 0 : index
    %c0_34 = arith.constant 0 : index
    %97 = vector.load %arg8[%c0_33, %c0_34] : memref<32x16xf32, #tpu.memory_space<vmem>>, vector<32x16xf32>
    %cst_35 = arith.constant dense<0.000000e+00> : vector<32x64xf32>
    %98 = tpu.matmul %97, %96, %cst_35 {dimension_numbers = #tpu.dot_dimension_numbers<[1], [0], [0], [1], [0, 0, 1, 1], [], []>} : vector<32x16xf32>, vector<16x64xf32>, vector<32x64xf32> -> vector<32x64xf32>
    %cst_36 = arith.constant 0.000000e+00 : f32
    %99 = vector.broadcast %cst_36 : f32 to vector<32x64xf32>
    %100 = arith.maximumf %98, %99 : vector<32x64xf32>
    %101 = arith.subf %76, %100 : vector<32x64xf32>
    %102 = math.absf %101 : vector<32x64xf32>
    %103 = vector.shape_cast %102 : vector<32x64xf32> to vector<1x32x64xf32>
    %cst_37 = arith.constant dense<0.000000e+00> : vector<1xf32>
    %104 = vector.multi_reduction <add>, %103, %cst_37 [1, 2] : vector<1x32x64xf32> to vector<1xf32>
    %105 = vector.shape_cast %104 : vector<1xf32> to vector<1x1x1xf32>
    %106 = vector.extract %105[0, 0, 0] : f32 from vector<1x1x1xf32>
    %107 = arith.subf %52, %100 : vector<32x64xf32>
    %108 = math.absf %107 : vector<32x64xf32>
    %109 = vector.shape_cast %108 : vector<32x64xf32> to vector<1x32x64xf32>
    %cst_38 = arith.constant dense<0.000000e+00> : vector<1xf32>
    %110 = vector.multi_reduction <add>, %109, %cst_38 [1, 2] : vector<1x32x64xf32> to vector<1xf32>
    %111 = vector.shape_cast %110 : vector<1xf32> to vector<1x1x1xf32>
    %112 = vector.extract %111[0, 0, 0] : f32 from vector<1x1x1xf32>
    %c0_i32 = arith.constant 0 : i32
    %113 = arith.cmpi eq, %arg1, %c0_i32 : i32
    %114 = arith.extui %113 : i1 to i32
    %c0_i32_39 = arith.constant 0 : i32
    %115 = arith.cmpi ne, %114, %c0_i32_39 : i32
    scf.if %115 {
      %cst_75 = arith.constant 0.000000e+00 : f32
      %182 = vector.broadcast %cst_75 : f32 to vector<3x32x32xf32>
      %c0_76 = arith.constant 0 : index
      %c0_77 = arith.constant 0 : index
      %c0_78 = arith.constant 0 : index
      %183 = vector.load %arg10[%c0_76, %c0_77, %c0_78] : memref<3x32x32xf32, #tpu.memory_space<vmem>>, vector<3x32x32xf32>
      tpu.vector_store %arg10[%c0_76, %c0_77, %c0_78], %182 {strides = array<i32>} : memref<3x32x32xf32, #tpu.memory_space<vmem>>, vector<3x32x32xf32>,
    } else {
    }
    %c0_40 = arith.constant 0 : index
    %c0_41 = arith.constant 0 : index
    %c0_42 = arith.constant 0 : index
    %116 = vector.load %arg10[%c0_40, %c0_41, %c0_42] : memref<3x32x32xf32, #tpu.memory_space<vmem>>, vector<1x32x32xf32>
    %117 = vector.shape_cast %116 : vector<1x32x32xf32> to vector<32x32xf32>
    %cst_43 = arith.constant dense<0.000000e+00> : vector<32x32xf32>
    %118 = tpu.matmul %52, %52, %cst_43 {dimension_numbers = #tpu.dot_dimension_numbers<[1], [1], [0], [0], [0, 0, 1, 0], [], []>} : vector<32x64xf32>, vector<32x64xf32>, vector<32x32xf32> -> vector<32x32xf32>
    %119 = arith.addf %117, %118 : vector<32x32xf32>
    %c0_44 = arith.constant 0 : index
    %c0_45 = arith.constant 0 : index
    %c0_46 = arith.constant 0 : index
    %120 = vector.load %arg10[%c0_44, %c0_45, %c0_46] : memref<3x32x32xf32, #tpu.memory_space<vmem>>, vector<1x32x32xf32>
    %121 = vector.shape_cast %120 : vector<1x32x32xf32> to vector<32x32xf32>
    %122 = vector.shape_cast %119 : vector<32x32xf32> to vector<1x32x32xf32>
    tpu.vector_store %arg10[%c0_44, %c0_45, %c0_46], %122 {strides = array<i32>} : memref<3x32x32xf32, #tpu.memory_space<vmem>>, vector<1x32x32xf32>,
    %c1 = arith.constant 1 : index
    %c0_47 = arith.constant 0 : index
    %c0_48 = arith.constant 0 : index
    %123 = vector.load %arg10[%c1, %c0_47, %c0_48] : memref<3x32x32xf32, #tpu.memory_space<vmem>>, vector<1x32x32xf32>
    %124 = vector.shape_cast %123 : vector<1x32x32xf32> to vector<32x32xf32>
    %cst_49 = arith.constant dense<0.000000e+00> : vector<32x32xf32>
    %125 = tpu.matmul %76, %76, %cst_49 {dimension_numbers = #tpu.dot_dimension_numbers<[1], [1], [0], [0], [0, 0, 1, 0], [], []>} : vector<32x64xf32>, vector<32x64xf32>, vector<32x32xf32> -> vector<32x32xf32>
    %126 = arith.addf %124, %125 : vector<32x32xf32>
    %c1_50 = arith.constant 1 : index
    %c0_51 = arith.constant 0 : index
    %c0_52 = arith.constant 0 : index
    %127 = vector.load %arg10[%c1_50, %c0_51, %c0_52] : memref<3x32x32xf32, #tpu.memory_space<vmem>>, vector<1x32x32xf32>
    %128 = vector.shape_cast %127 : vector<1x32x32xf32> to vector<32x32xf32>
    %129 = vector.shape_cast %126 : vector<32x32xf32> to vector<1x32x32xf32>
    tpu.vector_store %arg10[%c1_50, %c0_51, %c0_52], %129 {strides = array<i32>} : memref<3x32x32xf32, #tpu.memory_space<vmem>>, vector<1x32x32xf32>,
    %c2 = arith.constant 2 : index
    %c0_53 = arith.constant 0 : index
    %c0_54 = arith.constant 0 : index
    %130 = vector.load %arg10[%c2, %c0_53, %c0_54] : memref<3x32x32xf32, #tpu.memory_space<vmem>>, vector<1x32x32xf32>
    %131 = vector.shape_cast %130 : vector<1x32x32xf32> to vector<32x32xf32>
    %cst_55 = arith.constant dense<0.000000e+00> : vector<32x32xf32>
    %132 = tpu.matmul %100, %100, %cst_55 {dimension_numbers = #tpu.dot_dimension_numbers<[1], [1], [0], [0], [0, 0, 1, 0], [], []>} : vector<32x64xf32>, vector<32x64xf32>, vector<32x32xf32> -> vector<32x32xf32>
    %133 = arith.addf %131, %132 : vector<32x32xf32>
    %c2_56 = arith.constant 2 : index
    %c0_57 = arith.constant 0 : index
    %c0_58 = arith.constant 0 : index
    %134 = vector.load %arg10[%c2_56, %c0_57, %c0_58] : memref<3x32x32xf32, #tpu.memory_space<vmem>>, vector<1x32x32xf32>
    %135 = vector.shape_cast %134 : vector<1x32x32xf32> to vector<32x32xf32>
    %136 = vector.shape_cast %133 : vector<32x32xf32> to vector<1x32x32xf32>
    tpu.vector_store %arg10[%c2_56, %c0_57, %c0_58], %136 {strides = array<i32>} : memref<3x32x32xf32, #tpu.memory_space<vmem>>, vector<1x32x32xf32>,
    %137 = tpu.iota {dimensions = array<i32: 0>} : vector<8x128xi32>
    %138 = tpu.iota {dimensions = array<i32: 1>} : vector<8x128xi32>
    %cst_59 = arith.constant 0.000000e+00 : f32
    %139 = vector.broadcast %cst_59 : f32 to vector<8x128xf32>
    %c0_i32_60 = arith.constant 0 : i32
    %140 = vector.broadcast %c0_i32_60 : i32 to vector<8x128xi32>
    %141 = arith.cmpi eq, %137, %140 : vector<8x128xi32>
    %c0_i32_61 = arith.constant 0 : i32
    %142 = vector.broadcast %c0_i32_61 : i32 to vector<8x128xi32>
    %143 = arith.cmpi eq, %138, %142 : vector<8x128xi32>
    %144 = arith.andi %141, %143 : vector<8x128xi1>
    %cst_62 = arith.constant 0.000000e+00 : f32
    %145 = vector.broadcast %15 : f32 to vector<8x128xf32>
    %146 = vector.broadcast %cst_62 : f32 to vector<8x128xf32>
    %147 = arith.select %144, %145, %146 : vector<8x128xi1>, vector<8x128xf32>
    %148 = arith.addf %139, %147 : vector<8x128xf32>
    %c0_i32_63 = arith.constant 0 : i32
    %149 = vector.broadcast %c0_i32_63 : i32 to vector<8x128xi32>
    %150 = arith.cmpi eq, %137, %149 : vector<8x128xi32>
    %c1_i32 = arith.constant 1 : i32
    %151 = vector.broadcast %c1_i32 : i32 to vector<8x128xi32>
    %152 = arith.cmpi eq, %138, %151 : vector<8x128xi32>
    %153 = arith.andi %150, %152 : vector<8x128xi1>
    %cst_64 = arith.constant 0.000000e+00 : f32
    %154 = vector.broadcast %21 : f32 to vector<8x128xf32>
    %155 = vector.broadcast %cst_64 : f32 to vector<8x128xf32>
    %156 = arith.select %153, %154, %155 : vector<8x128xi1>, vector<8x128xf32>
    %157 = arith.addf %148, %156 : vector<8x128xf32>
    %c0_i32_65 = arith.constant 0 : i32
    %158 = vector.broadcast %c0_i32_65 : i32 to vector<8x128xi32>
    %159 = arith.cmpi eq, %137, %158 : vector<8x128xi32>
    %c2_i32 = arith.constant 2 : i32
    %160 = vector.broadcast %c2_i32 : i32 to vector<8x128xi32>
    %161 = arith.cmpi eq, %138, %160 : vector<8x128xi32>
    %162 = arith.andi %159, %161 : vector<8x128xi1>
    %cst_66 = arith.constant 0.000000e+00 : f32
    %163 = vector.broadcast %106 : f32 to vector<8x128xf32>
    %164 = vector.broadcast %cst_66 : f32 to vector<8x128xf32>
    %165 = arith.select %162, %163, %164 : vector<8x128xi1>, vector<8x128xf32>
    %166 = arith.addf %157, %165 : vector<8x128xf32>
    %c0_i32_67 = arith.constant 0 : i32
    %167 = vector.broadcast %c0_i32_67 : i32 to vector<8x128xi32>
    %168 = arith.cmpi eq, %137, %167 : vector<8x128xi32>
    %c3_i32 = arith.constant 3 : i32
    %169 = vector.broadcast %c3_i32 : i32 to vector<8x128xi32>
    %170 = arith.cmpi eq, %138, %169 : vector<8x128xi32>
    %171 = arith.andi %168, %170 : vector<8x128xi1>
    %cst_68 = arith.constant 0.000000e+00 : f32
    %172 = vector.broadcast %112 : f32 to vector<8x128xf32>
    %173 = vector.broadcast %cst_68 : f32 to vector<8x128xf32>
    %174 = arith.select %171, %172, %173 : vector<8x128xi1>, vector<8x128xf32>
    %175 = arith.addf %166, %174 : vector<8x128xf32>
    %c0_69 = arith.constant 0 : index
    %c0_70 = arith.constant 0 : index
    %c0_71 = arith.constant 0 : index
    %c0_72 = arith.constant 0 : index
    %176 = vector.load %arg9[%c0_69, %c0_70, %c0_71, %c0_72] : memref<1x1x8x128xf32, #tpu.memory_space<vmem>>, vector<1x1x8x128xf32>
    %177 = vector.shape_cast %176 : vector<1x1x8x128xf32> to vector<8x128xf32>
    %178 = vector.shape_cast %175 : vector<8x128xf32> to vector<1x1x8x128xf32>
    tpu.vector_store %arg9[%c0_69, %c0_70, %c0_71, %c0_72], %178 {strides = array<i32>} : memref<1x1x8x128xf32, #tpu.memory_space<vmem>>, vector<1x1x8x128xf32>,
    %c0_i32_73 = arith.constant 0 : i32
    %179 = arith.cmpi eq, %arg1, %c0_i32_73 : i32
    %180 = arith.extui %179 : i1 to i32
    %c0_i32_74 = arith.constant 0 : i32
    %181 = arith.cmpi ne, %180, %c0_i32_74 : i32
    scf.if %181 {
      %c0_75 = arith.constant 0 : index
      %c0_76 = arith.constant 0 : index
      %c0_77 = arith.constant 0 : index
      %182 = vector.load %arg10[%c0_75, %c0_76, %c0_77] : memref<3x32x32xf32, #tpu.memory_space<vmem>>, vector<3x32x32xf32>
      %183 = vector.extract_strided_slice %182 {offsets = [1, 0, 0], sizes = [1, 32, 32], strides = [1, 1, 1]} : vector<3x32x32xf32> to vector<1x32x32xf32>
      %184 = vector.shape_cast %183 : vector<1x32x32xf32> to vector<32x32xf32>
      %185 = vector.extract_strided_slice %182 {offsets = [2, 0, 0], sizes = [1, 32, 32], strides = [1, 1, 1]} : vector<3x32x32xf32> to vector<1x32x32xf32>
      %186 = vector.shape_cast %185 : vector<1x32x32xf32> to vector<32x32xf32>
      %187 = arith.subf %184, %186 : vector<32x32xf32>
      %188 = math.absf %187 : vector<32x32xf32>
      %189 = vector.shape_cast %188 : vector<32x32xf32> to vector<1x32x32xf32>
      %cst_78 = arith.constant dense<0.000000e+00> : vector<1xf32>
      %190 = vector.multi_reduction <add>, %189, %cst_78 [1, 2] : vector<1x32x32xf32> to vector<1xf32>
      %191 = vector.shape_cast %190 : vector<1xf32> to vector<1x1x1xf32>
      %192 = vector.extract %191[0, 0, 0] : f32 from vector<1x1x1xf32>
      %cst_79 = arith.constant 4.8828125E-4 : f32
      %193 = arith.mulf %cst_79, %192 : f32
      %194 = vector.extract_strided_slice %182 {offsets = [0, 0, 0], sizes = [1, 32, 32], strides = [1, 1, 1]} : vector<3x32x32xf32> to vector<1x32x32xf32>
      %195 = vector.shape_cast %194 : vector<1x32x32xf32> to vector<32x32xf32>
      %196 = vector.extract_strided_slice %182 {offsets = [2, 0, 0], sizes = [1, 32, 32], strides = [1, 1, 1]} : vector<3x32x32xf32> to vector<1x32x32xf32>
      %197 = vector.shape_cast %196 : vector<1x32x32xf32> to vector<32x32xf32>
      %198 = arith.subf %195, %197 : vector<32x32xf32>
      %199 = math.absf %198 : vector<32x32xf32>
      %200 = vector.shape_cast %199 : vector<32x32xf32> to vector<1x32x32xf32>
      %cst_80 = arith.constant dense<0.000000e+00> : vector<1xf32>
      %201 = vector.multi_reduction <add>, %200, %cst_80 [1, 2] : vector<1x32x32xf32> to vector<1xf32>
      %202 = vector.shape_cast %201 : vector<1xf32> to vector<1x1x1xf32>
      %203 = vector.extract %202[0, 0, 0] : f32 from vector<1x1x1xf32>
      %cst_81 = arith.constant 4.8828125E-4 : f32
      %204 = arith.mulf %cst_81, %203 : f32
      %c0_82 = arith.constant 0 : index
      %c0_83 = arith.constant 0 : index
      %c0_84 = arith.constant 0 : index
      %c0_85 = arith.constant 0 : index
      %205 = vector.load %arg9[%c0_82, %c0_83, %c0_84, %c0_85] : memref<1x1x8x128xf32, #tpu.memory_space<vmem>>, vector<1x1x8x128xf32>
      %206 = vector.shape_cast %205 : vector<1x1x8x128xf32> to vector<8x128xf32>
      %c0_i32_86 = arith.constant 0 : i32
      %207 = vector.broadcast %c0_i32_86 : i32 to vector<8x128xi32>
      %208 = arith.cmpi eq, %137, %207 : vector<8x128xi32>
      %c7_i32 = arith.constant 7 : i32
      %209 = vector.broadcast %c7_i32 : i32 to vector<8x128xi32>
      %210 = arith.cmpi eq, %138, %209 : vector<8x128xi32>
      %211 = arith.andi %208, %210 : vector<8x128xi1>
      %cst_87 = arith.constant 0.000000e+00 : f32
      %212 = vector.broadcast %193 : f32 to vector<8x128xf32>
      %213 = vector.broadcast %cst_87 : f32 to vector<8x128xf32>
      %214 = arith.select %211, %212, %213 : vector<8x128xi1>, vector<8x128xf32>
      %215 = arith.addf %206, %214 : vector<8x128xf32>
      %c0_i32_88 = arith.constant 0 : i32
      %216 = vector.broadcast %c0_i32_88 : i32 to vector<8x128xi32>
      %217 = arith.cmpi eq, %137, %216 : vector<8x128xi32>
      %c8_i32 = arith.constant 8 : i32
      %218 = vector.broadcast %c8_i32 : i32 to vector<8x128xi32>
      %219 = arith.cmpi eq, %138, %218 : vector<8x128xi32>
      %220 = arith.andi %217, %219 : vector<8x128xi1>
      %cst_89 = arith.constant 0.000000e+00 : f32
      %221 = vector.broadcast %204 : f32 to vector<8x128xf32>
      %222 = vector.broadcast %cst_89 : f32 to vector<8x128xf32>
      %223 = arith.select %220, %221, %222 : vector<8x128xi1>, vector<8x128xf32>
      %224 = arith.addf %215, %223 : vector<8x128xf32>
      %c0_90 = arith.constant 0 : index
      %c0_91 = arith.constant 0 : index
      %c0_92 = arith.constant 0 : index
      %c0_93 = arith.constant 0 : index
      %225 = vector.load %arg9[%c0_90, %c0_91, %c0_92, %c0_93] : memref<1x1x8x128xf32, #tpu.memory_space<vmem>>, vector<1x1x8x128xf32>
      %226 = vector.shape_cast %225 : vector<1x1x8x128xf32> to vector<8x128xf32>
      %227 = vector.shape_cast %224 : vector<8x128xf32> to vector<1x1x8x128xf32>
      tpu.vector_store %arg9[%c0_90, %c0_91, %c0_92, %c0_93], %227 {strides = array<i32>} : memref<1x1x8x128xf32, #tpu.memory_space<vmem>>, vector<1x1x8x128xf32>,
    } else {
    }
    return
  }
  func.func @transform_0(%arg0: i32, %arg1: i32) -> (i32, i32, i32) {
    %c0_i32 = arith.constant 0 : i32
    %c0_i32_0 = arith.constant 0 : i32
    return %arg0, %c0_i32, %arg1 : i32, i32, i32
  }
  func.func @transform_1(%arg0: i32, %arg1: i32) -> (i32, i32, i32) {
    %c0_i32 = arith.constant 0 : i32
    %c0_i32_0 = arith.constant 0 : i32
    return %arg0, %c0_i32, %arg1 : i32, i32, i32
  }
  func.func @transform_2(%arg0: i32, %arg1: i32) -> (i32, i32, i32) {
    %c0_i32 = arith.constant 0 : i32
    %c0_i32_0 = arith.constant 0 : i32
    return %arg0, %c0_i32, %arg1 : i32, i32, i32
  }
  func.func @transform_3(%arg0: i32, %arg1: i32) -> (i32, i32, i32) {
    %c0_i32 = arith.constant 0 : i32
    %c0_i32_0 = arith.constant 0 : i32
    return %arg0, %c0_i32, %arg1 : i32, i32, i32
  }
  func.func @transform_4(%arg0: i32, %arg1: i32) -> (i32, i32, i32) {
    %c0_i32 = arith.constant 0 : i32
    %c0_i32_0 = arith.constant 0 : i32
    return %arg0, %c0_i32, %arg1 : i32, i32, i32
  }
  func.func @transform_5(%arg0: i32, %arg1: i32) -> (i32, i32) {
    %c0_i32 = arith.constant 0 : i32
    %c0_i32_0 = arith.constant 0 : i32
    %c0_i32_1 = arith.constant 0 : i32
    return %c0_i32, %c0_i32_0 : i32, i32
  }
  func.func @transform_6(%arg0: i32, %arg1: i32) -> (i32, i32) {
    %c0_i32 = arith.constant 0 : i32
    %c0_i32_0 = arith.constant 0 : i32
    %c0_i32_1 = arith.constant 0 : i32
    return %c0_i32, %c0_i32_0 : i32, i32
  }
  func.func @transform_7(%arg0: i32, %arg1: i32) -> (i32, i32, i32, i32) {
    %c0_i32 = arith.constant 0 : i32
    %c0_i32_0 = arith.constant 0 : i32
    %c0_i32_1 = arith.constant 0 : i32
    return %arg0, %arg1, %c0_i32, %c0_i32_0 : i32, i32, i32, i32
  }
}

module attributes {stable_mosaic.version = 11 : i64} {
  func.func @_stage_kernel(%arg0: i32, %arg1: i32, %arg2: memref<1x1x16xf32, #tpu.memory_space<vmem>>, %arg3: memref<1x3x16xf32, #tpu.memory_space<vmem>>, %arg4: memref<1x3x16xf32, #tpu.memory_space<vmem>>, %arg5: memref<1x3x16xf32, #tpu.memory_space<vmem>>, %arg6: memref<1x3x16xf32, #tpu.memory_space<vmem>>, %arg7: memref<16x3xf32, #tpu.memory_space<vmem>>, %arg8: memref<32x16xf32, #tpu.memory_space<vmem>>, %arg9: memref<64x32xf32, #tpu.memory_space<vmem>>, %arg10: memref<1x1x8x128xf32, #tpu.memory_space<vmem>>, %arg11: memref<3x64x64xf32, #tpu.memory_space<vmem>>) attributes {dimension_semantics = [#tpu.dimension_semantics<parallel>, #tpu.dimension_semantics<arbitrary>], iteration_bounds = array<i64: 2, 1>, scalar_prefetch = 0 : i64, scratch_operands = 1 : i64, tpu.core_type = #tpu.core_type<tc>, window_params = [{transform_indices = @transform_0, window_bounds = array<i64: 1, 1, 16>}, {transform_indices = @transform_1, window_bounds = array<i64: 1, 3, 16>}, {transform_indices = @transform_2, window_bounds = array<i64: 1, 3, 16>}, {transform_indices = @transform_3, window_bounds = array<i64: 1, 3, 16>}, {transform_indices = @transform_4, window_bounds = array<i64: 1, 3, 16>}, {pipeline_mode = #tpu.pipeline_mode<synchronous>, transform_indices = @transform_5, window_bounds = array<i64: 16, 3>}, {pipeline_mode = #tpu.pipeline_mode<synchronous>, transform_indices = @transform_6, window_bounds = array<i64: 32, 16>}, {pipeline_mode = #tpu.pipeline_mode<synchronous>, transform_indices = @transform_7, window_bounds = array<i64: 64, 32>}, {transform_indices = @transform_8, window_bounds = array<i64: 1, 1, 8, 128>}]} {
    %c0 = arith.constant 0 : index
    %c0_0 = arith.constant 0 : index
    %c0_1 = arith.constant 0 : index
    %0 = vector.load %arg2[%c0, %c0_0, %c0_1] : memref<1x1x16xf32, #tpu.memory_space<vmem>>, vector<1x1x16xf32>
    %1 = vector.shape_cast %0 : vector<1x1x16xf32> to vector<1x16xf32>
    %c0_2 = arith.constant 0 : index
    %c0_3 = arith.constant 0 : index
    %c0_4 = arith.constant 0 : index
    %2 = vector.load %arg3[%c0_2, %c0_3, %c0_4] : memref<1x3x16xf32, #tpu.memory_space<vmem>>, vector<1x3x16xf32>
    %3 = vector.shape_cast %2 : vector<1x3x16xf32> to vector<3x16xf32>
    %c0_5 = arith.constant 0 : index
    %c0_6 = arith.constant 0 : index
    %c0_7 = arith.constant 0 : index
    %4 = vector.load %arg4[%c0_5, %c0_6, %c0_7] : memref<1x3x16xf32, #tpu.memory_space<vmem>>, vector<1x3x16xf32>
    %5 = vector.shape_cast %4 : vector<1x3x16xf32> to vector<3x16xf32>
    %c0_8 = arith.constant 0 : index
    %c0_9 = arith.constant 0 : index
    %c0_10 = arith.constant 0 : index
    %6 = vector.load %arg5[%c0_8, %c0_9, %c0_10] : memref<1x3x16xf32, #tpu.memory_space<vmem>>, vector<1x3x16xf32>
    %7 = vector.shape_cast %6 : vector<1x3x16xf32> to vector<3x16xf32>
    %c0_11 = arith.constant 0 : index
    %c0_12 = arith.constant 0 : index
    %c0_13 = arith.constant 0 : index
    %8 = vector.load %arg6[%c0_11, %c0_12, %c0_13] : memref<1x3x16xf32, #tpu.memory_space<vmem>>, vector<1x3x16xf32>
    %9 = vector.shape_cast %8 : vector<1x3x16xf32> to vector<3x16xf32>
    %10 = arith.subf %9, %7 : vector<3x16xf32>
    %11 = math.absf %10 : vector<3x16xf32>
    %12 = vector.shape_cast %11 : vector<3x16xf32> to vector<1x3x16xf32>
    %cst = arith.constant dense<0.000000e+00> : vector<1xf32>
    %13 = vector.multi_reduction <add>, %12, %cst [1, 2] : vector<1x3x16xf32> to vector<1xf32>
    %14 = vector.shape_cast %13 : vector<1xf32> to vector<1x1x1xf32>
    %15 = vector.extract %14[0, 0, 0] : f32 from vector<1x1x1xf32>
    %16 = vector.broadcast %1 : vector<1x16xf32> to vector<3x16xf32>
    %17 = arith.mulf %16, %11 : vector<3x16xf32>
    %18 = vector.shape_cast %17 : vector<3x16xf32> to vector<1x3x16xf32>
    %cst_14 = arith.constant dense<0.000000e+00> : vector<1xf32>
    %19 = vector.multi_reduction <add>, %18, %cst_14 [1, 2] : vector<1x3x16xf32> to vector<1xf32>
    %20 = vector.shape_cast %19 : vector<1xf32> to vector<1x1x1xf32>
    %21 = vector.extract %20[0, 0, 0] : f32 from vector<1x1x1xf32>
    %22 = vector.broadcast %1 : vector<1x16xf32> to vector<3x16xf32>
    %23 = arith.mulf %22, %3 : vector<3x16xf32>
    %cst_15 = arith.constant 1.000000e+00 : f32
    %24 = vector.broadcast %cst_15 : f32 to vector<1x16xf32>
    %25 = arith.subf %24, %1 : vector<1x16xf32>
    %26 = vector.broadcast %25 : vector<1x16xf32> to vector<3x16xf32>
    %27 = arith.mulf %26, %5 : vector<3x16xf32>
    %28 = arith.addf %23, %27 : vector<3x16xf32>
    %c0_16 = arith.constant 0 : index
    %c0_17 = arith.constant 0 : index
    %29 = vector.load %arg7[%c0_16, %c0_17] : memref<16x3xf32, #tpu.memory_space<vmem>>, vector<16x3xf32>
    %30 = vector.extract_strided_slice %29 {offsets = [0, 0], sizes = [16, 1], strides = [1, 1]} : vector<16x3xf32> to vector<16x1xf32>
    %31 = vector.extract_strided_slice %28 {offsets = [0, 0], sizes = [1, 16], strides = [1, 1]} : vector<3x16xf32> to vector<1x16xf32>
    %32 = vector.broadcast %30 : vector<16x1xf32> to vector<16x16xf32>
    %33 = vector.broadcast %31 : vector<1x16xf32> to vector<16x16xf32>
    %34 = arith.mulf %32, %33 : vector<16x16xf32>
    %35 = vector.extract_strided_slice %29 {offsets = [0, 1], sizes = [16, 1], strides = [1, 1]} : vector<16x3xf32> to vector<16x1xf32>
    %36 = vector.extract_strided_slice %28 {offsets = [1, 0], sizes = [1, 16], strides = [1, 1]} : vector<3x16xf32> to vector<1x16xf32>
    %37 = vector.broadcast %35 : vector<16x1xf32> to vector<16x16xf32>
    %38 = vector.broadcast %36 : vector<1x16xf32> to vector<16x16xf32>
    %39 = arith.mulf %37, %38 : vector<16x16xf32>
    %40 = arith.addf %34, %39 : vector<16x16xf32>
    %41 = vector.extract_strided_slice %29 {offsets = [0, 2], sizes = [16, 1], strides = [1, 1]} : vector<16x3xf32> to vector<16x1xf32>
    %42 = vector.extract_strided_slice %28 {offsets = [2, 0], sizes = [1, 16], strides = [1, 1]} : vector<3x16xf32> to vector<1x16xf32>
    %43 = vector.broadcast %41 : vector<16x1xf32> to vector<16x16xf32>
    %44 = vector.broadcast %42 : vector<1x16xf32> to vector<16x16xf32>
    %45 = arith.mulf %43, %44 : vector<16x16xf32>
    %46 = arith.addf %40, %45 : vector<16x16xf32>
    %cst_18 = arith.constant 0.000000e+00 : f32
    %47 = vector.broadcast %cst_18 : f32 to vector<16x16xf32>
    %48 = arith.maximumf %46, %47 : vector<16x16xf32>
    %c0_19 = arith.constant 0 : index
    %c0_20 = arith.constant 0 : index
    %49 = vector.load %arg8[%c0_19, %c0_20] : memref<32x16xf32, #tpu.memory_space<vmem>>, vector<32x16xf32>
    %cst_21 = arith.constant dense<0.000000e+00> : vector<32x16xf32>
    %50 = tpu.matmul %49, %48, %cst_21 {dimension_numbers = #tpu.dot_dimension_numbers<[1], [0], [0], [1], [0, 0, 1, 1], [], []>} : vector<32x16xf32>, vector<16x16xf32>, vector<32x16xf32> -> vector<32x16xf32>
    %cst_22 = arith.constant 0.000000e+00 : f32
    %51 = vector.broadcast %cst_22 : f32 to vector<32x16xf32>
    %52 = arith.maximumf %50, %51 : vector<32x16xf32>
    %c0_23 = arith.constant 0 : index
    %c0_24 = arith.constant 0 : index
    %53 = vector.load %arg9[%c0_23, %c0_24] : memref<64x32xf32, #tpu.memory_space<vmem>>, vector<64x32xf32>
    %cst_25 = arith.constant dense<0.000000e+00> : vector<64x16xf32>
    %54 = tpu.matmul %53, %52, %cst_25 {dimension_numbers = #tpu.dot_dimension_numbers<[1], [0], [0], [1], [0, 0, 1, 1], [], []>} : vector<64x32xf32>, vector<32x16xf32>, vector<64x16xf32> -> vector<64x16xf32>
    %cst_26 = arith.constant 0.000000e+00 : f32
    %55 = vector.broadcast %cst_26 : f32 to vector<64x16xf32>
    %56 = arith.maximumf %54, %55 : vector<64x16xf32>
    %c0_27 = arith.constant 0 : index
    %c0_28 = arith.constant 0 : index
    %57 = vector.load %arg7[%c0_27, %c0_28] : memref<16x3xf32, #tpu.memory_space<vmem>>, vector<16x3xf32>
    %58 = vector.extract_strided_slice %57 {offsets = [0, 0], sizes = [16, 1], strides = [1, 1]} : vector<16x3xf32> to vector<16x1xf32>
    %59 = vector.extract_strided_slice %5 {offsets = [0, 0], sizes = [1, 16], strides = [1, 1]} : vector<3x16xf32> to vector<1x16xf32>
    %60 = vector.broadcast %58 : vector<16x1xf32> to vector<16x16xf32>
    %61 = vector.broadcast %59 : vector<1x16xf32> to vector<16x16xf32>
    %62 = arith.mulf %60, %61 : vector<16x16xf32>
    %63 = vector.extract_strided_slice %57 {offsets = [0, 1], sizes = [16, 1], strides = [1, 1]} : vector<16x3xf32> to vector<16x1xf32>
    %64 = vector.extract_strided_slice %5 {offsets = [1, 0], sizes = [1, 16], strides = [1, 1]} : vector<3x16xf32> to vector<1x16xf32>
    %65 = vector.broadcast %63 : vector<16x1xf32> to vector<16x16xf32>
    %66 = vector.broadcast %64 : vector<1x16xf32> to vector<16x16xf32>
    %67 = arith.mulf %65, %66 : vector<16x16xf32>
    %68 = arith.addf %62, %67 : vector<16x16xf32>
    %69 = vector.extract_strided_slice %57 {offsets = [0, 2], sizes = [16, 1], strides = [1, 1]} : vector<16x3xf32> to vector<16x1xf32>
    %70 = vector.extract_strided_slice %5 {offsets = [2, 0], sizes = [1, 16], strides = [1, 1]} : vector<3x16xf32> to vector<1x16xf32>
    %71 = vector.broadcast %69 : vector<16x1xf32> to vector<16x16xf32>
    %72 = vector.broadcast %70 : vector<1x16xf32> to vector<16x16xf32>
    %73 = arith.mulf %71, %72 : vector<16x16xf32>
    %74 = arith.addf %68, %73 : vector<16x16xf32>
    %cst_29 = arith.constant 0.000000e+00 : f32
    %75 = vector.broadcast %cst_29 : f32 to vector<16x16xf32>
    %76 = arith.maximumf %74, %75 : vector<16x16xf32>
    %c0_30 = arith.constant 0 : index
    %c0_31 = arith.constant 0 : index
    %77 = vector.load %arg8[%c0_30, %c0_31] : memref<32x16xf32, #tpu.memory_space<vmem>>, vector<32x16xf32>
    %cst_32 = arith.constant dense<0.000000e+00> : vector<32x16xf32>
    %78 = tpu.matmul %77, %76, %cst_32 {dimension_numbers = #tpu.dot_dimension_numbers<[1], [0], [0], [1], [0, 0, 1, 1], [], []>} : vector<32x16xf32>, vector<16x16xf32>, vector<32x16xf32> -> vector<32x16xf32>
    %cst_33 = arith.constant 0.000000e+00 : f32
    %79 = vector.broadcast %cst_33 : f32 to vector<32x16xf32>
    %80 = arith.maximumf %78, %79 : vector<32x16xf32>
    %c0_34 = arith.constant 0 : index
    %c0_35 = arith.constant 0 : index
    %81 = vector.load %arg9[%c0_34, %c0_35] : memref<64x32xf32, #tpu.memory_space<vmem>>, vector<64x32xf32>
    %cst_36 = arith.constant dense<0.000000e+00> : vector<64x16xf32>
    %82 = tpu.matmul %81, %80, %cst_36 {dimension_numbers = #tpu.dot_dimension_numbers<[1], [0], [0], [1], [0, 0, 1, 1], [], []>} : vector<64x32xf32>, vector<32x16xf32>, vector<64x16xf32> -> vector<64x16xf32>
    %cst_37 = arith.constant 0.000000e+00 : f32
    %83 = vector.broadcast %cst_37 : f32 to vector<64x16xf32>
    %84 = arith.maximumf %82, %83 : vector<64x16xf32>
    %c0_38 = arith.constant 0 : index
    %c0_39 = arith.constant 0 : index
    %85 = vector.load %arg7[%c0_38, %c0_39] : memref<16x3xf32, #tpu.memory_space<vmem>>, vector<16x3xf32>
    %86 = vector.extract_strided_slice %85 {offsets = [0, 0], sizes = [16, 1], strides = [1, 1]} : vector<16x3xf32> to vector<16x1xf32>
    %87 = vector.extract_strided_slice %7 {offsets = [0, 0], sizes = [1, 16], strides = [1, 1]} : vector<3x16xf32> to vector<1x16xf32>
    %88 = vector.broadcast %86 : vector<16x1xf32> to vector<16x16xf32>
    %89 = vector.broadcast %87 : vector<1x16xf32> to vector<16x16xf32>
    %90 = arith.mulf %88, %89 : vector<16x16xf32>
    %91 = vector.extract_strided_slice %85 {offsets = [0, 1], sizes = [16, 1], strides = [1, 1]} : vector<16x3xf32> to vector<16x1xf32>
    %92 = vector.extract_strided_slice %7 {offsets = [1, 0], sizes = [1, 16], strides = [1, 1]} : vector<3x16xf32> to vector<1x16xf32>
    %93 = vector.broadcast %91 : vector<16x1xf32> to vector<16x16xf32>
    %94 = vector.broadcast %92 : vector<1x16xf32> to vector<16x16xf32>
    %95 = arith.mulf %93, %94 : vector<16x16xf32>
    %96 = arith.addf %90, %95 : vector<16x16xf32>
    %97 = vector.extract_strided_slice %85 {offsets = [0, 2], sizes = [16, 1], strides = [1, 1]} : vector<16x3xf32> to vector<16x1xf32>
    %98 = vector.extract_strided_slice %7 {offsets = [2, 0], sizes = [1, 16], strides = [1, 1]} : vector<3x16xf32> to vector<1x16xf32>
    %99 = vector.broadcast %97 : vector<16x1xf32> to vector<16x16xf32>
    %100 = vector.broadcast %98 : vector<1x16xf32> to vector<16x16xf32>
    %101 = arith.mulf %99, %100 : vector<16x16xf32>
    %102 = arith.addf %96, %101 : vector<16x16xf32>
    %cst_40 = arith.constant 0.000000e+00 : f32
    %103 = vector.broadcast %cst_40 : f32 to vector<16x16xf32>
    %104 = arith.maximumf %102, %103 : vector<16x16xf32>
    %c0_41 = arith.constant 0 : index
    %c0_42 = arith.constant 0 : index
    %105 = vector.load %arg8[%c0_41, %c0_42] : memref<32x16xf32, #tpu.memory_space<vmem>>, vector<32x16xf32>
    %cst_43 = arith.constant dense<0.000000e+00> : vector<32x16xf32>
    %106 = tpu.matmul %105, %104, %cst_43 {dimension_numbers = #tpu.dot_dimension_numbers<[1], [0], [0], [1], [0, 0, 1, 1], [], []>} : vector<32x16xf32>, vector<16x16xf32>, vector<32x16xf32> -> vector<32x16xf32>
    %cst_44 = arith.constant 0.000000e+00 : f32
    %107 = vector.broadcast %cst_44 : f32 to vector<32x16xf32>
    %108 = arith.maximumf %106, %107 : vector<32x16xf32>
    %c0_45 = arith.constant 0 : index
    %c0_46 = arith.constant 0 : index
    %109 = vector.load %arg9[%c0_45, %c0_46] : memref<64x32xf32, #tpu.memory_space<vmem>>, vector<64x32xf32>
    %cst_47 = arith.constant dense<0.000000e+00> : vector<64x16xf32>
    %110 = tpu.matmul %109, %108, %cst_47 {dimension_numbers = #tpu.dot_dimension_numbers<[1], [0], [0], [1], [0, 0, 1, 1], [], []>} : vector<64x32xf32>, vector<32x16xf32>, vector<64x16xf32> -> vector<64x16xf32>
    %cst_48 = arith.constant 0.000000e+00 : f32
    %111 = vector.broadcast %cst_48 : f32 to vector<64x16xf32>
    %112 = arith.maximumf %110, %111 : vector<64x16xf32>
    %113 = arith.subf %84, %112 : vector<64x16xf32>
    %114 = math.absf %113 : vector<64x16xf32>
    %115 = vector.shape_cast %114 : vector<64x16xf32> to vector<1x64x16xf32>
    %cst_49 = arith.constant dense<0.000000e+00> : vector<1xf32>
    %116 = vector.multi_reduction <add>, %115, %cst_49 [1, 2] : vector<1x64x16xf32> to vector<1xf32>
    %117 = vector.shape_cast %116 : vector<1xf32> to vector<1x1x1xf32>
    %118 = vector.extract %117[0, 0, 0] : f32 from vector<1x1x1xf32>
    %119 = arith.subf %56, %112 : vector<64x16xf32>
    %120 = math.absf %119 : vector<64x16xf32>
    %121 = vector.shape_cast %120 : vector<64x16xf32> to vector<1x64x16xf32>
    %cst_50 = arith.constant dense<0.000000e+00> : vector<1xf32>
    %122 = vector.multi_reduction <add>, %121, %cst_50 [1, 2] : vector<1x64x16xf32> to vector<1xf32>
    %123 = vector.shape_cast %122 : vector<1xf32> to vector<1x1x1xf32>
    %124 = vector.extract %123[0, 0, 0] : f32 from vector<1x1x1xf32>
    %c0_i32 = arith.constant 0 : i32
    %125 = arith.cmpi eq, %arg1, %c0_i32 : i32
    %126 = arith.extui %125 : i1 to i32
    %c0_i32_51 = arith.constant 0 : i32
    %127 = arith.cmpi ne, %126, %c0_i32_51 : i32
    scf.if %127 {
      %cst_87 = arith.constant 0.000000e+00 : f32
      %194 = vector.broadcast %cst_87 : f32 to vector<3x64x64xf32>
      %c0_88 = arith.constant 0 : index
      %c0_89 = arith.constant 0 : index
      %c0_90 = arith.constant 0 : index
      %195 = vector.load %arg11[%c0_88, %c0_89, %c0_90] : memref<3x64x64xf32, #tpu.memory_space<vmem>>, vector<3x64x64xf32>
      tpu.vector_store %arg11[%c0_88, %c0_89, %c0_90], %194 {strides = array<i32>} : memref<3x64x64xf32, #tpu.memory_space<vmem>>, vector<3x64x64xf32>,
    } else {
    }
    %c0_52 = arith.constant 0 : index
    %c0_53 = arith.constant 0 : index
    %c0_54 = arith.constant 0 : index
    %128 = vector.load %arg11[%c0_52, %c0_53, %c0_54] : memref<3x64x64xf32, #tpu.memory_space<vmem>>, vector<1x64x64xf32>
    %129 = vector.shape_cast %128 : vector<1x64x64xf32> to vector<64x64xf32>
    %cst_55 = arith.constant dense<0.000000e+00> : vector<64x64xf32>
    %130 = tpu.matmul %56, %56, %cst_55 {dimension_numbers = #tpu.dot_dimension_numbers<[1], [1], [0], [0], [0, 0, 1, 0], [], []>} : vector<64x16xf32>, vector<64x16xf32>, vector<64x64xf32> -> vector<64x64xf32>
    %131 = arith.addf %129, %130 : vector<64x64xf32>
    %c0_56 = arith.constant 0 : index
    %c0_57 = arith.constant 0 : index
    %c0_58 = arith.constant 0 : index
    %132 = vector.load %arg11[%c0_56, %c0_57, %c0_58] : memref<3x64x64xf32, #tpu.memory_space<vmem>>, vector<1x64x64xf32>
    %133 = vector.shape_cast %132 : vector<1x64x64xf32> to vector<64x64xf32>
    %134 = vector.shape_cast %131 : vector<64x64xf32> to vector<1x64x64xf32>
    tpu.vector_store %arg11[%c0_56, %c0_57, %c0_58], %134 {strides = array<i32>} : memref<3x64x64xf32, #tpu.memory_space<vmem>>, vector<1x64x64xf32>,
    %c1 = arith.constant 1 : index
    %c0_59 = arith.constant 0 : index
    %c0_60 = arith.constant 0 : index
    %135 = vector.load %arg11[%c1, %c0_59, %c0_60] : memref<3x64x64xf32, #tpu.memory_space<vmem>>, vector<1x64x64xf32>
    %136 = vector.shape_cast %135 : vector<1x64x64xf32> to vector<64x64xf32>
    %cst_61 = arith.constant dense<0.000000e+00> : vector<64x64xf32>
    %137 = tpu.matmul %84, %84, %cst_61 {dimension_numbers = #tpu.dot_dimension_numbers<[1], [1], [0], [0], [0, 0, 1, 0], [], []>} : vector<64x16xf32>, vector<64x16xf32>, vector<64x64xf32> -> vector<64x64xf32>
    %138 = arith.addf %136, %137 : vector<64x64xf32>
    %c1_62 = arith.constant 1 : index
    %c0_63 = arith.constant 0 : index
    %c0_64 = arith.constant 0 : index
    %139 = vector.load %arg11[%c1_62, %c0_63, %c0_64] : memref<3x64x64xf32, #tpu.memory_space<vmem>>, vector<1x64x64xf32>
    %140 = vector.shape_cast %139 : vector<1x64x64xf32> to vector<64x64xf32>
    %141 = vector.shape_cast %138 : vector<64x64xf32> to vector<1x64x64xf32>
    tpu.vector_store %arg11[%c1_62, %c0_63, %c0_64], %141 {strides = array<i32>} : memref<3x64x64xf32, #tpu.memory_space<vmem>>, vector<1x64x64xf32>,
    %c2 = arith.constant 2 : index
    %c0_65 = arith.constant 0 : index
    %c0_66 = arith.constant 0 : index
    %142 = vector.load %arg11[%c2, %c0_65, %c0_66] : memref<3x64x64xf32, #tpu.memory_space<vmem>>, vector<1x64x64xf32>
    %143 = vector.shape_cast %142 : vector<1x64x64xf32> to vector<64x64xf32>
    %cst_67 = arith.constant dense<0.000000e+00> : vector<64x64xf32>
    %144 = tpu.matmul %112, %112, %cst_67 {dimension_numbers = #tpu.dot_dimension_numbers<[1], [1], [0], [0], [0, 0, 1, 0], [], []>} : vector<64x16xf32>, vector<64x16xf32>, vector<64x64xf32> -> vector<64x64xf32>
    %145 = arith.addf %143, %144 : vector<64x64xf32>
    %c2_68 = arith.constant 2 : index
    %c0_69 = arith.constant 0 : index
    %c0_70 = arith.constant 0 : index
    %146 = vector.load %arg11[%c2_68, %c0_69, %c0_70] : memref<3x64x64xf32, #tpu.memory_space<vmem>>, vector<1x64x64xf32>
    %147 = vector.shape_cast %146 : vector<1x64x64xf32> to vector<64x64xf32>
    %148 = vector.shape_cast %145 : vector<64x64xf32> to vector<1x64x64xf32>
    tpu.vector_store %arg11[%c2_68, %c0_69, %c0_70], %148 {strides = array<i32>} : memref<3x64x64xf32, #tpu.memory_space<vmem>>, vector<1x64x64xf32>,
    %149 = tpu.iota {dimensions = array<i32: 0>} : vector<8x128xi32>
    %150 = tpu.iota {dimensions = array<i32: 1>} : vector<8x128xi32>
    %cst_71 = arith.constant 0.000000e+00 : f32
    %151 = vector.broadcast %cst_71 : f32 to vector<8x128xf32>
    %c0_i32_72 = arith.constant 0 : i32
    %152 = vector.broadcast %c0_i32_72 : i32 to vector<8x128xi32>
    %153 = arith.cmpi eq, %149, %152 : vector<8x128xi32>
    %c0_i32_73 = arith.constant 0 : i32
    %154 = vector.broadcast %c0_i32_73 : i32 to vector<8x128xi32>
    %155 = arith.cmpi eq, %150, %154 : vector<8x128xi32>
    %156 = arith.andi %153, %155 : vector<8x128xi1>
    %cst_74 = arith.constant 0.000000e+00 : f32
    %157 = vector.broadcast %15 : f32 to vector<8x128xf32>
    %158 = vector.broadcast %cst_74 : f32 to vector<8x128xf32>
    %159 = arith.select %156, %157, %158 : vector<8x128xi1>, vector<8x128xf32>
    %160 = arith.addf %151, %159 : vector<8x128xf32>
    %c0_i32_75 = arith.constant 0 : i32
    %161 = vector.broadcast %c0_i32_75 : i32 to vector<8x128xi32>
    %162 = arith.cmpi eq, %149, %161 : vector<8x128xi32>
    %c1_i32 = arith.constant 1 : i32
    %163 = vector.broadcast %c1_i32 : i32 to vector<8x128xi32>
    %164 = arith.cmpi eq, %150, %163 : vector<8x128xi32>
    %165 = arith.andi %162, %164 : vector<8x128xi1>
    %cst_76 = arith.constant 0.000000e+00 : f32
    %166 = vector.broadcast %21 : f32 to vector<8x128xf32>
    %167 = vector.broadcast %cst_76 : f32 to vector<8x128xf32>
    %168 = arith.select %165, %166, %167 : vector<8x128xi1>, vector<8x128xf32>
    %169 = arith.addf %160, %168 : vector<8x128xf32>
    %c0_i32_77 = arith.constant 0 : i32
    %170 = vector.broadcast %c0_i32_77 : i32 to vector<8x128xi32>
    %171 = arith.cmpi eq, %149, %170 : vector<8x128xi32>
    %c2_i32 = arith.constant 2 : i32
    %172 = vector.broadcast %c2_i32 : i32 to vector<8x128xi32>
    %173 = arith.cmpi eq, %150, %172 : vector<8x128xi32>
    %174 = arith.andi %171, %173 : vector<8x128xi1>
    %cst_78 = arith.constant 0.000000e+00 : f32
    %175 = vector.broadcast %118 : f32 to vector<8x128xf32>
    %176 = vector.broadcast %cst_78 : f32 to vector<8x128xf32>
    %177 = arith.select %174, %175, %176 : vector<8x128xi1>, vector<8x128xf32>
    %178 = arith.addf %169, %177 : vector<8x128xf32>
    %c0_i32_79 = arith.constant 0 : i32
    %179 = vector.broadcast %c0_i32_79 : i32 to vector<8x128xi32>
    %180 = arith.cmpi eq, %149, %179 : vector<8x128xi32>
    %c3_i32 = arith.constant 3 : i32
    %181 = vector.broadcast %c3_i32 : i32 to vector<8x128xi32>
    %182 = arith.cmpi eq, %150, %181 : vector<8x128xi32>
    %183 = arith.andi %180, %182 : vector<8x128xi1>
    %cst_80 = arith.constant 0.000000e+00 : f32
    %184 = vector.broadcast %124 : f32 to vector<8x128xf32>
    %185 = vector.broadcast %cst_80 : f32 to vector<8x128xf32>
    %186 = arith.select %183, %184, %185 : vector<8x128xi1>, vector<8x128xf32>
    %187 = arith.addf %178, %186 : vector<8x128xf32>
    %c0_81 = arith.constant 0 : index
    %c0_82 = arith.constant 0 : index
    %c0_83 = arith.constant 0 : index
    %c0_84 = arith.constant 0 : index
    %188 = vector.load %arg10[%c0_81, %c0_82, %c0_83, %c0_84] : memref<1x1x8x128xf32, #tpu.memory_space<vmem>>, vector<1x1x8x128xf32>
    %189 = vector.shape_cast %188 : vector<1x1x8x128xf32> to vector<8x128xf32>
    %190 = vector.shape_cast %187 : vector<8x128xf32> to vector<1x1x8x128xf32>
    tpu.vector_store %arg10[%c0_81, %c0_82, %c0_83, %c0_84], %190 {strides = array<i32>} : memref<1x1x8x128xf32, #tpu.memory_space<vmem>>, vector<1x1x8x128xf32>,
    %c0_i32_85 = arith.constant 0 : i32
    %191 = arith.cmpi eq, %arg1, %c0_i32_85 : i32
    %192 = arith.extui %191 : i1 to i32
    %c0_i32_86 = arith.constant 0 : i32
    %193 = arith.cmpi ne, %192, %c0_i32_86 : i32
    scf.if %193 {
      %c0_87 = arith.constant 0 : index
      %c0_88 = arith.constant 0 : index
      %c0_89 = arith.constant 0 : index
      %194 = vector.load %arg11[%c0_87, %c0_88, %c0_89] : memref<3x64x64xf32, #tpu.memory_space<vmem>>, vector<3x64x64xf32>
      %195 = vector.extract_strided_slice %194 {offsets = [1, 0, 0], sizes = [1, 64, 64], strides = [1, 1, 1]} : vector<3x64x64xf32> to vector<1x64x64xf32>
      %196 = vector.shape_cast %195 : vector<1x64x64xf32> to vector<64x64xf32>
      %197 = vector.extract_strided_slice %194 {offsets = [2, 0, 0], sizes = [1, 64, 64], strides = [1, 1, 1]} : vector<3x64x64xf32> to vector<1x64x64xf32>
      %198 = vector.shape_cast %197 : vector<1x64x64xf32> to vector<64x64xf32>
      %199 = arith.subf %196, %198 : vector<64x64xf32>
      %200 = math.absf %199 : vector<64x64xf32>
      %201 = vector.shape_cast %200 : vector<64x64xf32> to vector<1x64x64xf32>
      %cst_90 = arith.constant dense<0.000000e+00> : vector<1xf32>
      %202 = vector.multi_reduction <add>, %201, %cst_90 [1, 2] : vector<1x64x64xf32> to vector<1xf32>
      %203 = vector.shape_cast %202 : vector<1xf32> to vector<1x1x1xf32>
      %204 = vector.extract %203[0, 0, 0] : f32 from vector<1x1x1xf32>
      %cst_91 = arith.constant 9.765625E-4 : f32
      %205 = arith.mulf %cst_91, %204 : f32
      %206 = vector.extract_strided_slice %194 {offsets = [0, 0, 0], sizes = [1, 64, 64], strides = [1, 1, 1]} : vector<3x64x64xf32> to vector<1x64x64xf32>
      %207 = vector.shape_cast %206 : vector<1x64x64xf32> to vector<64x64xf32>
      %208 = vector.extract_strided_slice %194 {offsets = [2, 0, 0], sizes = [1, 64, 64], strides = [1, 1, 1]} : vector<3x64x64xf32> to vector<1x64x64xf32>
      %209 = vector.shape_cast %208 : vector<1x64x64xf32> to vector<64x64xf32>
      %210 = arith.subf %207, %209 : vector<64x64xf32>
      %211 = math.absf %210 : vector<64x64xf32>
      %212 = vector.shape_cast %211 : vector<64x64xf32> to vector<1x64x64xf32>
      %cst_92 = arith.constant dense<0.000000e+00> : vector<1xf32>
      %213 = vector.multi_reduction <add>, %212, %cst_92 [1, 2] : vector<1x64x64xf32> to vector<1xf32>
      %214 = vector.shape_cast %213 : vector<1xf32> to vector<1x1x1xf32>
      %215 = vector.extract %214[0, 0, 0] : f32 from vector<1x1x1xf32>
      %cst_93 = arith.constant 9.765625E-4 : f32
      %216 = arith.mulf %cst_93, %215 : f32
      %c0_94 = arith.constant 0 : index
      %c0_95 = arith.constant 0 : index
      %c0_96 = arith.constant 0 : index
      %c0_97 = arith.constant 0 : index
      %217 = vector.load %arg10[%c0_94, %c0_95, %c0_96, %c0_97] : memref<1x1x8x128xf32, #tpu.memory_space<vmem>>, vector<1x1x8x128xf32>
      %218 = vector.shape_cast %217 : vector<1x1x8x128xf32> to vector<8x128xf32>
      %c0_i32_98 = arith.constant 0 : i32
      %219 = vector.broadcast %c0_i32_98 : i32 to vector<8x128xi32>
      %220 = arith.cmpi eq, %149, %219 : vector<8x128xi32>
      %c7_i32 = arith.constant 7 : i32
      %221 = vector.broadcast %c7_i32 : i32 to vector<8x128xi32>
      %222 = arith.cmpi eq, %150, %221 : vector<8x128xi32>
      %223 = arith.andi %220, %222 : vector<8x128xi1>
      %cst_99 = arith.constant 0.000000e+00 : f32
      %224 = vector.broadcast %205 : f32 to vector<8x128xf32>
      %225 = vector.broadcast %cst_99 : f32 to vector<8x128xf32>
      %226 = arith.select %223, %224, %225 : vector<8x128xi1>, vector<8x128xf32>
      %227 = arith.addf %218, %226 : vector<8x128xf32>
      %c0_i32_100 = arith.constant 0 : i32
      %228 = vector.broadcast %c0_i32_100 : i32 to vector<8x128xi32>
      %229 = arith.cmpi eq, %149, %228 : vector<8x128xi32>
      %c8_i32 = arith.constant 8 : i32
      %230 = vector.broadcast %c8_i32 : i32 to vector<8x128xi32>
      %231 = arith.cmpi eq, %150, %230 : vector<8x128xi32>
      %232 = arith.andi %229, %231 : vector<8x128xi1>
      %cst_101 = arith.constant 0.000000e+00 : f32
      %233 = vector.broadcast %216 : f32 to vector<8x128xf32>
      %234 = vector.broadcast %cst_101 : f32 to vector<8x128xf32>
      %235 = arith.select %232, %233, %234 : vector<8x128xi1>, vector<8x128xf32>
      %236 = arith.addf %227, %235 : vector<8x128xf32>
      %c0_102 = arith.constant 0 : index
      %c0_103 = arith.constant 0 : index
      %c0_104 = arith.constant 0 : index
      %c0_105 = arith.constant 0 : index
      %237 = vector.load %arg10[%c0_102, %c0_103, %c0_104, %c0_105] : memref<1x1x8x128xf32, #tpu.memory_space<vmem>>, vector<1x1x8x128xf32>
      %238 = vector.shape_cast %237 : vector<1x1x8x128xf32> to vector<8x128xf32>
      %239 = vector.shape_cast %236 : vector<8x128xf32> to vector<1x1x8x128xf32>
      tpu.vector_store %arg10[%c0_102, %c0_103, %c0_104, %c0_105], %239 {strides = array<i32>} : memref<1x1x8x128xf32, #tpu.memory_space<vmem>>, vector<1x1x8x128xf32>,
    } else {
    }
    return
  }
  func.func @transform_0(%arg0: i32, %arg1: i32) -> (i32, i32, i32) {
    %c0_i32 = arith.constant 0 : i32
    %c0_i32_0 = arith.constant 0 : i32
    return %arg0, %c0_i32, %arg1 : i32, i32, i32
  }
  func.func @transform_1(%arg0: i32, %arg1: i32) -> (i32, i32, i32) {
    %c0_i32 = arith.constant 0 : i32
    %c0_i32_0 = arith.constant 0 : i32
    return %arg0, %c0_i32, %arg1 : i32, i32, i32
  }
  func.func @transform_2(%arg0: i32, %arg1: i32) -> (i32, i32, i32) {
    %c0_i32 = arith.constant 0 : i32
    %c0_i32_0 = arith.constant 0 : i32
    return %arg0, %c0_i32, %arg1 : i32, i32, i32
  }
  func.func @transform_3(%arg0: i32, %arg1: i32) -> (i32, i32, i32) {
    %c0_i32 = arith.constant 0 : i32
    %c0_i32_0 = arith.constant 0 : i32
    return %arg0, %c0_i32, %arg1 : i32, i32, i32
  }
  func.func @transform_4(%arg0: i32, %arg1: i32) -> (i32, i32, i32) {
    %c0_i32 = arith.constant 0 : i32
    %c0_i32_0 = arith.constant 0 : i32
    return %arg0, %c0_i32, %arg1 : i32, i32, i32
  }
  func.func @transform_5(%arg0: i32, %arg1: i32) -> (i32, i32) {
    %c0_i32 = arith.constant 0 : i32
    %c0_i32_0 = arith.constant 0 : i32
    %c0_i32_1 = arith.constant 0 : i32
    return %c0_i32, %c0_i32_0 : i32, i32
  }
  func.func @transform_6(%arg0: i32, %arg1: i32) -> (i32, i32) {
    %c0_i32 = arith.constant 0 : i32
    %c0_i32_0 = arith.constant 0 : i32
    %c0_i32_1 = arith.constant 0 : i32
    return %c0_i32, %c0_i32_0 : i32, i32
  }
  func.func @transform_7(%arg0: i32, %arg1: i32) -> (i32, i32) {
    %c0_i32 = arith.constant 0 : i32
    %c0_i32_0 = arith.constant 0 : i32
    %c0_i32_1 = arith.constant 0 : i32
    return %c0_i32, %c0_i32_0 : i32, i32
  }
  func.func @transform_8(%arg0: i32, %arg1: i32) -> (i32, i32, i32, i32) {
    %c0_i32 = arith.constant 0 : i32
    %c0_i32_0 = arith.constant 0 : i32
    %c0_i32_1 = arith.constant 0 : i32
    return %arg0, %arg1, %c0_i32, %c0_i32_0 : i32, i32, i32, i32
  }
}

</mosaic_0001>

<llo_original>
// kernel: loss_forward.7
$region0: #{loss_forward.7}
  #allocation0 [shape = 'u32[]', space=smem, size = 0x4, offset = 0x4, fixed_abs, tag = 'smem constant byte address 0x4 - core index']
  #allocation1 [shape = 'u32[72,128]{1,0:T(1,128)}', space=vmem, size = 0x9000, scoped, tag = 'internal scratch']
  %s0 = inlined_call_operand.vmem [shape: f32[2,1,256], index: 0, kind: input, shape index: {}]
  %s1 = inlined_call_operand.vmem [shape: f32[2,1,256], index: 1, kind: input, shape index: {}]
  %s2 = inlined_call_operand.vmem [shape: f32[2,1,8,128], index: 2, kind: output, shape index: {}]
  %s3 = sld [smem:[#allocation0]]
  $region41: #{loss_forward.7} parent=0
    _
  %s5 = ssub.s32 1, %s3
  %s6 = scalar_select 0, %s5, %s3
  loop: start=0, step=1, limit=4
  $region2: #{loss_forward.7} parent=0 // loop_pre_header
    _
  $region3: #{loss_forward.7} parent=0 // loop_header
    %s8 = sphi 0, %s12
    %p9 = scmp.ge.s32.totalorder %s8, 4
    %s15 = sphi 0, %s27
    %s16 = sphi 0, %s23
    %s17 = sphi 0, %s15
    %s18 = sphi 0, %s16
    %s19 = sphi 0, %s17
    %s20 = sphi 0, %s18
    %s32 = sphi 0, %s34
    %s35 = sphi 0, %s32
    %s36 = sphi 0, %s35
    %s52 = sphi 0, %s36
    %s60 = sphi 0, %s62
    %s63 = sphi 0, %s60
    %s64 = sphi 0, %s63
    %s80 = sphi 0, %s64
    %s88 = sphi 0, %s90
    %s91 = sphi 0, %s88
    %s92 = sphi 0, %s91
    %s108 = sphi 0, %s92
  $region4: #{loss_forward.7} parent=0 // loop_header_branch
    %11 = sbr.rel (%p9) target = $region8
  $region5: #{loss_forward.7} parent=0 // loop_body
    %s13 = ssub.s32 %s8, 1
    %s14 = ssub.s32 %s8, 2
    %s21 = sadd.s32 1, %s16
    %p22 = scmp.ge.s32.totalorder %s21, 1
    %s23 = scalar_select %p22, 0, %s21
    %s24 = sadd.s32 1, %s15
    %s25 = scalar_select %p22, %s24, %s15
    %p26 = scmp.ge.s32.totalorder %s25, 2
    %s27 = scalar_select %p26, 0, %s25
    %s28 = ssub.s32 %s15, %s27
    %s29 = ssub.s32 %s16, %s23
    %s30 = sor.u32 %s28, %s29
    %p31 = scmp.eq.s32.totalorder %s30, 0
    %s33 = sadd.s32 %s32, 1
    %s34 = scalar_select %p31, %s32, %s33
    %p37 = pneg %p31
    %p38 = scmp.eq.s32.totalorder %s8, 1
    %p39 = por %p37, %p38
    %p40 = scmp.ne.s32.totalorder %s32, %s35
    %p41 = scmp.eq.s32.totalorder %s8, 0
    %p42 = por %p40, %p41
    %p43 = scmp.ne.s32.totalorder %s32, %s35
    %p44 = scmp.eq.s32.totalorder %s13, 1
    %p45 = por %p43, %p44
    %p46 = scmp.ne.s32.totalorder %s35, %s36
    %p47 = scmp.eq.s32.totalorder %s13, 0
    %p48 = por %p46, %p47
    %p49 = scmp.ne.s32.totalorder %s35, %s36
    %p50 = scmp.eq.s32.totalorder %s14, 1
    %p51 = por %p49, %p50
    %p53 = scmp.ne.s32.totalorder %s36, %s52
    %p54 = scmp.eq.s32.totalorder %s14, 0
    %p55 = por %p53, %p54
    %s56 = ssub.s32 %s15, %s27
    %s57 = ssub.s32 %s16, %s23
    %s58 = sor.u32 %s56, %s57
    %p59 = scmp.eq.s32.totalorder %s58, 0
    %s61 = sadd.s32 %s60, 1
    %s62 = scalar_select %p59, %s60, %s61
    %p65 = pneg %p59
    %p66 = scmp.eq.s32.totalorder %s8, 1
    %p67 = por %p65, %p66
    %p68 = scmp.ne.s32.totalorder %s60, %s63
    %p69 = scmp.eq.s32.totalorder %s8, 0
    %p70 = por %p68, %p69
    %p71 = scmp.ne.s32.totalorder %s60, %s63
    %p72 = scmp.eq.s32.totalorder %s13, 1
    %p73 = por %p71, %p72
    %p74 = scmp.ne.s32.totalorder %s63, %s64
    %p75 = scmp.eq.s32.totalorder %s13, 0
    %p76 = por %p74, %p75
    %p77 = scmp.ne.s32.totalorder %s63, %s64
    %p78 = scmp.eq.s32.totalorder %s14, 1
    %p79 = por %p77, %p78
    %p81 = scmp.ne.s32.totalorder %s64, %s80
    %p82 = scmp.eq.s32.totalorder %s14, 0
    %p83 = por %p81, %p82
    %s84 = ssub.s32 %s15, %s27
    %s85 = ssub.s32 %s16, %s23
    %s86 = sor.u32 %s84, %s85
    %p87 = scmp.eq.s32.totalorder %s86, 0
    %s89 = sadd.s32 %s88, 1
    %s90 = scalar_select %p87, %s88, %s89
    %p93 = pneg %p87
    %p94 = scmp.eq.s32.totalorder %s8, 1
    %p95 = por %p93, %p94
    %p96 = scmp.ne.s32.totalorder %s88, %s91
    %p97 = scmp.eq.s32.totalorder %s8, 0
    %p98 = por %p96, %p97
    %p99 = scmp.ne.s32.totalorder %s88, %s91
    %p100 = scmp.eq.s32.totalorder %s13, 1
    %p101 = por %p99, %p100
    %p102 = scmp.ne.s32.totalorder %s91, %s92
    %p103 = scmp.eq.s32.totalorder %s13, 0
    %p104 = por %p102, %p103
    %p105 = scmp.ne.s32.totalorder %s91, %s92
    %p106 = scmp.eq.s32.totalorder %s14, 1
    %p107 = por %p105, %p106
    %p109 = scmp.ne.s32.totalorder %s92, %s108
    %p110 = scmp.eq.s32.totalorder %s14, 0
    %p111 = por %p109, %p110
    %p112 = scmp.le.s32.totalorder 1, %s8
    %p113 = scmp.lt.s32.totalorder %s8, 3
    %p114 = pnand %p112, %p113
    %p115 = pneg %p114
    // Predicated region
    $region9: #{loss_forward.7} parent=5 // pred_check
      _
    $region10: #{loss_forward.7} parent=5 // pred_check_branch
      %117 = sbr.rel (%p114) target = $region12
    $region11: #{loss_forward.7} parent=5 // pred_region
      %s118 = ssub.s32 %s8, 1
    $region12: #{loss_forward.7} parent=5 // pred_fallthru
      _
    %p119 = scmp.lt.s32.totalorder %s8, 2
    // Predicated region
    $region13: #{loss_forward.7} parent=5 // pred_check
      %p120 = pneg %p119
    $region14: #{loss_forward.7} parent=5 // pred_check_branch
      %122 = sbr.rel (%p120) target = $region16
    $region15: #{loss_forward.7} parent=5 // pred_region
      // Predicated region
      $region17: #{loss_forward.7} parent=15 // pred_check
        %p123 = pneg %p42
      $region18: #{loss_forward.7} parent=15 // pred_check_branch
        %125 = sbr.rel (%p123) target = $region20
      $region19: #{loss_forward.7} parent=15 // pred_region
        %s126 = smul.u32 2, %s16
        %p127 = scmp.lt.s32.totalorder %s15, 1
        %s128 = scalar_select %p127, %s15, 1
        %p129 = scmp.lt.s32.totalorder %s126, 1
        %s130 = scalar_select %p129, %s126, 1
        %s131 = smul.addr %s128, 2
        %s132 = sadd.s32 %s130, %s131
        %s133 = scalar_lea.vmem %s0, %s132
        %s134 = smul.u32 2, %s16
      $region20: #{loss_forward.7} parent=15 // pred_fallthru
        _
      // Predicated region
      $region21: #{loss_forward.7} parent=15 // pred_check
        %p135 = pneg %p70
      $region22: #{loss_forward.7} parent=15 // pred_check_branch
        %137 = sbr.rel (%p135) target = $region24
      $region23: #{loss_forward.7} parent=15 // pred_region
        %s138 = smul.u32 2, %s16
        %p139 = scmp.lt.s32.totalorder %s15, 1
        %s140 = scalar_select %p139, %s15, 1
        %p141 = scmp.lt.s32.totalorder %s138, 1
        %s142 = scalar_select %p141, %s138, 1
        %s143 = smul.addr %s140, 2
        %s144 = sadd.s32 %s142, %s143
        %s145 = scalar_lea.vmem %s1, %s144
        %s146 = smul.u32 2, %s16
      $region24: #{loss_forward.7} parent=15 // pred_fallthru
        _
    $region16: #{loss_forward.7} parent=5 // pred_fallthru
      _
    %p147 = scmp.le.s32.totalorder 1, %s8
    %p148 = scmp.lt.s32.totalorder %s8, 3
    %p149 = pnand %p147, %p148
    %p150 = pneg %p149
    // Predicated region
    $region25: #{loss_forward.7} parent=5 // pred_check
      _
    $region26: #{loss_forward.7} parent=5 // pred_check_branch
      %152 = sbr.rel (%p149) target = $region28
    $region27: #{loss_forward.7} parent=5 // pred_region
      %s153 = ssub.s32 %s8, 1
      %s154 = smul.u32 2, %s18
      %p155 = scmp.lt.s32.totalorder %s17, 1
      %s156 = scalar_select %p155, %s17, 1
      %p157 = scmp.lt.s32.totalorder %s154, 1
      %s158 = scalar_select %p157, %s154, 1
      %s159 = smul.addr %s156, 2
      %s160 = sadd.s32 %s158, %s159
      %s161 = scalar_lea.vmem %s0, %s160
      %p162 = pneg %p48
      %p163 = pneg %p45
      %s164 = smul.u32 2, %s18
      %p165 = scmp.lt.s32.totalorder %s17, 1
      %s166 = scalar_select %p165, %s17, 1
      %p167 = scmp.lt.s32.totalorder %s164, 1
      %s168 = scalar_select %p167, %s164, 1
      %s169 = smul.addr %s166, 2
      %s170 = sadd.s32 %s168, %s169
      %s171 = scalar_lea.vmem %s1, %s170
      %p172 = pneg %p76
      %p173 = pneg %p73
      %p174 = pneg %p104
      %p175 = pneg %p101
      %p176 = scmp.lt.s32.totalorder %s17, 1
      %s177 = scalar_select %p176, %s17, 1
      %p178 = scmp.lt.s32.totalorder %s18, 0
      %s179 = scalar_select %p178, %s18, 0
      %s180 = sadd.s32 %s179, %s177
      %s181 = smul.addr %s180, 8
      %s182 = scalar_lea.vmem %s2, %s181
      %s183 = smul.u32 2, %s18
      %p184 = scmp.lt.s32.totalorder %s17, 1
      %s185 = scalar_select %p184, %s17, 1
      %p186 = scmp.lt.s32.totalorder %s183, 1
      %s187 = scalar_select %p186, %s183, 1
      %s188 = smul.addr %s185, 2
      %s189 = sadd.s32 %s187, %s188
      %s190 = scalar_lea.vmem %s0, %s189
      %s191 = smul.u32 2, %s18
      %s192 = smul.u32 2, %s18
      %p193 = scmp.lt.s32.totalorder %s17, 1
      %s194 = scalar_select %p193, %s17, 1
      %p195 = scmp.lt.s32.totalorder %s192, 1
      %s196 = scalar_select %p195, %s192, 1
      %s197 = smul.addr %s194, 2
      %s198 = sadd.s32 %s196, %s197
      %s199 = scalar_lea.vmem %s1, %s198
      %s200 = smul.u32 2, %s18
      %p201 = scmp.lt.s32.totalorder %s17, 1
      %s202 = scalar_select %p201, %s17, 1
      %p203 = scmp.lt.s32.totalorder %s18, 0
      %s204 = scalar_select %p203, %s18, 0
      %s205 = sadd.s32 %s204, %s202
      %s206 = smul.addr %s205, 8
      %s207 = scalar_lea.vmem %s2, %s206
      %v208 = vld [vmem:[%s190] sm:$0x3]
      %v209 = vxor.u32 %v208, 2147483648
      %v210 = vmul.f32 %v209, 1.442695
      %v211 = vpow.pop %v210
      %v212 = vadd.f32 %v211, 1.0
      %v213 = vrcp.pop %v212
      %v214 = vmul.f32 %v212, %v213
      %v215 = vsub.f32 1.0, %v214
      %v216 = vmul.f32 %v213, %v215
      %v217 = vadd.f32 %v213, %v216
      %vm218 = vweird.f32 %v212
      %vm219 = vweird.f32 %v213
      %vm220 = vmor %vm218, %vm219
      %v221 = vsel %vm220, %v213, %v217
      %v222 = vand.u32 2147483647, %v212
      %vm223 = vcmp.eq.f32.partialorder %v222, 8.507059e+37
      %v224 = vand.u32 %v212, 2147483648
      %v225 = vor.u32 1.1754944e-38, %v224
      %v226 = vsel %vm223, %v225, %v221
      %v227 = vmul.f32 1.0, %v226
      %v228 = vld [vmem:[%s199] sm:$0x3]
      %v229 = vsub.f32 1.0, %v228
      %v230 = vlaneseq
      %v231 = vshrl.u32 %v230, 7
      %v232 = vlaneseq
      %v233 = vand.u32 %v232, 127
      %v234 = vmul.f32 %v227, %v229
      %v236 = vperm.slane %v234, 0
      %v237 = vperm.slane %v234, 1
      %vm240 = vcmask 1040384
      %v241 = vsel %vm240, %v236, 0.0
      %v242 = vsel %vm240, %v237, 0.0
      %v243 = vadd.f32 %v241, %v242
      %244 = vadd.xlane.f32.xlu0 %v243
      %v245 = vpop.xlane.xlu0 %244
      %v246 = vrot.slane %v245, 4
      %v247 = vadd.f32 %v245, %v246
      %v248 = vrot.slane %v247, 2
      %v249 = vadd.f32 %v247, %v248
      %v250 = vrot.slane %v249, 1
      %v251 = vadd.f32 %v249, %v250
      %s252 = vtos %v251
      %vm253 = vcmp.eq.s32.totalorder %v231, 0
      %vm254 = vcmp.eq.s32.totalorder %v233, 0
      %vm255 = vmand %vm253, %vm254
      %v256 = vstv %s252
      %v257 = vsel %vm255, %v256, 0.0
      %v258 = vadd.f32 %v257, 0.0
      %v259 = vmul.f32 %v227, %v227
      %v261 = vperm.slane %v259, 0
      %v262 = vperm.slane %v259, 1
      %v265 = vsel %vm240, %v261, 0.0
      %v266 = vsel %vm240, %v262, 0.0
      %v267 = vadd.f32 %v265, %v266
      %268 = vadd.xlane.f32.xlu0 %v267
      %v269 = vpop.xlane.xlu0 %268
      %v270 = vrot.slane %v269, 4
      %v271 = vadd.f32 %v269, %v270
      %v272 = vrot.slane %v271, 2
      %v273 = vadd.f32 %v271, %v272
      %v274 = vrot.slane %v273, 1
      %v275 = vadd.f32 %v273, %v274
      %s276 = vtos %v275
      %vm277 = vcmp.eq.s32.totalorder %v233, 1
      %vm278 = vmand %vm253, %vm277
      %v279 = vstv %s276
      %v280 = vsel %vm278, %v279, 0.0
      %v281 = vadd.f32 %v258, %v280
      %v282 = vmul.f32 %v229, %v229
      %v284 = vperm.slane %v282, 0
      %v285 = vperm.slane %v282, 1
      %v288 = vsel %vm240, %v284, 0.0
      %v289 = vsel %vm240, %v285, 0.0
      %v290 = vadd.f32 %v288, %v289
      %291 = vadd.xlane.f32.xlu0 %v290
      %v292 = vpop.xlane.xlu0 %291
      %v293 = vrot.slane %v292, 4
      %v294 = vadd.f32 %v292, %v293
      %v295 = vrot.slane %v294, 2
      %v296 = vadd.f32 %v294, %v295
      %v297 = vrot.slane %v296, 1
      %v298 = vadd.f32 %v296, %v297
      %s299 = vtos %v298
      %vm300 = vcmp.eq.s32.totalorder %v233, 2
      %vm301 = vmand %vm253, %vm300
      %v302 = vstv %s299
      %v303 = vsel %vm301, %v302, 0.0
      %v304 = vadd.f32 %v281, %v303
      %305 = vst [vmem:[%s207] sm:$0xff] %v304
      %p306 = scmp.lt.s32.totalorder %s17, 1
      %s307 = scalar_select %p306, %s17, 1
      %p308 = scmp.lt.s32.totalorder %s18, 0
      %s309 = scalar_select %p308, %s18, 0
      %s310 = sadd.s32 %s309, %s307
      %s311 = smul.addr %s310, 8
      %s312 = scalar_lea.vmem %s2, %s311
      // Predicated region
      $region29: #{loss_forward.7} parent=27 // pred_check
        %p313 = pneg %p101
      $region30: #{loss_forward.7} parent=27 // pred_check_branch
        %315 = sbr.rel (%p313) target = $region32
      $region31: #{loss_forward.7} parent=27 // pred_region
        _
      $region32: #{loss_forward.7} parent=27 // pred_fallthru
        _
    $region28: #{loss_forward.7} parent=5 // pred_fallthru
      _
    %p316 = scmp.le.s32.totalorder 2, %s8
    // Predicated region
    $region33: #{loss_forward.7} parent=5 // pred_check
      %p317 = pneg %p316
    $region34: #{loss_forward.7} parent=5 // pred_check_branch
      %319 = sbr.rel (%p317) target = $region36
    $region35: #{loss_forward.7} parent=5 // pred_region
      %s320 = ssub.s32 %s8, 2
      // Predicated region
      $region37: #{loss_forward.7} parent=35 // pred_check
        %p321 = pneg %p107
      $region38: #{loss_forward.7} parent=35 // pred_check_branch
        %323 = sbr.rel (%p321) target = $region40
      $region39: #{loss_forward.7} parent=35 // pred_region
        %p324 = scmp.lt.s32.totalorder %s19, 1
        %s325 = scalar_select %p324, %s19, 1
        %p326 = scmp.lt.s32.totalorder %s20, 0
        %s327 = scalar_select %p326, %s20, 0
        %s328 = sadd.s32 %s327, %s325
        %s329 = smul.addr %s328, 8
        %s330 = scalar_lea.vmem %s2, %s329
      $region40: #{loss_forward.7} parent=35 // pred_fallthru
        _
    $region36: #{loss_forward.7} parent=5 // pred_fallthru
      _
  $region6: #{loss_forward.7} parent=0 // loop_footer
    %s12 = sadd.s32 1, %s8
  $region7: #{loss_forward.7} parent=0 // loop_footer_branch
    %7 = sbr.rel target = $region3
  $region8: #{loss_forward.7} parent=0 // loop_exit
    _

// kernel: loss_forward.4
$region0: #{loss_forward.4}
  #allocation0 [shape = 'u32[]', space=smem, size = 0x4, offset = 0x4, fixed_abs, tag = 'smem constant byte address 0x4 - core index']
  #allocation1 [shape = 'u32[72,128]{1,0:T(1,128)}', space=vmem, size = 0x9000, scoped, tag = 'internal scratch']
  #allocation2 [shape = 'f32[3,16,16]{2,1,0:T(8,128)}', space=vmem, size = 0x6000, scoped, tag = 'scratch operand']
  %s0 = inlined_call_operand.vmem [shape: f32[2,1,256], index: 0, kind: input, shape index: {}]
  %s1 = inlined_call_operand.vmem [shape: f32[2,3,256], index: 1, kind: input, shape index: {}]
  %s2 = inlined_call_operand.vmem [shape: f32[2,3,256], index: 2, kind: input, shape index: {}]
  %s3 = inlined_call_operand.vmem [shape: f32[2,3,256], index: 3, kind: input, shape index: {}]
  %s4 = inlined_call_operand.vmem [shape: f32[2,3,256], index: 4, kind: input, shape index: {}]
  %s5 = inlined_call_operand.vmem [shape: f32[16,3], index: 5, kind: input, shape index: {}]
  %s6 = inlined_call_operand.vmem [shape: f32[8,3], index: 6, kind: input, shape index: {}]
  %s7 = inlined_call_operand.vmem [shape: f32[2,1,8,128], index: 7, kind: output, shape index: {}]
  %s8 = sld [smem:[#allocation0]]
  $region69: #{loss_forward.4} parent=0
    _
  %s10 = ssub.s32 1, %s8
  %s11 = scalar_select 0, %s10, %s8
  loop: start=0, step=1, limit=4
  $region2: #{loss_forward.4} parent=0 // loop_pre_header
    _
  $region3: #{loss_forward.4} parent=0 // loop_header
    %s13 = sphi 0, %s17
    %p14 = scmp.ge.s32.totalorder %s13, 4
    %s20 = sphi 0, %s32
    %s21 = sphi 0, %s28
    %s22 = sphi 0, %s20
    %s23 = sphi 0, %s21
    %s24 = sphi 0, %s22
    %s25 = sphi 0, %s23
    %s37 = sphi 0, %s39
    %s40 = sphi 0, %s37
    %s41 = sphi 0, %s40
    %s57 = sphi 0, %s41
    %s65 = sphi 0, %s67
    %s68 = sphi 0, %s65
    %s69 = sphi 0, %s68
    %s85 = sphi 0, %s69
    %s93 = sphi 0, %s95
    %s96 = sphi 0, %s93
    %s97 = sphi 0, %s96
    %s113 = sphi 0, %s97
    %s121 = sphi 0, %s123
    %s124 = sphi 0, %s121
    %s125 = sphi 0, %s124
    %s141 = sphi 0, %s125
    %s149 = sphi 0, %s151
    %s152 = sphi 0, %s149
    %s153 = sphi 0, %s152
    %s169 = sphi 0, %s153
    %s173 = sphi 0, %s173
    %s175 = sphi 0, %s173
    %s176 = sphi 0, %s175
    %s190 = sphi 0, %s176
    %s194 = sphi 0, %s194
    %s196 = sphi 0, %s194
    %s197 = sphi 0, %s196
    %s211 = sphi 0, %s197
    %s219 = sphi 0, %s221
    %s222 = sphi 0, %s219
    %s223 = sphi 0, %s222
    %s239 = sphi 0, %s223
  $region4: #{loss_forward.4} parent=0 // loop_header_branch
    %16 = sbr.rel (%p14) target = $region8
  $region5: #{loss_forward.4} parent=0 // loop_body
    %s18 = ssub.s32 %s13, 1
    %s19 = ssub.s32 %s13, 2
    %s26 = sadd.s32 1, %s21
    %p27 = scmp.ge.s32.totalorder %s26, 1
    %s28 = scalar_select %p27, 0, %s26
    %s29 = sadd.s32 1, %s20
    %s30 = scalar_select %p27, %s29, %s20
    %p31 = scmp.ge.s32.totalorder %s30, 2
    %s32 = scalar_select %p31, 0, %s30
    %s33 = ssub.s32 %s20, %s32
    %s34 = ssub.s32 %s21, %s28
    %s35 = sor.u32 %s33, %s34
    %p36 = scmp.eq.s32.totalorder %s35, 0
    %s38 = sadd.s32 %s37, 1
    %s39 = scalar_select %p36, %s37, %s38
    %p42 = pneg %p36
    %p43 = scmp.eq.s32.totalorder %s13, 1
    %p44 = por %p42, %p43
    %p45 = scmp.ne.s32.totalorder %s37, %s40
    %p46 = scmp.eq.s32.totalorder %s13, 0
    %p47 = por %p45, %p46
    %p48 = scmp.ne.s32.totalorder %s37, %s40
    %p49 = scmp.eq.s32.totalorder %s18, 1
    %p50 = por %p48, %p49
    %p51 = scmp.ne.s32.totalorder %s40, %s41
    %p52 = scmp.eq.s32.totalorder %s18, 0
    %p53 = por %p51, %p52
    %p54 = scmp.ne.s32.totalorder %s40, %s41
    %p55 = scmp.eq.s32.totalorder %s19, 1
    %p56 = por %p54, %p55
    %p58 = scmp.ne.s32.totalorder %s41, %s57
    %p59 = scmp.eq.s32.totalorder %s19, 0
    %p60 = por %p58, %p59
    %s61 = ssub.s32 %s20, %s32
    %s62 = ssub.s32 %s21, %s28
    %s63 = sor.u32 %s61, %s62
    %p64 = scmp.eq.s32.totalorder %s63, 0
    %s66 = sadd.s32 %s65, 1
    %s67 = scalar_select %p64, %s65, %s66
    %p70 = pneg %p64
    %p71 = scmp.eq.s32.totalorder %s13, 1
    %p72 = por %p70, %p71
    %p73 = scmp.ne.s32.totalorder %s65, %s68
    %p74 = scmp.eq.s32.totalorder %s13, 0
    %p75 = por %p73, %p74
    %p76 = scmp.ne.s32.totalorder %s65, %s68
    %p77 = scmp.eq.s32.totalorder %s18, 1
    %p78 = por %p76, %p77
    %p79 = scmp.ne.s32.totalorder %s68, %s69
    %p80 = scmp.eq.s32.totalorder %s18, 0
    %p81 = por %p79, %p80
    %p82 = scmp.ne.s32.totalorder %s68, %s69
    %p83 = scmp.eq.s32.totalorder %s19, 1
    %p84 = por %p82, %p83
    %p86 = scmp.ne.s32.totalorder %s69, %s85
    %p87 = scmp.eq.s32.totalorder %s19, 0
    %p88 = por %p86, %p87
    %s89 = ssub.s32 %s20, %s32
    %s90 = ssub.s32 %s21, %s28
    %s91 = sor.u32 %s89, %s90
    %p92 = scmp.eq.s32.totalorder %s91, 0
    %s94 = sadd.s32 %s93, 1
    %s95 = scalar_select %p92, %s93, %s94
    %p98 = pneg %p92
    %p99 = scmp.eq.s32.totalorder %s13, 1
    %p100 = por %p98, %p99
    %p101 = scmp.ne.s32.totalorder %s93, %s96
    %p102 = scmp.eq.s32.totalorder %s13, 0
    %p103 = por %p101, %p102
    %p104 = scmp.ne.s32.totalorder %s93, %s96
    %p105 = scmp.eq.s32.totalorder %s18, 1
    %p106 = por %p104, %p105
    %p107 = scmp.ne.s32.totalorder %s96, %s97
    %p108 = scmp.eq.s32.totalorder %s18, 0
    %p109 = por %p107, %p108
    %p110 = scmp.ne.s32.totalorder %s96, %s97
    %p111 = scmp.eq.s32.totalorder %s19, 1
    %p112 = por %p110, %p111
    %p114 = scmp.ne.s32.totalorder %s97, %s113
    %p115 = scmp.eq.s32.totalorder %s19, 0
    %p116 = por %p114, %p115
    %s117 = ssub.s32 %s20, %s32
    %s118 = ssub.s32 %s21, %s28
    %s119 = sor.u32 %s117, %s118
    %p120 = scmp.eq.s32.totalorder %s119, 0
    %s122 = sadd.s32 %s121, 1
    %s123 = scalar_select %p120, %s121, %s122
    %p126 = pneg %p120
    %p127 = scmp.eq.s32.totalorder %s13, 1
    %p128 = por %p126, %p127
    %p129 = scmp.ne.s32.totalorder %s121, %s124
    %p130 = scmp.eq.s32.totalorder %s13, 0
    %p131 = por %p129, %p130
    %p132 = scmp.ne.s32.totalorder %s121, %s124
    %p133 = scmp.eq.s32.totalorder %s18, 1
    %p134 = por %p132, %p133
    %p135 = scmp.ne.s32.totalorder %s124, %s125
    %p136 = scmp.eq.s32.totalorder %s18, 0
    %p137 = por %p135, %p136
    %p138 = scmp.ne.s32.totalorder %s124, %s125
    %p139 = scmp.eq.s32.totalorder %s19, 1
    %p140 = por %p138, %p139
    %p142 = scmp.ne.s32.totalorder %s125, %s141
    %p143 = scmp.eq.s32.totalorder %s19, 0
    %p144 = por %p142, %p143
    %s145 = ssub.s32 %s20, %s32
    %s146 = ssub.s32 %s21, %s28
    %s147 = sor.u32 %s145, %s146
    %p148 = scmp.eq.s32.totalorder %s147, 0
    %s150 = sadd.s32 %s149, 1
    %s151 = scalar_select %p148, %s149, %s150
    %p154 = pneg %p148
    %p155 = scmp.eq.s32.totalorder %s13, 1
    %p156 = por %p154, %p155
    %p157 = scmp.ne.s32.totalorder %s149, %s152
    %p158 = scmp.eq.s32.totalorder %s13, 0
    %p159 = por %p157, %p158
    %p160 = scmp.ne.s32.totalorder %s149, %s152
    %p161 = scmp.eq.s32.totalorder %s18, 1
    %p162 = por %p160, %p161
    %p163 = scmp.ne.s32.totalorder %s152, %s153
    %p164 = scmp.eq.s32.totalorder %s18, 0
    %p165 = por %p163, %p164
    %p166 = scmp.ne.s32.totalorder %s152, %s153
    %p167 = scmp.eq.s32.totalorder %s19, 1
    %p168 = por %p166, %p167
    %p170 = scmp.ne.s32.totalorder %s153, %s169
    %p171 = scmp.eq.s32.totalorder %s19, 0
    %p172 = por %p170, %p171
    %s174 = sadd.s32 %s173, 1
    %p177 = scmp.eq.s32.totalorder %s13, 1
    %p178 = scmp.ne.s32.totalorder %s173, %s175
    %p179 = scmp.eq.s32.totalorder %s13, 0
    %p180 = por %p178, %p179
    %p181 = scmp.ne.s32.totalorder %s173, %s175
    %p182 = scmp.eq.s32.totalorder %s18, 1
    %p183 = por %p181, %p182
    %p184 = scmp.ne.s32.totalorder %s175, %s176
    %p185 = scmp.eq.s32.totalorder %s18, 0
    %p186 = por %p184, %p185
    %p187 = scmp.ne.s32.totalorder %s175, %s176
    %p188 = scmp.eq.s32.totalorder %s19, 1
    %p189 = por %p187, %p188
    %p191 = scmp.ne.s32.totalorder %s176, %s190
    %p192 = scmp.eq.s32.totalorder %s19, 0
    %p193 = por %p191, %p192
    %s195 = sadd.s32 %s194, 1
    %p198 = scmp.eq.s32.totalorder %s13, 1
    %p199 = scmp.ne.s32.totalorder %s194, %s196
    %p200 = scmp.eq.s32.totalorder %s13, 0
    %p201 = por %p199, %p200
    %p202 = scmp.ne.s32.totalorder %s194, %s196
    %p203 = scmp.eq.s32.totalorder %s18, 1
    %p204 = por %p202, %p203
    %p205 = scmp.ne.s32.totalorder %s196, %s197
    %p206 = scmp.eq.s32.totalorder %s18, 0
    %p207 = por %p205, %p206
    %p208 = scmp.ne.s32.totalorder %s196, %s197
    %p209 = scmp.eq.s32.totalorder %s19, 1
    %p210 = por %p208, %p209
    %p212 = scmp.ne.s32.totalorder %s197, %s211
    %p213 = scmp.eq.s32.totalorder %s19, 0
    %p214 = por %p212, %p213
    %s215 = ssub.s32 %s20, %s32
    %s216 = ssub.s32 %s21, %s28
    %s217 = sor.u32 %s215, %s216
    %p218 = scmp.eq.s32.totalorder %s217, 0
    %s220 = sadd.s32 %s219, 1
    %s221 = scalar_select %p218, %s219, %s220
    %p224 = pneg %p218
    %p225 = scmp.eq.s32.totalorder %s13, 1
    %p226 = por %p224, %p225
    %p227 = scmp.ne.s32.totalorder %s219, %s222
    %p228 = scmp.eq.s32.totalorder %s13, 0
    %p229 = por %p227, %p228
    %p230 = scmp.ne.s32.totalorder %s219, %s222
    %p231 = scmp.eq.s32.totalorder %s18, 1
    %p232 = por %p230, %p231
    %p233 = scmp.ne.s32.totalorder %s222, %s223
    %p234 = scmp.eq.s32.totalorder %s18, 0
    %p235 = por %p233, %p234
    %p236 = scmp.ne.s32.totalorder %s222, %s223
    %p237 = scmp.eq.s32.totalorder %s19, 1
    %p238 = por %p236, %p237
    %p240 = scmp.ne.s32.totalorder %s223, %s239
    %p241 = scmp.eq.s32.totalorder %s19, 0
    %p242 = por %p240, %p241
    %p243 = scmp.le.s32.totalorder 1, %s13
    %p244 = scmp.lt.s32.totalorder %s13, 3
    %p245 = pnand %p243, %p244
    %p246 = pneg %p245
    // Predicated region
    $region9: #{loss_forward.4} parent=5 // pred_check
      _
    $region10: #{loss_forward.4} parent=5 // pred_check_branch
      %248 = sbr.rel (%p245) target = $region12
    $region11: #{loss_forward.4} parent=5 // pred_region
      %s249 = ssub.s32 %s13, 1
      // Predicated region
      $region13: #{loss_forward.4} parent=11 // pred_check
        %p250 = pneg %p186
      $region14: #{loss_forward.4} parent=11 // pred_check_branch
        %252 = sbr.rel (%p250) target = $region16
      $region15: #{loss_forward.4} parent=11 // pred_region
        _
      $region16: #{loss_forward.4} parent=11 // pred_fallthru
        _
      // Predicated region
      $region17: #{loss_forward.4} parent=11 // pred_check
        %p253 = pneg %p207
      $region18: #{loss_forward.4} parent=11 // pred_check_branch
        %255 = sbr.rel (%p253) target = $region20
      $region19: #{loss_forward.4} parent=11 // pred_region
        _
      $region20: #{loss_forward.4} parent=11 // pred_fallthru
        _
    $region12: #{loss_forward.4} parent=5 // pred_fallthru
      _
    %p256 = scmp.lt.s32.totalorder %s13, 2
    // Predicated region
    $region21: #{loss_forward.4} parent=5 // pred_check
      %p257 = pneg %p256
    $region22: #{loss_forward.4} parent=5 // pred_check_branch
      %259 = sbr.rel (%p257) target = $region24
    $region23: #{loss_forward.4} parent=5 // pred_region
      // Predicated region
      $region25: #{loss_forward.4} parent=23 // pred_check
        %p260 = pneg %p47
      $region26: #{loss_forward.4} parent=23 // pred_check_branch
        %262 = sbr.rel (%p260) target = $region28
      $region27: #{loss_forward.4} parent=23 // pred_region
        %s263 = smul.u32 2, %s21
        %p264 = scmp.lt.s32.totalorder %s20, 1
        %s265 = scalar_select %p264, %s20, 1
        %p266 = scmp.lt.s32.totalorder %s263, 1
        %s267 = scalar_select %p266, %s263, 1
        %s268 = smul.addr %s265, 2
        %s269 = sadd.s32 %s267, %s268
        %s270 = scalar_lea.vmem %s0, %s269
        %s271 = smul.u32 2, %s21
      $region28: #{loss_forward.4} parent=23 // pred_fallthru
        _
      // Predicated region
      $region29: #{loss_forward.4} parent=23 // pred_check
        %p272 = pneg %p75
      $region30: #{loss_forward.4} parent=23 // pred_check_branch
        %274 = sbr.rel (%p272) target = $region32
      $region31: #{loss_forward.4} parent=23 // pred_region
        %s275 = smul.u32 2, %s21
        %p276 = scmp.lt.s32.totalorder %s20, 1
        %s277 = scalar_select %p276, %s20, 1
        %p278 = scmp.lt.s32.totalorder %s275, 1
        %s279 = scalar_select %p278, %s275, 1
        %s280 = smul.addr %s277, 2
        %s281 = sadd.s32 %s279, %s280
        %s282 = smul.addr %s281, 4
        %s283 = scalar_lea.vmem %s1, %s282
        %s284 = smul.u32 2, %s21
      $region32: #{loss_forward.4} parent=23 // pred_fallthru
        _
      // Predicated region
      $region33: #{loss_forward.4} parent=23 // pred_check
        %p285 = pneg %p103
      $region34: #{loss_forward.4} parent=23 // pred_check_branch
        %287 = sbr.rel (%p285) target = $region36
      $region35: #{loss_forward.4} parent=23 // pred_region
        %s288 = smul.u32 2, %s21
        %p289 = scmp.lt.s32.totalorder %s20, 1
        %s290 = scalar_select %p289, %s20, 1
        %p291 = scmp.lt.s32.totalorder %s288, 1
        %s292 = scalar_select %p291, %s288, 1
        %s293 = smul.addr %s290, 2
        %s294 = sadd.s32 %s292, %s293
        %s295 = smul.addr %s294, 4
        %s296 = scalar_lea.vmem %s2, %s295
        %s297 = smul.u32 2, %s21
      $region36: #{loss_forward.4} parent=23 // pred_fallthru
        _
      // Predicated region
      $region37: #{loss_forward.4} parent=23 // pred_check
        %p298 = pneg %p131
      $region38: #{loss_forward.4} parent=23 // pred_check_branch
        %300 = sbr.rel (%p298) target = $region40
      $region39: #{loss_forward.4} parent=23 // pred_region
        %s301 = smul.u32 2, %s21
        %p302 = scmp.lt.s32.totalorder %s20, 1
        %s303 = scalar_select %p302, %s20, 1
        %p304 = scmp.lt.s32.totalorder %s301, 1
        %s305 = scalar_select %p304, %s301, 1
        %s306 = smul.addr %s303, 2
        %s307 = sadd.s32 %s305, %s306
        %s308 = smul.addr %s307, 4
        %s309 = scalar_lea.vmem %s3, %s308
        %s310 = smul.u32 2, %s21
      $region40: #{loss_forward.4} parent=23 // pred_fallthru
        _
      // Predicated region
      $region41: #{loss_forward.4} parent=23 // pred_check
        %p311 = pneg %p159
      $region42: #{loss_forward.4} parent=23 // pred_check_branch
        %313 = sbr.rel (%p311) target = $region44
      $region43: #{loss_forward.4} parent=23 // pred_region
        %s314 = smul.u32 2, %s21
        %p315 = scmp.lt.s32.totalorder %s20, 1
        %s316 = scalar_select %p315, %s20, 1
        %p317 = scmp.lt.s32.totalorder %s314, 1
        %s318 = scalar_select %p317, %s314, 1
        %s319 = smul.addr %s316, 2
        %s320 = sadd.s32 %s318, %s319
        %s321 = smul.addr %s320, 4
        %s322 = scalar_lea.vmem %s4, %s321
        %s323 = smul.u32 2, %s21
      $region44: #{loss_forward.4} parent=23 // pred_fallthru
        _
    $region24: #{loss_forward.4} parent=5 // pred_fallthru
      _
    %p324 = scmp.le.s32.totalorder 1, %s13
    %p325 = scmp.lt.s32.totalorder %s13, 3
    %p326 = pnand %p324, %p325
    %p327 = pneg %p326
    // Predicated region
    $region45: #{loss_forward.4} parent=5 // pred_check
      _
    $region46: #{loss_forward.4} parent=5 // pred_check_branch
      %329 = sbr.rel (%p326) target = $region48
    $region47: #{loss_forward.4} parent=5 // pred_region
      %s330 = ssub.s32 %s13, 1
      %s331 = smul.u32 2, %s23
      %p332 = scmp.lt.s32.totalorder %s22, 1
      %s333 = scalar_select %p332, %s22, 1
      %p334 = scmp.lt.s32.totalorder %s331, 1
      %s335 = scalar_select %p334, %s331, 1
      %s336 = smul.addr %s333, 2
      %s337 = sadd.s32 %s335, %s336
      %s338 = scalar_lea.vmem %s0, %s337
      %p339 = pneg %p53
      %p340 = pneg %p50
      %s341 = smul.u32 2, %s23
      %p342 = scmp.lt.s32.totalorder %s22, 1
      %s343 = scalar_select %p342, %s22, 1
      %p344 = scmp.lt.s32.totalorder %s341, 1
      %s345 = scalar_select %p344, %s341, 1
      %s346 = smul.addr %s343, 2
      %s347 = sadd.s32 %s345, %s346
      %s348 = smul.addr %s347, 4
      %s349 = scalar_lea.vmem %s1, %s348
      %p350 = pneg %p81
      %p351 = pneg %p78
      %s352 = smul.u32 2, %s23
      %p353 = scmp.lt.s32.totalorder %s22, 1
      %s354 = scalar_select %p353, %s22, 1
      %p355 = scmp.lt.s32.totalorder %s352, 1
      %s356 = scalar_select %p355, %s352, 1
      %s357 = smul.addr %s354, 2
      %s358 = sadd.s32 %s356, %s357
      %s359 = smul.addr %s358, 4
      %s360 = scalar_lea.vmem %s2, %s359
      %p361 = pneg %p109
      %p362 = pneg %p106
      %s363 = smul.u32 2, %s23
      %p364 = scmp.lt.s32.totalorder %s22, 1
      %s365 = scalar_select %p364, %s22, 1
      %p366 = scmp.lt.s32.totalorder %s363, 1
      %s367 = scalar_select %p366, %s363, 1
      %s368 = smul.addr %s365, 2
      %s369 = sadd.s32 %s367, %s368
      %s370 = smul.addr %s369, 4
      %s371 = scalar_lea.vmem %s3, %s370
      %p372 = pneg %p137
      %p373 = pneg %p134
      %s374 = smul.u32 2, %s23
      %p375 = scmp.lt.s32.totalorder %s22, 1
      %s376 = scalar_select %p375, %s22, 1
      %p377 = scmp.lt.s32.totalorder %s374, 1
      %s378 = scalar_select %p377, %s374, 1
      %s379 = smul.addr %s376, 2
      %s380 = sadd.s32 %s378, %s379
      %s381 = smul.addr %s380, 4
      %s382 = scalar_lea.vmem %s4, %s381
      %p383 = pneg %p165
      %p384 = pneg %p162
      %p385 = pneg %p186
      %p386 = pneg %p183
      %p387 = pneg %p207
      %p388 = pneg %p204
      %p389 = pneg %p235
      %p390 = pneg %p232
      %p391 = scmp.lt.s32.totalorder %s22, 1
      %s392 = scalar_select %p391, %s22, 1
      %p393 = scmp.lt.s32.totalorder %s23, 0
      %s394 = scalar_select %p393, %s23, 0
      %s395 = sadd.s32 %s394, %s392
      %s396 = smul.addr %s395, 8
      %s397 = scalar_lea.vmem %s7, %s396
      %s398 = smul.u32 2, %s23
      %p399 = scmp.lt.s32.totalorder %s22, 1
      %s400 = scalar_select %p399, %s22, 1
      %p401 = scmp.lt.s32.totalorder %s398, 1
      %s402 = scalar_select %p401, %s398, 1
      %s403 = smul.addr %s400, 2
      %s404 = sadd.s32 %s402, %s403
      %s405 = scalar_lea.vmem %s0, %s404
      %s406 = smul.u32 2, %s23
      %s407 = smul.u32 2, %s23
      %p408 = scmp.lt.s32.totalorder %s22, 1
      %s409 = scalar_select %p408, %s22, 1
      %p410 = scmp.lt.s32.totalorder %s407, 1
      %s411 = scalar_select %p410, %s407, 1
      %s412 = smul.addr %s409, 2
      %s413 = sadd.s32 %s411, %s412
      %s414 = smul.addr %s413, 4
      %s415 = scalar_lea.vmem %s1, %s414
      %s416 = smul.u32 2, %s23
      %s417 = smul.u32 2, %s23
      %p418 = scmp.lt.s32.totalorder %s22, 1
      %s419 = scalar_select %p418, %s22, 1
      %p420 = scmp.lt.s32.totalorder %s417, 1
      %s421 = scalar_select %p420, %s417, 1
      %s422 = smul.addr %s419, 2
      %s423 = sadd.s32 %s421, %s422
      %s424 = smul.addr %s423, 4
      %s425 = scalar_lea.vmem %s2, %s424
      %s426 = smul.u32 2, %s23
      %s427 = smul.u32 2, %s23
      %p428 = scmp.lt.s32.totalorder %s22, 1
      %s429 = scalar_select %p428, %s22, 1
      %p430 = scmp.lt.s32.totalorder %s427, 1
      %s431 = scalar_select %p430, %s427, 1
      %s432 = smul.addr %s429, 2
      %s433 = sadd.s32 %s431, %s432
      %s434 = smul.addr %s433, 4
      %s435 = scalar_lea.vmem %s3, %s434
      %s436 = smul.u32 2, %s23
      %s437 = smul.u32 2, %s23
      %p438 = scmp.lt.s32.totalorder %s22, 1
      %s439 = scalar_select %p438, %s22, 1
      %p440 = scmp.lt.s32.totalorder %s437, 1
      %s441 = scalar_select %p440, %s437, 1
      %s442 = smul.addr %s439, 2
      %s443 = sadd.s32 %s441, %s442
      %s444 = smul.addr %s443, 4
      %s445 = scalar_lea.vmem %s4, %s444
      %s446 = smul.u32 2, %s23
      %p447 = scmp.lt.s32.totalorder %s22, 1
      %s448 = scalar_select %p447, %s22, 1
      %p449 = scmp.lt.s32.totalorder %s23, 0
      %s450 = scalar_select %p449, %s23, 0
      %s451 = sadd.s32 %s450, %s448
      %s452 = smul.addr %s451, 8
      %s453 = scalar_lea.vmem %s7, %s452
      %v454 = vld [vmem:[%s405] sm:$0x3]
      %v455 = vld [vmem:[%s415] sm:$0x77]
      %v456 = vld [vmem:[%s425] sm:$0x77]
      %v457 = vld [vmem:[%s435] sm:$0x77]
      %v458 = vld [vmem:[%s445] sm:$0x77]
      %v459 = vsub.f32 %v458, %v457
      %v460 = vand.u32 2147483647, %v459
      %462 = vst [vmem:[#allocation1] ss:$2 sm:$0xff] %v460
      %v463 = vld.sshfl [vmem:[#allocation1] sm:$0xff pattern:$0x75316420]
      %v464 = vld.sshfl [vmem:[#allocation1 + $0x8] sm:$0xff pattern:$0x75316420]
      %vm467 = vcmask 1042432
      %v468 = vsel %vm467, %v463, 0.0
      %v469 = vsel %vm467, %v464, 0.0
      %v470 = vadd.f32 %v468, %v469
      %471 = vadd.xlane.f32.xlu0 %v470
      %v472 = vpop.xlane.xlu0 %471
      %v473 = vrot.slane %v472, 4
      %v474 = vadd.f32 %v472, %v473
      %v475 = vrot.slane %v474, 2
      %v476 = vadd.f32 %v474, %v475
      %v477 = vrot.slane %v476, 1
      %v478 = vadd.f32 %v476, %v477
      %s479 = vtos %v478
      %v481 = vperm.slane %v454, 0
      %v482 = vperm.slane %v454, 1
      %485 = vst [vmem:[#allocation1] ss:$2 sm:$0xff] %v460
      %v486 = vld.sshfl [vmem:[#allocation1] sm:$0xff pattern:$0x75316420]
      %v487 = vld.sshfl [vmem:[#allocation1 + $0x8] sm:$0xff pattern:$0x75316420]
      %v490 = vmul.f32 %v481, %v486
      %v491 = vmul.f32 %v482, %v487
      %v492 = vsel %vm467, %v490, 0.0
      %v493 = vsel %vm467, %v491, 0.0
      %v494 = vadd.f32 %v492, %v493
      %495 = vadd.xlane.f32.xlu0 %v494
      %v496 = vpop.xlane.xlu0 %495
      %v497 = vrot.slane %v496, 4
      %v498 = vadd.f32 %v496, %v497
      %v499 = vrot.slane %v498, 2
      %v500 = vadd.f32 %v498, %v499
      %v501 = vrot.slane %v500, 1
      %v502 = vadd.f32 %v500, %v501
      %s503 = vtos %v502
      %505 = vst [vmem:[#allocation1] ss:$2 sm:$0xff] %v455
      %v506 = vld.sshfl [vmem:[#allocation1] sm:$0xff pattern:$0x75316420]
      %v507 = vld.sshfl [vmem:[#allocation1 + $0x8] sm:$0xff pattern:$0x75316420]
      %v510 = vmul.f32 %v481, %v506
      %v511 = vmul.f32 %v482, %v507
      %v512 = vsub.f32 1.0, %v454
      %v514 = vperm.slane %v512, 0
      %v515 = vperm.slane %v512, 1
      %519 = vst [vmem:[#allocation1] ss:$2 sm:$0xff] %v456
      %v520 = vld.sshfl [vmem:[#allocation1] sm:$0xff pattern:$0x75316420]
      %v521 = vld.sshfl [vmem:[#allocation1 + $0x8] sm:$0xff pattern:$0x75316420]
      %v524 = vmul.f32 %v514, %v520
      %v525 = vmul.f32 %v515, %v521
      %v526 = vadd.f32 %v510, %v524
      %v527 = vadd.f32 %v511, %v525
      %v528 = vld [vmem:[%s5] sm:$0xff]
      %v529 = vld [vmem:[%s5 + $0x8] sm:$0xff]
      %531 = vset.pattern.permute.xlu0 0
      %532 = vperm.xlu0 %531, %v528
      %v533 = vpop.permute.xlu0 %532
      %536 = vset.pattern.permute.xlu0 0
      %537 = vperm.xlu0 %536, %v529
      %v538 = vpop.permute.xlu0 %537
      %v540 = vperm.slane %v526, 0
      %v541 = vperm.slane %v527, 0
      %v542 = vmul.f32 %v533, %v540
      %v543 = vmul.f32 %v533, %v541
      %v544 = vmul.f32 %v538, %v540
      %v545 = vmul.f32 %v538, %v541
      %546 = vset.pattern.permute.xlu0 1
      %547 = vperm.xlu0 %546, %v528
      %v548 = vpop.permute.xlu0 %547
      %550 = vset.pattern.permute.xlu0 1
      %551 = vperm.xlu0 %550, %v529
      %v552 = vpop.permute.xlu0 %551
      %v554 = vperm.slane %v526, 1
      %v555 = vperm.slane %v527, 1
      %v556 = vmul.f32 %v548, %v554
      %v557 = vmul.f32 %v548, %v555
      %v558 = vmul.f32 %v552, %v554
      %v559 = vmul.f32 %v552, %v555
      %v560 = vadd.f32 %v542, %v556
      %v561 = vadd.f32 %v543, %v557
      %v562 = vadd.f32 %v544, %v558
      %v563 = vadd.f32 %v545, %v559
      %564 = vset.pattern.permute.xlu0 2
      %565 = vperm.xlu0 %564, %v528
      %v566 = vpop.permute.xlu0 %565
      %568 = vset.pattern.permute.xlu0 2
      %569 = vperm.xlu0 %568, %v529
      %v570 = vpop.permute.xlu0 %569
      %v572 = vperm.slane %v526, 2
      %v573 = vperm.slane %v527, 2
      %v574 = vmul.f32 %v566, %v572
      %v575 = vmul.f32 %v566, %v573
      %v576 = vmul.f32 %v570, %v572
      %v577 = vmul.f32 %v570, %v573
      %v578 = vadd.f32 %v560, %v574
      %v579 = vadd.f32 %v561, %v575
      %v580 = vadd.f32 %v562, %v576
      %v581 = vadd.f32 %v563, %v577
      %v582 = vmax.f32 %v578, 0.0
      %v583 = vmax.f32 %v579, 0.0
      %v584 = vmax.f32 %v580, 0.0
      %v585 = vmax.f32 %v581, 0.0
      %v586 = vperm.slane %v456, 0
      %v587 = vperm.slane %v456, 4
      %v590 = vperm.slane %v586, 0
      %v591 = vperm.slane %v587, 0
      %v592 = vmul.f32 %v533, %v590
      %v593 = vmul.f32 %v533, %v591
      %v594 = vmul.f32 %v538, %v590
      %v595 = vmul.f32 %v538, %v591
      %v596 = vperm.slane %v456, 1
      %v597 = vperm.slane %v456, 5
      %v600 = vperm.slane %v596, 1
      %v601 = vperm.slane %v597, 1
      %v602 = vmul.f32 %v548, %v600
      %v603 = vmul.f32 %v548, %v601
      %v604 = vmul.f32 %v552, %v600
      %v605 = vmul.f32 %v552, %v601
      %v606 = vadd.f32 %v592, %v602
      %v607 = vadd.f32 %v593, %v603
      %v608 = vadd.f32 %v594, %v604
      %v609 = vadd.f32 %v595, %v605
      %v610 = vperm.slane %v456, 2
      %v611 = vperm.slane %v456, 6
      %v614 = vperm.slane %v610, 2
      %v615 = vperm.slane %v611, 2
      %v616 = vmul.f32 %v566, %v614
      %v617 = vmul.f32 %v566, %v615
      %v618 = vmul.f32 %v570, %v614
      %v619 = vmul.f32 %v570, %v615
      %v620 = vadd.f32 %v606, %v616
      %v621 = vadd.f32 %v607, %v617
      %v622 = vadd.f32 %v608, %v618
      %v623 = vadd.f32 %v609, %v619
      %v624 = vmax.f32 %v620, 0.0
      %v625 = vmax.f32 %v621, 0.0
      %v626 = vmax.f32 %v622, 0.0
      %v627 = vmax.f32 %v623, 0.0
      %v629 = vperm.slane %v457, 0
      %v630 = vperm.slane %v457, 4
      %v633 = vperm.slane %v629, 0
      %v634 = vperm.slane %v630, 0
      %v635 = vmul.f32 %v533, %v633
      %v636 = vmul.f32 %v533, %v634
      %v637 = vmul.f32 %v538, %v633
      %v638 = vmul.f32 %v538, %v634
      %v639 = vperm.slane %v457, 1
      %v640 = vperm.slane %v457, 5
      %v643 = vperm.slane %v639, 1
      %v644 = vperm.slane %v640, 1
      %v645 = vmul.f32 %v548, %v643
      %v646 = vmul.f32 %v548, %v644
      %v647 = vmul.f32 %v552, %v643
      %v648 = vmul.f32 %v552, %v644
      %v649 = vadd.f32 %v635, %v645
      %v650 = vadd.f32 %v636, %v646
      %v651 = vadd.f32 %v637, %v647
      %v652 = vadd.f32 %v638, %v648
      %v653 = vperm.slane %v457, 2
      %v654 = vperm.slane %v457, 6
      %v657 = vperm.slane %v653, 2
      %v658 = vperm.slane %v654, 2
      %v659 = vmul.f32 %v566, %v657
      %v660 = vmul.f32 %v566, %v658
      %v661 = vmul.f32 %v570, %v657
      %v662 = vmul.f32 %v570, %v658
      %v663 = vadd.f32 %v649, %v659
      %v664 = vadd.f32 %v650, %v660
      %v665 = vadd.f32 %v651, %v661
      %v666 = vadd.f32 %v652, %v662
      %v667 = vmax.f32 %v663, 0.0
      %v668 = vmax.f32 %v664, 0.0
      %v669 = vmax.f32 %v665, 0.0
      %v670 = vmax.f32 %v666, 0.0
      %v671 = vsub.f32 %v624, %v667
      %v672 = vsub.f32 %v625, %v668
      %v673 = vsub.f32 %v626, %v669
      %v674 = vsub.f32 %v627, %v670
      %v675 = vand.u32 2147483647, %v671
      %v676 = vand.u32 2147483647, %v672
      %v677 = vand.u32 2147483647, %v673
      %v678 = vand.u32 2147483647, %v674
      %v679 = vadd.f32 %v675, %v676
      %v680 = vadd.f32 %v679, %v677
      %v681 = vadd.f32 %v680, %v678
      %682 = vadd.xlane.f32.xlu0 %v681
      %v683 = vpop.xlane.xlu0 %682
      %v684 = vrot.slane %v683, 4
      %v685 = vadd.f32 %v683, %v684
      %v686 = vrot.slane %v685, 2
      %v687 = vadd.f32 %v685, %v686
      %v688 = vrot.slane %v687, 1
      %v689 = vadd.f32 %v687, %v688
      %s690 = vtos %v689
      %v691 = vsub.f32 %v582, %v667
      %v692 = vsub.f32 %v583, %v668
      %v693 = vsub.f32 %v584, %v669
      %v694 = vsub.f32 %v585, %v670
      %v695 = vand.u32 2147483647, %v691
      %v696 = vand.u32 2147483647, %v692
      %v697 = vand.u32 2147483647, %v693
      %v698 = vand.u32 2147483647, %v694
      %v699 = vadd.f32 %v695, %v696
      %v700 = vadd.f32 %v699, %v697
      %v701 = vadd.f32 %v700, %v698
      %702 = vadd.xlane.f32.xlu0 %v701
      %v703 = vpop.xlane.xlu0 %702
      %v704 = vrot.slane %v703, 4
      %v705 = vadd.f32 %v703, %v704
      %v706 = vrot.slane %v705, 2
      %v707 = vadd.f32 %v705, %v706
      %v708 = vrot.slane %v707, 1
      %v709 = vadd.f32 %v707, %v708
      %s710 = vtos %v709
      %p711 = scmp.eq.s32.totalorder %s23, 0
      // Predicated region
      $region49: #{loss_forward.4} parent=47 // pred_check
        %p712 = pneg %p711
      $region50: #{loss_forward.4} parent=47 // pred_check_branch
        %714 = sbr.rel (%p712) target = $region52
      $region51: #{loss_forward.4} parent=47 // pred_region
        %vm715 = vcmask 130048
        %716 = vst.msk [vmem:[#allocation2] sm:$0xff] %vm715, 0.0
        %717 = vst.msk [vmem:[#allocation2 + $0x8] sm:$0xff] %vm715, 0.0
        %718 = vst.msk [vmem:[#allocation2 + $0x10] sm:$0xff] %vm715, 0.0
        %719 = vst.msk [vmem:[#allocation2 + $0x18] sm:$0xff] %vm715, 0.0
        %720 = vst.msk [vmem:[#allocation2 + $0x20] sm:$0xff] %vm715, 0.0
        %721 = vst.msk [vmem:[#allocation2 + $0x28] sm:$0xff] %vm715, 0.0
      $region52: #{loss_forward.4} parent=47 // pred_fallthru
        _
      %v722 = vld [vmem:[#allocation2] sm:$0xff]
      %v723 = vld [vmem:[#allocation2 + $0x8] sm:$0xff]
      %724 = vmatpush.xpose.msra.mxu0 0.0
      %725 = vmatpush.xpose.msra.mxu0 0.0
      %726 = vmatpush.xpose.msra.mxu0 0.0
      %727 = vmatpush.xpose.msra.mxu0 0.0
      %728 = vmatpush.xpose.msra.mxu0 0.0
      %729 = vmatpush.xpose.msra.mxu0 0.0
      %730 = vmatpush.xpose.msra.mxu0 0.0
      %731 = vmatpush.xpose.msra.mxu0 0.0
      %732 = vmatpush.xpose.msra.mxu0 0.0
      %733 = vmatpush.xpose.msra.mxu0 0.0
      %734 = vmatpush.xpose.msra.mxu0 0.0
      %735 = vmatpush.xpose.msra.mxu0 0.0
      %736 = vmatpush.xpose.msra.mxu0 0.0
      %737 = vmatpush.xpose.msra.mxu0 0.0
      %738 = vmatpush.xpose.msra.mxu0 %v584
      %739 = vmatpush.xpose.msra.mxu0 %v582
      %740 = vmatmul.f32.gmra.mxu0 %v582
      %v741 = vpop.f32.mrf.mxu0
      %v742 = vadd.f32 0.0, %v741
      %743 = vmatmul.f32.gmra.mxu0 %v584
      %v744 = vpop.f32.mrf.mxu0
      %v745 = vadd.f32 0.0, %v744
      %746 = vdwg.mxu0
      %747 = vmatpush.xpose.msra.mxu0 0.0
      %748 = vmatpush.xpose.msra.mxu0 0.0
      %749 = vmatpush.xpose.msra.mxu0 0.0
      %750 = vmatpush.xpose.msra.mxu0 0.0
      %751 = vmatpush.xpose.msra.mxu0 0.0
      %752 = vmatpush.xpose.msra.mxu0 0.0
      %753 = vmatpush.xpose.msra.mxu0 0.0
      %754 = vmatpush.xpose.msra.mxu0 0.0
      %755 = vmatpush.xpose.msra.mxu0 0.0
      %756 = vmatpush.xpose.msra.mxu0 0.0
      %757 = vmatpush.xpose.msra.mxu0 0.0
      %758 = vmatpush.xpose.msra.mxu0 0.0
      %759 = vmatpush.xpose.msra.mxu0 0.0
      %760 = vmatpush.xpose.msra.mxu0 0.0
      %761 = vmatpush.xpose.msra.mxu0 %v585
      %762 = vmatpush.xpose.msra.mxu0 %v583
      %763 = vmatmul.f32.gmra.mxu0 %v583
      %v764 = vpop.f32.mrf.mxu0
      %v765 = vadd.f32 %v742, %v764
      %766 = vmatmul.f32.gmra.mxu0 %v585
      %v767 = vpop.f32.mrf.mxu0
      %v768 = vadd.f32 %v745, %v767
      %769 = vdwg.mxu0
      %v770 = vadd.f32 %v722, %v765
      %v771 = vadd.f32 %v723, %v768
      %vm772 = vcmask 130048
      %773 = vst.msk [vmem:[#allocation2] sm:$0xff] %vm772, %v770
      %774 = vst.msk [vmem:[#allocation2 + $0x8] sm:$0xff] %vm772, %v771
      %s775 = scalar_lea.vmem [#allocation2], 16
      %v776 = vld [vmem:[%s775] sm:$0xff]
      %v777 = vld [vmem:[%s775 + $0x8] sm:$0xff]
      %778 = vmatpush.xpose.msra.mxu0 0.0
      %779 = vmatpush.xpose.msra.mxu0 0.0
      %780 = vmatpush.xpose.msra.mxu0 0.0
      %781 = vmatpush.xpose.msra.mxu0 0.0
      %782 = vmatpush.xpose.msra.mxu0 0.0
      %783 = vmatpush.xpose.msra.mxu0 0.0
      %784 = vmatpush.xpose.msra.mxu0 0.0
      %785 = vmatpush.xpose.msra.mxu0 0.0
      %786 = vmatpush.xpose.msra.mxu0 0.0
      %787 = vmatpush.xpose.msra.mxu0 0.0
      %788 = vmatpush.xpose.msra.mxu0 0.0
      %789 = vmatpush.xpose.msra.mxu0 0.0
      %790 = vmatpush.xpose.msra.mxu0 0.0
      %791 = vmatpush.xpose.msra.mxu0 0.0
      %792 = vmatpush.xpose.msra.mxu0 %v626
      %793 = vmatpush.xpose.msra.mxu0 %v624
      %794 = vmatmul.f32.gmra.mxu0 %v624
      %v795 = vpop.f32.mrf.mxu0
      %v796 = vadd.f32 0.0, %v795
      %797 = vmatmul.f32.gmra.mxu0 %v626
      %v798 = vpop.f32.mrf.mxu0
      %v799 = vadd.f32 0.0, %v798
      %800 = vdwg.mxu0
      %801 = vmatpush.xpose.msra.mxu0 0.0
      %802 = vmatpush.xpose.msra.mxu0 0.0
      %803 = vmatpush.xpose.msra.mxu0 0.0
      %804 = vmatpush.xpose.msra.mxu0 0.0
      %805 = vmatpush.xpose.msra.mxu0 0.0
      %806 = vmatpush.xpose.msra.mxu0 0.0
      %807 = vmatpush.xpose.msra.mxu0 0.0
      %808 = vmatpush.xpose.msra.mxu0 0.0
      %809 = vmatpush.xpose.msra.mxu0 0.0
      %810 = vmatpush.xpose.msra.mxu0 0.0
      %811 = vmatpush.xpose.msra.mxu0 0.0
      %812 = vmatpush.xpose.msra.mxu0 0.0
      %813 = vmatpush.xpose.msra.mxu0 0.0
      %814 = vmatpush.xpose.msra.mxu0 0.0
      %815 = vmatpush.xpose.msra.mxu0 %v627
      %816 = vmatpush.xpose.msra.mxu0 %v625
      %817 = vmatmul.f32.gmra.mxu0 %v625
      %v818 = vpop.f32.mrf.mxu0
      %v819 = vadd.f32 %v796, %v818
      %820 = vmatmul.f32.gmra.mxu0 %v627
      %v821 = vpop.f32.mrf.mxu0
      %v822 = vadd.f32 %v799, %v821
      %823 = vdwg.mxu0
      %v824 = vadd.f32 %v776, %v819
      %v825 = vadd.f32 %v777, %v822
      %826 = vst.msk [vmem:[%s775] sm:$0xff] %vm772, %v824
      %827 = vst.msk [vmem:[%s775 + $0x8] sm:$0xff] %vm772, %v825
      %s828 = scalar_lea.vmem [#allocation2], 32
      %v829 = vld [vmem:[%s828] sm:$0xff]
      %v830 = vld [vmem:[%s828 + $0x8] sm:$0xff]
      %831 = vmatpush.xpose.msra.mxu0 0.0
      %832 = vmatpush.xpose.msra.mxu0 0.0
      %833 = vmatpush.xpose.msra.mxu0 0.0
      %834 = vmatpush.xpose.msra.mxu0 0.0
      %835 = vmatpush.xpose.msra.mxu0 0.0
      %836 = vmatpush.xpose.msra.mxu0 0.0
      %837 = vmatpush.xpose.msra.mxu0 0.0
      %838 = vmatpush.xpose.msra.mxu0 0.0
      %839 = vmatpush.xpose.msra.mxu0 0.0
      %840 = vmatpush.xpose.msra.mxu0 0.0
      %841 = vmatpush.xpose.msra.mxu0 0.0
      %842 = vmatpush.xpose.msra.mxu0 0.0
      %843 = vmatpush.xpose.msra.mxu0 0.0
      %844 = vmatpush.xpose.msra.mxu0 0.0
      %845 = vmatpush.xpose.msra.mxu0 %v669
      %846 = vmatpush.xpose.msra.mxu0 %v667
      %847 = vmatmul.f32.gmra.mxu0 %v667
      %v848 = vpop.f32.mrf.mxu0
      %v849 = vadd.f32 0.0, %v848
      %850 = vmatmul.f32.gmra.mxu0 %v669
      %v851 = vpop.f32.mrf.mxu0
      %v852 = vadd.f32 0.0, %v851
      %853 = vdwg.mxu0
      %854 = vmatpush.xpose.msra.mxu0 0.0
      %855 = vmatpush.xpose.msra.mxu0 0.0
      %856 = vmatpush.xpose.msra.mxu0 0.0
      %857 = vmatpush.xpose.msra.mxu0 0.0
      %858 = vmatpush.xpose.msra.mxu0 0.0
      %859 = vmatpush.xpose.msra.mxu0 0.0
      %860 = vmatpush.xpose.msra.mxu0 0.0
      %861 = vmatpush.xpose.msra.mxu0 0.0
      %862 = vmatpush.xpose.msra.mxu0 0.0
      %863 = vmatpush.xpose.msra.mxu0 0.0
      %864 = vmatpush.xpose.msra.mxu0 0.0
      %865 = vmatpush.xpose.msra.mxu0 0.0
      %866 = vmatpush.xpose.msra.mxu0 0.0
      %867 = vmatpush.xpose.msra.mxu0 0.0
      %868 = vmatpush.xpose.msra.mxu0 %v670
      %869 = vmatpush.xpose.msra.mxu0 %v668
      %870 = vmatmul.f32.gmra.mxu0 %v668
      %v871 = vpop.f32.mrf.mxu0
      %v872 = vadd.f32 %v849, %v871
      %873 = vmatmul.f32.gmra.mxu0 %v670
      %v874 = vpop.f32.mrf.mxu0
      %v875 = vadd.f32 %v852, %v874
      %876 = vdwg.mxu0
      %v877 = vadd.f32 %v829, %v872
      %v878 = vadd.f32 %v830, %v875
      %879 = vst.msk [vmem:[%s828] sm:$0xff] %vm772, %v877
      %880 = vst.msk [vmem:[%s828 + $0x8] sm:$0xff] %vm772, %v878
      %v881 = vlaneseq
      %v882 = vshrl.u32 %v881, 7
      %v883 = vlaneseq
      %v884 = vand.u32 %v883, 127
      %vm885 = vcmp.eq.s32.totalorder %v882, 0
      %vm886 = vcmp.eq.s32.totalorder %v884, 0
      %vm887 = vmand %vm885, %vm886
      %v888 = vstv %s479
      %v889 = vsel %vm887, %v888, 0.0
      %v890 = vadd.f32 %v889, 0.0
      %vm891 = vcmp.eq.s32.totalorder %v884, 1
      %vm892 = vmand %vm885, %vm891
      %v893 = vstv %s503
      %v894 = vsel %vm892, %v893, 0.0
      %v895 = vadd.f32 %v890, %v894
      %vm896 = vcmp.eq.s32.totalorder %v884, 2
      %vm897 = vmand %vm885, %vm896
      %v898 = vstv %s690
      %v899 = vsel %vm897, %v898, 0.0
      %v900 = vadd.f32 %v895, %v899
      %vm901 = vcmp.eq.s32.totalorder %v884, 3
      %vm902 = vmand %vm885, %vm901
      %v903 = vstv %s710
      %v904 = vsel %vm902, %v903, 0.0
      %v905 = vadd.f32 %v900, %v904
      %v906 = vsub.f32 %v456, %v457
      %v907 = vand.u32 2147483647, %v906
      %909 = vst [vmem:[#allocation1] ss:$2 sm:$0xff] %v907
      %v910 = vld.sshfl [vmem:[#allocation1] sm:$0xff pattern:$0x75316420]
      %v911 = vld.sshfl [vmem:[#allocation1 + $0x8] sm:$0xff pattern:$0x75316420]
      %v914 = vsel %vm467, %v910, 0.0
      %v915 = vsel %vm467, %v911, 0.0
      %v916 = vadd.f32 %v914, %v915
      %917 = vadd.xlane.f32.xlu0 %v916
      %v918 = vpop.xlane.xlu0 %917
      %v919 = vrot.slane %v918, 4
      %v920 = vadd.f32 %v918, %v919
      %v921 = vrot.slane %v920, 2
      %v922 = vadd.f32 %v920, %v921
      %v923 = vrot.slane %v922, 1
      %v924 = vadd.f32 %v922, %v923
      %s925 = vtos %v924
      %vm926 = vcmp.eq.s32.totalorder %v884, 4
      %vm927 = vmand %vm885, %vm926
      %v928 = vstv %s925
      %v929 = vsel %vm927, %v928, 0.0
      %v930 = vadd.f32 %v905, %v929
      %931 = vst [vmem:[#allocation1] ss:$2 sm:$0xff] %v907
      %v932 = vld.sshfl [vmem:[#allocation1] sm:$0xff pattern:$0x75316420]
      %v933 = vld.sshfl [vmem:[#allocation1 + $0x8] sm:$0xff pattern:$0x75316420]
      %v936 = vmul.f32 %v481, %v932
      %v937 = vmul.f32 %v482, %v933
      %v938 = vsel %vm467, %v936, 0.0
      %v939 = vsel %vm467, %v937, 0.0
      %v940 = vadd.f32 %v938, %v939
      %941 = vadd.xlane.f32.xlu0 %v940
      %v942 = vpop.xlane.xlu0 %941
      %v943 = vrot.slane %v942, 4
      %v944 = vadd.f32 %v942, %v943
      %v945 = vrot.slane %v944, 2
      %v946 = vadd.f32 %v944, %v945
      %v947 = vrot.slane %v946, 1
      %v948 = vadd.f32 %v946, %v947
      %s949 = vtos %v948
      %vm950 = vcmp.eq.s32.totalorder %v884, 5
      %vm951 = vmand %vm885, %vm950
      %v952 = vstv %s949
      %v953 = vsel %vm951, %v952, 0.0
      %v954 = vadd.f32 %v930, %v953
      %v955 = vld [vmem:[%s6] sm:$0xff]
      %956 = vst [vmem:[#allocation1] ss:$2 sm:$0xff] %v456
      %v957 = vld.sshfl [vmem:[#allocation1] sm:$0xff pattern:$0x75316420]
      %v958 = vld.sshfl [vmem:[#allocation1 + $0x8] sm:$0xff pattern:$0x75316420]
      %v961 = vmul.f32 %v481, %v957
      %v962 = vmul.f32 %v482, %v958
      %964 = vset.pattern.permute.xlu0 0
      %965 = vperm.xlu0 %964, %v955
      %v966 = vpop.permute.xlu0 %965
      %v968 = vperm.slane %v961, 0
      %v969 = vperm.slane %v962, 0
      %v970 = vmul.f32 %v966, %v968
      %v971 = vmul.f32 %v966, %v969
      %972 = vset.pattern.permute.xlu0 1
      %973 = vperm.xlu0 %972, %v955
      %v974 = vpop.permute.xlu0 %973
      %v976 = vperm.slane %v961, 1
      %v977 = vperm.slane %v962, 1
      %v978 = vmul.f32 %v974, %v976
      %v979 = vmul.f32 %v974, %v977
      %v980 = vadd.f32 %v970, %v978
      %v981 = vadd.f32 %v971, %v979
      %982 = vset.pattern.permute.xlu0 2
      %983 = vperm.xlu0 %982, %v955
      %v984 = vpop.permute.xlu0 %983
      %v986 = vperm.slane %v961, 2
      %v987 = vperm.slane %v962, 2
      %v988 = vmul.f32 %v984, %v986
      %v989 = vmul.f32 %v984, %v987
      %v990 = vadd.f32 %v980, %v988
      %v991 = vadd.f32 %v981, %v989
      %vm992 = vcmp.ge.f32.partialorder %v990, 0.0
      %vm993 = vcmp.ge.f32.partialorder %v991, 0.0
      %v994 = vmul.f32 %v990, 0.2
      %v995 = vmul.f32 %v991, 0.2
      %v996 = vsel %vm992, %v990, %v994
      %v997 = vsel %vm993, %v991, %v995
      %v998 = vadd.f32 %v996, %v997
      %999 = vadd.xlane.f32.xlu0 %v998
      %v1000 = vpop.xlane.xlu0 %999
      %v1001 = vrot.slane %v1000, 4
      %v1002 = vadd.f32 %v1000, %v1001
      %v1003 = vrot.slane %v1002, 2
      %v1004 = vadd.f32 %v1002, %v1003
      %v1005 = vrot.slane %v1004, 1
      %v1006 = vadd.f32 %v1004, %v1005
      %s1007 = vtos %v1006
      %vm1008 = vcmp.eq.s32.totalorder %v884, 6
      %vm1009 = vmand %vm885, %vm1008
      %v1010 = vstv %s1007
      %v1011 = vsel %vm1009, %v1010, 0.0
      %v1012 = vadd.f32 %v954, %v1011
      %1013 = vst [vmem:[%s453] sm:$0xff] %v1012
      // Predicated region
      $region53: #{loss_forward.4} parent=47 // pred_check
        %p1014 = pneg %p711
      $region54: #{loss_forward.4} parent=47 // pred_check_branch
        %1016 = sbr.rel (%p1014) target = $region56
      $region55: #{loss_forward.4} parent=47 // pred_region
        %v1017 = vld [vmem:[#allocation2] sm:$0xff]
        %v1018 = vld [vmem:[#allocation2 + $0x8] sm:$0xff]
        %v1019 = vld [vmem:[#allocation2 + $0x10] sm:$0xff]
        %v1020 = vld [vmem:[#allocation2 + $0x18] sm:$0xff]
        %v1021 = vld [vmem:[#allocation2 + $0x20] sm:$0xff]
        %v1022 = vld [vmem:[#allocation2 + $0x28] sm:$0xff]
        %v1023 = vsub.f32 %v1019, %v1021
        %v1024 = vsub.f32 %v1020, %v1022
        %v1025 = vand.u32 2147483647, %v1023
        %v1026 = vand.u32 2147483647, %v1024
        %v1027 = vsel %vm772, %v1025, 0.0
        %v1028 = vsel %vm772, %v1026, 0.0
        %v1029 = vadd.f32 %v1027, %v1028
        %1030 = vadd.xlane.f32.xlu0 %v1029
        %v1031 = vpop.xlane.xlu0 %1030
        %v1032 = vrot.slane %v1031, 4
        %v1033 = vadd.f32 %v1031, %v1032
        %v1034 = vrot.slane %v1033, 2
        %v1035 = vadd.f32 %v1033, %v1034
        %v1036 = vrot.slane %v1035, 1
        %v1037 = vadd.f32 %v1035, %v1036
        %s1038 = vtos %v1037
        %s1039 = smul.f32 %s1038, 0.00024414063
        %v1040 = vsub.f32 %v1017, %v1021
        %v1041 = vsub.f32 %v1018, %v1022
        %v1042 = vand.u32 2147483647, %v1040
        %v1043 = vand.u32 2147483647, %v1041
        %v1044 = vsel %vm772, %v1042, 0.0
        %v1045 = vsel %vm772, %v1043, 0.0
        %v1046 = vadd.f32 %v1044, %v1045
        %1047 = vadd.xlane.f32.xlu0 %v1046
        %v1048 = vpop.xlane.xlu0 %1047
        %v1049 = vrot.slane %v1048, 4
        %v1050 = vadd.f32 %v1048, %v1049
        %v1051 = vrot.slane %v1050, 2
        %v1052 = vadd.f32 %v1050, %v1051
        %v1053 = vrot.slane %v1052, 1
        %v1054 = vadd.f32 %v1052, %v1053
        %s1055 = vtos %v1054
        %s1056 = smul.f32 %s1055, 0.00024414063
        %v1057 = vld [vmem:[%s453] sm:$0xff]
        %vm1058 = vcmp.eq.s32.totalorder %v884, 7
        %vm1059 = vmand %vm885, %vm1058
        %v1060 = vstv %s1039
        %v1061 = vsel %vm1059, %v1060, 0.0
        %v1062 = vadd.f32 %v1057, %v1061
        %vm1063 = vcmp.eq.s32.totalorder %v884, 8
        %vm1064 = vmand %vm885, %vm1063
        %v1065 = vstv %s1056
        %v1066 = vsel %vm1064, %v1065, 0.0
        %v1067 = vadd.f32 %v1062, %v1066
        %1068 = vst [vmem:[%s453] sm:$0xff] %v1067
      $region56: #{loss_forward.4} parent=47 // pred_fallthru
        _
      %p1069 = scmp.lt.s32.totalorder %s22, 1
      %s1070 = scalar_select %p1069, %s22, 1
      %p1071 = scmp.lt.s32.totalorder %s23, 0
      %s1072 = scalar_select %p1071, %s23, 0
      %s1073 = sadd.s32 %s1072, %s1070
      %s1074 = smul.addr %s1073, 8
      %s1075 = scalar_lea.vmem %s7, %s1074
      // Predicated region
      $region57: #{loss_forward.4} parent=47 // pred_check
        %p1076 = pneg %p232
      $region58: #{loss_forward.4} parent=47 // pred_check_branch
        %1078 = sbr.rel (%p1076) target = $region60
      $region59: #{loss_forward.4} parent=47 // pred_region
        _
      $region60: #{loss_forward.4} parent=47 // pred_fallthru
        _
    $region48: #{loss_forward.4} parent=5 // pred_fallthru
      _
    %p1079 = scmp.le.s32.totalorder 2, %s13
    // Predicated region
    $region61: #{loss_forward.4} parent=5 // pred_check
      %p1080 = pneg %p1079
    $region62: #{loss_forward.4} parent=5 // pred_check_branch
      %1082 = sbr.rel (%p1080) target = $region64
    $region63: #{loss_forward.4} parent=5 // pred_region
      %s1083 = ssub.s32 %s13, 2
      // Predicated region
      $region65: #{loss_forward.4} parent=63 // pred_check
        %p1084 = pneg %p238
      $region66: #{loss_forward.4} parent=63 // pred_check_branch
        %1086 = sbr.rel (%p1084) target = $region68
      $region67: #{loss_forward.4} parent=63 // pred_region
        %p1087 = scmp.lt.s32.totalorder %s24, 1
        %s1088 = scalar_select %p1087, %s24, 1
        %p1089 = scmp.lt.s32.totalorder %s25, 0
        %s1090 = scalar_select %p1089, %s25, 0
        %s1091 = sadd.s32 %s1090, %s1088
        %s1092 = smul.addr %s1091, 8
        %s1093 = scalar_lea.vmem %s7, %s1092
      $region68: #{loss_forward.4} parent=63 // pred_fallthru
        _
    $region64: #{loss_forward.4} parent=5 // pred_fallthru
      _
  $region6: #{loss_forward.4} parent=0 // loop_footer
    %s17 = sadd.s32 1, %s13
  $region7: #{loss_forward.4} parent=0 // loop_footer_branch
    %12 = sbr.rel target = $region3
  $region8: #{loss_forward.4} parent=0 // loop_exit
    _

// kernel: loss_forward.5
$region0: #{loss_forward.5}
  #allocation0 [shape = 'u32[]', space=smem, size = 0x4, offset = 0x4, fixed_abs, tag = 'smem constant byte address 0x4 - core index']
  #allocation1 [shape = 'u32[72,128]{1,0:T(1,128)}', space=vmem, size = 0x9000, scoped, tag = 'internal scratch']
  #allocation2 [shape = 'f32[3,32,32]{2,1,0:T(8,128)}', space=vmem, size = 0xc000, scoped, tag = 'scratch operand']
  %s0 = inlined_call_operand.vmem [shape: f32[2,1,64], index: 0, kind: input, shape index: {}]
  %s1 = inlined_call_operand.vmem [shape: f32[2,3,64], index: 1, kind: input, shape index: {}]
  %s2 = inlined_call_operand.vmem [shape: f32[2,3,64], index: 2, kind: input, shape index: {}]
  %s3 = inlined_call_operand.vmem [shape: f32[2,3,64], index: 3, kind: input, shape index: {}]
  %s4 = inlined_call_operand.vmem [shape: f32[2,3,64], index: 4, kind: input, shape index: {}]
  %s5 = inlined_call_operand.vmem [shape: f32[16,3], index: 5, kind: input, shape index: {}]
  %s6 = inlined_call_operand.vmem [shape: f32[32,16], index: 6, kind: input, shape index: {}]
  %s7 = inlined_call_operand.vmem [shape: f32[2,1,8,128], index: 7, kind: output, shape index: {}]
  %s8 = sld [smem:[#allocation0]]
  $region69: #{loss_forward.5} parent=0
    _
  %s10 = ssub.s32 1, %s8
  %s11 = scalar_select 0, %s10, %s8
  loop: start=0, step=1, limit=4
  $region2: #{loss_forward.5} parent=0 // loop_pre_header
    _
  $region3: #{loss_forward.5} parent=0 // loop_header
    %s13 = sphi 0, %s17
    %p14 = scmp.ge.s32.totalorder %s13, 4
    %s20 = sphi 0, %s32
    %s21 = sphi 0, %s28
    %s22 = sphi 0, %s20
    %s23 = sphi 0, %s21
    %s24 = sphi 0, %s22
    %s25 = sphi 0, %s23
    %s37 = sphi 0, %s39
    %s40 = sphi 0, %s37
    %s41 = sphi 0, %s40
    %s57 = sphi 0, %s41
    %s65 = sphi 0, %s67
    %s68 = sphi 0, %s65
    %s69 = sphi 0, %s68
    %s85 = sphi 0, %s69
    %s93 = sphi 0, %s95
    %s96 = sphi 0, %s93
    %s97 = sphi 0, %s96
    %s113 = sphi 0, %s97
    %s121 = sphi 0, %s123
    %s124 = sphi 0, %s121
    %s125 = sphi 0, %s124
    %s141 = sphi 0, %s125
    %s149 = sphi 0, %s151
    %s152 = sphi 0, %s149
    %s153 = sphi 0, %s152
    %s169 = sphi 0, %s153
    %s173 = sphi 0, %s173
    %s175 = sphi 0, %s173
    %s176 = sphi 0, %s175
    %s190 = sphi 0, %s176
    %s194 = sphi 0, %s194
    %s196 = sphi 0, %s194
    %s197 = sphi 0, %s196
    %s211 = sphi 0, %s197
    %s219 = sphi 0, %s221
    %s222 = sphi 0, %s219
    %s223 = sphi 0, %s222
    %s239 = sphi 0, %s223
  $region4: #{loss_forward.5} parent=0 // loop_header_branch
    %16 = sbr.rel (%p14) target = $region8
  $region5: #{loss_forward.5} parent=0 // loop_body
    %s18 = ssub.s32 %s13, 1
    %s19 = ssub.s32 %s13, 2
    %s26 = sadd.s32 1, %s21
    %p27 = scmp.ge.s32.totalorder %s26, 1
    %s28 = scalar_select %p27, 0, %s26
    %s29 = sadd.s32 1, %s20
    %s30 = scalar_select %p27, %s29, %s20
    %p31 = scmp.ge.s32.totalorder %s30, 2
    %s32 = scalar_select %p31, 0, %s30
    %s33 = ssub.s32 %s20, %s32
    %s34 = ssub.s32 %s21, %s28
    %s35 = sor.u32 %s33, %s34
    %p36 = scmp.eq.s32.totalorder %s35, 0
    %s38 = sadd.s32 %s37, 1
    %s39 = scalar_select %p36, %s37, %s38
    %p42 = pneg %p36
    %p43 = scmp.eq.s32.totalorder %s13, 1
    %p44 = por %p42, %p43
    %p45 = scmp.ne.s32.totalorder %s37, %s40
    %p46 = scmp.eq.s32.totalorder %s13, 0
    %p47 = por %p45, %p46
    %p48 = scmp.ne.s32.totalorder %s37, %s40
    %p49 = scmp.eq.s32.totalorder %s18, 1
    %p50 = por %p48, %p49
    %p51 = scmp.ne.s32.totalorder %s40, %s41
    %p52 = scmp.eq.s32.totalorder %s18, 0
    %p53 = por %p51, %p52
    %p54 = scmp.ne.s32.totalorder %s40, %s41
    %p55 = scmp.eq.s32.totalorder %s19, 1
    %p56 = por %p54, %p55
    %p58 = scmp.ne.s32.totalorder %s41, %s57
    %p59 = scmp.eq.s32.totalorder %s19, 0
    %p60 = por %p58, %p59
    %s61 = ssub.s32 %s20, %s32
    %s62 = ssub.s32 %s21, %s28
    %s63 = sor.u32 %s61, %s62
    %p64 = scmp.eq.s32.totalorder %s63, 0
    %s66 = sadd.s32 %s65, 1
    %s67 = scalar_select %p64, %s65, %s66
    %p70 = pneg %p64
    %p71 = scmp.eq.s32.totalorder %s13, 1
    %p72 = por %p70, %p71
    %p73 = scmp.ne.s32.totalorder %s65, %s68
    %p74 = scmp.eq.s32.totalorder %s13, 0
    %p75 = por %p73, %p74
    %p76 = scmp.ne.s32.totalorder %s65, %s68
    %p77 = scmp.eq.s32.totalorder %s18, 1
    %p78 = por %p76, %p77
    %p79 = scmp.ne.s32.totalorder %s68, %s69
    %p80 = scmp.eq.s32.totalorder %s18, 0
    %p81 = por %p79, %p80
    %p82 = scmp.ne.s32.totalorder %s68, %s69
    %p83 = scmp.eq.s32.totalorder %s19, 1
    %p84 = por %p82, %p83
    %p86 = scmp.ne.s32.totalorder %s69, %s85
    %p87 = scmp.eq.s32.totalorder %s19, 0
    %p88 = por %p86, %p87
    %s89 = ssub.s32 %s20, %s32
    %s90 = ssub.s32 %s21, %s28
    %s91 = sor.u32 %s89, %s90
    %p92 = scmp.eq.s32.totalorder %s91, 0
    %s94 = sadd.s32 %s93, 1
    %s95 = scalar_select %p92, %s93, %s94
    %p98 = pneg %p92
    %p99 = scmp.eq.s32.totalorder %s13, 1
    %p100 = por %p98, %p99
    %p101 = scmp.ne.s32.totalorder %s93, %s96
    %p102 = scmp.eq.s32.totalorder %s13, 0
    %p103 = por %p101, %p102
    %p104 = scmp.ne.s32.totalorder %s93, %s96
    %p105 = scmp.eq.s32.totalorder %s18, 1
    %p106 = por %p104, %p105
    %p107 = scmp.ne.s32.totalorder %s96, %s97
    %p108 = scmp.eq.s32.totalorder %s18, 0
    %p109 = por %p107, %p108
    %p110 = scmp.ne.s32.totalorder %s96, %s97
    %p111 = scmp.eq.s32.totalorder %s19, 1
    %p112 = por %p110, %p111
    %p114 = scmp.ne.s32.totalorder %s97, %s113
    %p115 = scmp.eq.s32.totalorder %s19, 0
    %p116 = por %p114, %p115
    %s117 = ssub.s32 %s20, %s32
    %s118 = ssub.s32 %s21, %s28
    %s119 = sor.u32 %s117, %s118
    %p120 = scmp.eq.s32.totalorder %s119, 0
    %s122 = sadd.s32 %s121, 1
    %s123 = scalar_select %p120, %s121, %s122
    %p126 = pneg %p120
    %p127 = scmp.eq.s32.totalorder %s13, 1
    %p128 = por %p126, %p127
    %p129 = scmp.ne.s32.totalorder %s121, %s124
    %p130 = scmp.eq.s32.totalorder %s13, 0
    %p131 = por %p129, %p130
    %p132 = scmp.ne.s32.totalorder %s121, %s124
    %p133 = scmp.eq.s32.totalorder %s18, 1
    %p134 = por %p132, %p133
    %p135 = scmp.ne.s32.totalorder %s124, %s125
    %p136 = scmp.eq.s32.totalorder %s18, 0
    %p137 = por %p135, %p136
    %p138 = scmp.ne.s32.totalorder %s124, %s125
    %p139 = scmp.eq.s32.totalorder %s19, 1
    %p140 = por %p138, %p139
    %p142 = scmp.ne.s32.totalorder %s125, %s141
    %p143 = scmp.eq.s32.totalorder %s19, 0
    %p144 = por %p142, %p143
    %s145 = ssub.s32 %s20, %s32
    %s146 = ssub.s32 %s21, %s28
    %s147 = sor.u32 %s145, %s146
    %p148 = scmp.eq.s32.totalorder %s147, 0
    %s150 = sadd.s32 %s149, 1
    %s151 = scalar_select %p148, %s149, %s150
    %p154 = pneg %p148
    %p155 = scmp.eq.s32.totalorder %s13, 1
    %p156 = por %p154, %p155
    %p157 = scmp.ne.s32.totalorder %s149, %s152
    %p158 = scmp.eq.s32.totalorder %s13, 0
    %p159 = por %p157, %p158
    %p160 = scmp.ne.s32.totalorder %s149, %s152
    %p161 = scmp.eq.s32.totalorder %s18, 1
    %p162 = por %p160, %p161
    %p163 = scmp.ne.s32.totalorder %s152, %s153
    %p164 = scmp.eq.s32.totalorder %s18, 0
    %p165 = por %p163, %p164
    %p166 = scmp.ne.s32.totalorder %s152, %s153
    %p167 = scmp.eq.s32.totalorder %s19, 1
    %p168 = por %p166, %p167
    %p170 = scmp.ne.s32.totalorder %s153, %s169
    %p171 = scmp.eq.s32.totalorder %s19, 0
    %p172 = por %p170, %p171
    %s174 = sadd.s32 %s173, 1
    %p177 = scmp.eq.s32.totalorder %s13, 1
    %p178 = scmp.ne.s32.totalorder %s173, %s175
    %p179 = scmp.eq.s32.totalorder %s13, 0
    %p180 = por %p178, %p179
    %p181 = scmp.ne.s32.totalorder %s173, %s175
    %p182 = scmp.eq.s32.totalorder %s18, 1
    %p183 = por %p181, %p182
    %p184 = scmp.ne.s32.totalorder %s175, %s176
    %p185 = scmp.eq.s32.totalorder %s18, 0
    %p186 = por %p184, %p185
    %p187 = scmp.ne.s32.totalorder %s175, %s176
    %p188 = scmp.eq.s32.totalorder %s19, 1
    %p189 = por %p187, %p188
    %p191 = scmp.ne.s32.totalorder %s176, %s190
    %p192 = scmp.eq.s32.totalorder %s19, 0
    %p193 = por %p191, %p192
    %s195 = sadd.s32 %s194, 1
    %p198 = scmp.eq.s32.totalorder %s13, 1
    %p199 = scmp.ne.s32.totalorder %s194, %s196
    %p200 = scmp.eq.s32.totalorder %s13, 0
    %p201 = por %p199, %p200
    %p202 = scmp.ne.s32.totalorder %s194, %s196
    %p203 = scmp.eq.s32.totalorder %s18, 1
    %p204 = por %p202, %p203
    %p205 = scmp.ne.s32.totalorder %s196, %s197
    %p206 = scmp.eq.s32.totalorder %s18, 0
    %p207 = por %p205, %p206
    %p208 = scmp.ne.s32.totalorder %s196, %s197
    %p209 = scmp.eq.s32.totalorder %s19, 1
    %p210 = por %p208, %p209
    %p212 = scmp.ne.s32.totalorder %s197, %s211
    %p213 = scmp.eq.s32.totalorder %s19, 0
    %p214 = por %p212, %p213
    %s215 = ssub.s32 %s20, %s32
    %s216 = ssub.s32 %s21, %s28
    %s217 = sor.u32 %s215, %s216
    %p218 = scmp.eq.s32.totalorder %s217, 0
    %s220 = sadd.s32 %s219, 1
    %s221 = scalar_select %p218, %s219, %s220
    %p224 = pneg %p218
    %p225 = scmp.eq.s32.totalorder %s13, 1
    %p226 = por %p224, %p225
    %p227 = scmp.ne.s32.totalorder %s219, %s222
    %p228 = scmp.eq.s32.totalorder %s13, 0
    %p229 = por %p227, %p228
    %p230 = scmp.ne.s32.totalorder %s219, %s222
    %p231 = scmp.eq.s32.totalorder %s18, 1
    %p232 = por %p230, %p231
    %p233 = scmp.ne.s32.totalorder %s222, %s223
    %p234 = scmp.eq.s32.totalorder %s18, 0
    %p235 = por %p233, %p234
    %p236 = scmp.ne.s32.totalorder %s222, %s223
    %p237 = scmp.eq.s32.totalorder %s19, 1
    %p238 = por %p236, %p237
    %p240 = scmp.ne.s32.totalorder %s223, %s239
    %p241 = scmp.eq.s32.totalorder %s19, 0
    %p242 = por %p240, %p241
    %p243 = scmp.le.s32.totalorder 1, %s13
    %p244 = scmp.lt.s32.totalorder %s13, 3
    %p245 = pnand %p243, %p244
    %p246 = pneg %p245
    // Predicated region
    $region9: #{loss_forward.5} parent=5 // pred_check
      _
    $region10: #{loss_forward.5} parent=5 // pred_check_branch
      %248 = sbr.rel (%p245) target = $region12
    $region11: #{loss_forward.5} parent=5 // pred_region
      %s249 = ssub.s32 %s13, 1
      // Predicated region
      $region13: #{loss_forward.5} parent=11 // pred_check
        %p250 = pneg %p186
      $region14: #{loss_forward.5} parent=11 // pred_check_branch
        %252 = sbr.rel (%p250) target = $region16
      $region15: #{loss_forward.5} parent=11 // pred_region
        _
      $region16: #{loss_forward.5} parent=11 // pred_fallthru
        _
      // Predicated region
      $region17: #{loss_forward.5} parent=11 // pred_check
        %p253 = pneg %p207
      $region18: #{loss_forward.5} parent=11 // pred_check_branch
        %255 = sbr.rel (%p253) target = $region20
      $region19: #{loss_forward.5} parent=11 // pred_region
        _
      $region20: #{loss_forward.5} parent=11 // pred_fallthru
        _
    $region12: #{loss_forward.5} parent=5 // pred_fallthru
      _
    %p256 = scmp.lt.s32.totalorder %s13, 2
    // Predicated region
    $region21: #{loss_forward.5} parent=5 // pred_check
      %p257 = pneg %p256
    $region22: #{loss_forward.5} parent=5 // pred_check_branch
      %259 = sbr.rel (%p257) target = $region24
    $region23: #{loss_forward.5} parent=5 // pred_region
      // Predicated region
      $region25: #{loss_forward.5} parent=23 // pred_check
        %p260 = pneg %p47
      $region26: #{loss_forward.5} parent=23 // pred_check_branch
        %262 = sbr.rel (%p260) target = $region28
      $region27: #{loss_forward.5} parent=23 // pred_region
        %p263 = scmp.lt.s32.totalorder %s20, 1
        %s264 = scalar_select %p263, %s20, 1
        %p265 = scmp.lt.s32.totalorder %s21, 0
        %s266 = scalar_select %p265, %s21, 0
        %s267 = sadd.s32 %s266, %s264
        %s268 = scalar_lea.vmem %s0, %s267
      $region28: #{loss_forward.5} parent=23 // pred_fallthru
        _
      // Predicated region
      $region29: #{loss_forward.5} parent=23 // pred_check
        %p269 = pneg %p75
      $region30: #{loss_forward.5} parent=23 // pred_check_branch
        %271 = sbr.rel (%p269) target = $region32
      $region31: #{loss_forward.5} parent=23 // pred_region
        %p272 = scmp.lt.s32.totalorder %s20, 1
        %s273 = scalar_select %p272, %s20, 1
        %p274 = scmp.lt.s32.totalorder %s21, 0
        %s275 = scalar_select %p274, %s21, 0
        %s276 = sadd.s32 %s275, %s273
        %s277 = smul.addr %s276, 4
        %s278 = scalar_lea.vmem %s1, %s277
      $region32: #{loss_forward.5} parent=23 // pred_fallthru
        _
      // Predicated region
      $region33: #{loss_forward.5} parent=23 // pred_check
        %p279 = pneg %p103
      $region34: #{loss_forward.5} parent=23 // pred_check_branch
        %281 = sbr.rel (%p279) target = $region36
      $region35: #{loss_forward.5} parent=23 // pred_region
        %p282 = scmp.lt.s32.totalorder %s20, 1
        %s283 = scalar_select %p282, %s20, 1
        %p284 = scmp.lt.s32.totalorder %s21, 0
        %s285 = scalar_select %p284, %s21, 0
        %s286 = sadd.s32 %s285, %s283
        %s287 = smul.addr %s286, 4
        %s288 = scalar_lea.vmem %s2, %s287
      $region36: #{loss_forward.5} parent=23 // pred_fallthru
        _
      // Predicated region
      $region37: #{loss_forward.5} parent=23 // pred_check
        %p289 = pneg %p131
      $region38: #{loss_forward.5} parent=23 // pred_check_branch
        %291 = sbr.rel (%p289) target = $region40
      $region39: #{loss_forward.5} parent=23 // pred_region
        %p292 = scmp.lt.s32.totalorder %s20, 1
        %s293 = scalar_select %p292, %s20, 1
        %p294 = scmp.lt.s32.totalorder %s21, 0
        %s295 = scalar_select %p294, %s21, 0
        %s296 = sadd.s32 %s295, %s293
        %s297 = smul.addr %s296, 4
        %s298 = scalar_lea.vmem %s3, %s297
      $region40: #{loss_forward.5} parent=23 // pred_fallthru
        _
      // Predicated region
      $region41: #{loss_forward.5} parent=23 // pred_check
        %p299 = pneg %p159
      $region42: #{loss_forward.5} parent=23 // pred_check_branch
        %301 = sbr.rel (%p299) target = $region44
      $region43: #{loss_forward.5} parent=23 // pred_region
        %p302 = scmp.lt.s32.totalorder %s20, 1
        %s303 = scalar_select %p302, %s20, 1
        %p304 = scmp.lt.s32.totalorder %s21, 0
        %s305 = scalar_select %p304, %s21, 0
        %s306 = sadd.s32 %s305, %s303
        %s307 = smul.addr %s306, 4
        %s308 = scalar_lea.vmem %s4, %s307
      $region44: #{loss_forward.5} parent=23 // pred_fallthru
        _
    $region24: #{loss_forward.5} parent=5 // pred_fallthru
      _
    %p309 = scmp.le.s32.totalorder 1, %s13
    %p310 = scmp.lt.s32.totalorder %s13, 3
    %p311 = pnand %p309, %p310
    %p312 = pneg %p311
    // Predicated region
    $region45: #{loss_forward.5} parent=5 // pred_check
      _
    $region46: #{loss_forward.5} parent=5 // pred_check_branch
      %314 = sbr.rel (%p311) target = $region48
    $region47: #{loss_forward.5} parent=5 // pred_region
      %s315 = ssub.s32 %s13, 1
      %p316 = scmp.lt.s32.totalorder %s22, 1
      %s317 = scalar_select %p316, %s22, 1
      %p318 = scmp.lt.s32.totalorder %s23, 0
      %s319 = scalar_select %p318, %s23, 0
      %s320 = sadd.s32 %s319, %s317
      %s321 = scalar_lea.vmem %s0, %s320
      %p322 = pneg %p53
      %p323 = pneg %p50
      %p324 = scmp.lt.s32.totalorder %s22, 1
      %s325 = scalar_select %p324, %s22, 1
      %p326 = scmp.lt.s32.totalorder %s23, 0
      %s327 = scalar_select %p326, %s23, 0
      %s328 = sadd.s32 %s327, %s325
      %s329 = smul.addr %s328, 4
      %s330 = scalar_lea.vmem %s1, %s329
      %p331 = pneg %p81
      %p332 = pneg %p78
      %p333 = scmp.lt.s32.totalorder %s22, 1
      %s334 = scalar_select %p333, %s22, 1
      %p335 = scmp.lt.s32.totalorder %s23, 0
      %s336 = scalar_select %p335, %s23, 0
      %s337 = sadd.s32 %s336, %s334
      %s338 = smul.addr %s337, 4
      %s339 = scalar_lea.vmem %s2, %s338
      %p340 = pneg %p109
      %p341 = pneg %p106
      %p342 = scmp.lt.s32.totalorder %s22, 1
      %s343 = scalar_select %p342, %s22, 1
      %p344 = scmp.lt.s32.totalorder %s23, 0
      %s345 = scalar_select %p344, %s23, 0
      %s346 = sadd.s32 %s345, %s343
      %s347 = smul.addr %s346, 4
      %s348 = scalar_lea.vmem %s3, %s347
      %p349 = pneg %p137
      %p350 = pneg %p134
      %p351 = scmp.lt.s32.totalorder %s22, 1
      %s352 = scalar_select %p351, %s22, 1
      %p353 = scmp.lt.s32.totalorder %s23, 0
      %s354 = scalar_select %p353, %s23, 0
      %s355 = sadd.s32 %s354, %s352
      %s356 = smul.addr %s355, 4
      %s357 = scalar_lea.vmem %s4, %s356
      %p358 = pneg %p165
      %p359 = pneg %p162
      %p360 = pneg %p186
      %p361 = pneg %p183
      %p362 = pneg %p207
      %p363 = pneg %p204
      %p364 = pneg %p235
      %p365 = pneg %p232
      %p366 = scmp.lt.s32.totalorder %s22, 1
      %s367 = scalar_select %p366, %s22, 1
      %p368 = scmp.lt.s32.totalorder %s23, 0
      %s369 = scalar_select %p368, %s23, 0
      %s370 = sadd.s32 %s369, %s367
      %s371 = smul.addr %s370, 8
      %s372 = scalar_lea.vmem %s7, %s371
      %p373 = scmp.lt.s32.totalorder %s22, 1
      %s374 = scalar_select %p373, %s22, 1
      %p375 = scmp.lt.s32.totalorder %s23, 0
      %s376 = scalar_select %p375, %s23, 0
      %s377 = sadd.s32 %s376, %s374
      %s378 = scalar_lea.vmem %s0, %s377
      %p379 = scmp.lt.s32.totalorder %s22, 1
      %s380 = scalar_select %p379, %s22, 1
      %p381 = scmp.lt.s32.totalorder %s23, 0
      %s382 = scalar_select %p381, %s23, 0
      %s383 = sadd.s32 %s382, %s380
      %s384 = smul.addr %s383, 4
      %s385 = scalar_lea.vmem %s1, %s384
      %p386 = scmp.lt.s32.totalorder %s22, 1
      %s387 = scalar_select %p386, %s22, 1
      %p388 = scmp.lt.s32.totalorder %s23, 0
      %s389 = scalar_select %p388, %s23, 0
      %s390 = sadd.s32 %s389, %s387
      %s391 = smul.addr %s390, 4
      %s392 = scalar_lea.vmem %s2, %s391
      %p393 = scmp.lt.s32.totalorder %s22, 1
      %s394 = scalar_select %p393, %s22, 1
      %p395 = scmp.lt.s32.totalorder %s23, 0
      %s396 = scalar_select %p395, %s23, 0
      %s397 = sadd.s32 %s396, %s394
      %s398 = smul.addr %s397, 4
      %s399 = scalar_lea.vmem %s3, %s398
      %p400 = scmp.lt.s32.totalorder %s22, 1
      %s401 = scalar_select %p400, %s22, 1
      %p402 = scmp.lt.s32.totalorder %s23, 0
      %s403 = scalar_select %p402, %s23, 0
      %s404 = sadd.s32 %s403, %s401
      %s405 = smul.addr %s404, 4
      %s406 = scalar_lea.vmem %s4, %s405
      %p407 = scmp.lt.s32.totalorder %s22, 1
      %s408 = scalar_select %p407, %s22, 1
      %p409 = scmp.lt.s32.totalorder %s23, 0
      %s410 = scalar_select %p409, %s23, 0
      %s411 = sadd.s32 %s410, %s408
      %s412 = smul.addr %s411, 8
      %s413 = scalar_lea.vmem %s7, %s412
      %v414 = vld [vmem:[%s378] sm:$0x1]
      %v415 = vld [vmem:[%s385] sm:$0x7]
      %v416 = vld [vmem:[%s392] sm:$0x7]
      %v417 = vld [vmem:[%s399] sm:$0x7]
      %v418 = vld [vmem:[%s406] sm:$0x7]
      %v419 = vsub.f32 %v418, %v417
      %v420 = vand.u32 2147483647, %v419
      %vm421 = vcmask 518144
      %v422 = vsel %vm421, %v420, 0.0
      %423 = vadd.xlane.f32.xlu0 %v422
      %v424 = vpop.xlane.xlu0 %423
      %v425 = vrot.slane %v424, 4
      %v426 = vadd.f32 %v424, %v425
      %v427 = vrot.slane %v426, 2
      %v428 = vadd.f32 %v426, %v427
      %v429 = vrot.slane %v428, 1
      %v430 = vadd.f32 %v428, %v429
      %s431 = vtos %v430
      %v433 = vperm.slane %v414, 0
      %v435 = vmul.f32 %v433, %v420
      %v436 = vsel %vm421, %v435, 0.0
      %437 = vadd.xlane.f32.xlu0 %v436
      %v438 = vpop.xlane.xlu0 %437
      %v439 = vrot.slane %v438, 4
      %v440 = vadd.f32 %v438, %v439
      %v441 = vrot.slane %v440, 2
      %v442 = vadd.f32 %v440, %v441
      %v443 = vrot.slane %v442, 1
      %v444 = vadd.f32 %v442, %v443
      %s445 = vtos %v444
      %v446 = vmul.f32 %v433, %v415
      %v447 = vsub.f32 1.0, %v414
      %v449 = vperm.slane %v447, 0
      %v451 = vmul.f32 %v449, %v416
      %v452 = vadd.f32 %v446, %v451
      %v453 = vld [vmem:[%s5] sm:$0xff]
      %v454 = vld [vmem:[%s5 + $0x8] sm:$0xff]
      %456 = vset.pattern.permute.xlu0 0
      %457 = vperm.xlu0 %456, %v453
      %v458 = vpop.permute.xlu0 %457
      %461 = vset.pattern.permute.xlu0 0
      %462 = vperm.xlu0 %461, %v454
      %v463 = vpop.permute.xlu0 %462
      %v465 = vperm.slane %v452, 0
      %v466 = vmul.f32 %v458, %v465
      %v467 = vmul.f32 %v463, %v465
      %468 = vset.pattern.permute.xlu0 1
      %469 = vperm.xlu0 %468, %v453
      %v470 = vpop.permute.xlu0 %469
      %472 = vset.pattern.permute.xlu0 1
      %473 = vperm.xlu0 %472, %v454
      %v474 = vpop.permute.xlu0 %473
      %v476 = vperm.slane %v452, 1
      %v477 = vmul.f32 %v470, %v476
      %v478 = vmul.f32 %v474, %v476
      %v479 = vadd.f32 %v466, %v477
      %v480 = vadd.f32 %v467, %v478
      %481 = vset.pattern.permute.xlu0 2
      %482 = vperm.xlu0 %481, %v453
      %v483 = vpop.permute.xlu0 %482
      %485 = vset.pattern.permute.xlu0 2
      %486 = vperm.xlu0 %485, %v454
      %v487 = vpop.permute.xlu0 %486
      %v489 = vperm.slane %v452, 2
      %v490 = vmul.f32 %v483, %v489
      %v491 = vmul.f32 %v487, %v489
      %v492 = vadd.f32 %v479, %v490
      %v493 = vadd.f32 %v480, %v491
      %v494 = vmax.f32 %v492, 0.0
      %v495 = vmax.f32 %v493, 0.0
      %v496 = vld [vmem:[%s6] sm:$0xff]
      %v497 = vld [vmem:[%s6 + $0x8] sm:$0xff]
      %v498 = vld [vmem:[%s6 + $0x10] sm:$0xff]
      %v499 = vld [vmem:[%s6 + $0x18] sm:$0xff]
      %vm500 = vcmask 130048
      %v502 = vsel %vm500, %v496, 0
      %v505 = vsel %vm500, %v497, 0
      %v508 = vsel %vm500, %v498, 0
      %v511 = vsel %vm500, %v499, 0
      %513 = vmatpush.msra.mxu0 0.0
      %514 = vmatpush.msra.mxu0 0.0
      %515 = vmatpush.msra.mxu0 0.0
      %516 = vmatpush.msra.mxu0 0.0
      %517 = vmatpush.msra.mxu0 0.0
      %518 = vmatpush.msra.mxu0 0.0
      %519 = vmatpush.msra.mxu0 0.0
      %520 = vmatpush.msra.mxu0 0.0
      %521 = vmatpush.msra.mxu0 0.0
      %522 = vmatpush.msra.mxu0 0.0
      %523 = vmatpush.msra.mxu0 0.0
      %524 = vmatpush.msra.mxu0 0.0
      %525 = vmatpush.msra.mxu0 0.0
      %526 = vmatpush.msra.mxu0 0.0
      %527 = vmatpush.msra.mxu0 %v495
      %528 = vmatpush.msra.mxu0 %v494
      %529 = vmatmul.f32.gmra.mxu0 %v502
      %v530 = vpop.f32.mrf.mxu0
      %v531 = vadd.f32 0.0, %v530
      %532 = vmatmul.f32.gmra.mxu0 %v505
      %v533 = vpop.f32.mrf.mxu0
      %v534 = vadd.f32 0.0, %v533
      %535 = vmatmul.f32.gmra.mxu0 %v508
      %v536 = vpop.f32.mrf.mxu0
      %v537 = vadd.f32 0.0, %v536
      %538 = vmatmul.f32.gmra.mxu0 %v511
      %v539 = vpop.f32.mrf.mxu0
      %v540 = vadd.f32 0.0, %v539
      %541 = vdwg.mxu0
      %v542 = vmax.f32 %v531, 0.0
      %v543 = vmax.f32 %v534, 0.0
      %v544 = vmax.f32 %v537, 0.0
      %v545 = vmax.f32 %v540, 0.0
      %v546 = vperm.slane %v416, 0
      %v547 = vmul.f32 %v458, %v546
      %v548 = vmul.f32 %v463, %v546
      %v549 = vperm.slane %v416, 1
      %v550 = vmul.f32 %v470, %v549
      %v551 = vmul.f32 %v474, %v549
      %v552 = vadd.f32 %v547, %v550
      %v553 = vadd.f32 %v548, %v551
      %v554 = vperm.slane %v416, 2
      %v555 = vmul.f32 %v483, %v554
      %v556 = vmul.f32 %v487, %v554
      %v557 = vadd.f32 %v552, %v555
      %v558 = vadd.f32 %v553, %v556
      %v559 = vmax.f32 %v557, 0.0
      %v560 = vmax.f32 %v558, 0.0
      %561 = vmatpush.msra.mxu0 0.0
      %562 = vmatpush.msra.mxu0 0.0
      %563 = vmatpush.msra.mxu0 0.0
      %564 = vmatpush.msra.mxu0 0.0
      %565 = vmatpush.msra.mxu0 0.0
      %566 = vmatpush.msra.mxu0 0.0
      %567 = vmatpush.msra.mxu0 0.0
      %568 = vmatpush.msra.mxu0 0.0
      %569 = vmatpush.msra.mxu0 0.0
      %570 = vmatpush.msra.mxu0 0.0
      %571 = vmatpush.msra.mxu0 0.0
      %572 = vmatpush.msra.mxu0 0.0
      %573 = vmatpush.msra.mxu0 0.0
      %574 = vmatpush.msra.mxu0 0.0
      %575 = vmatpush.msra.mxu0 %v560
      %576 = vmatpush.msra.mxu0 %v559
      %577 = vmatmul.f32.gmra.mxu0 %v502
      %v578 = vpop.f32.mrf.mxu0
      %v579 = vadd.f32 0.0, %v578
      %580 = vmatmul.f32.gmra.mxu0 %v505
      %v581 = vpop.f32.mrf.mxu0
      %v582 = vadd.f32 0.0, %v581
      %583 = vmatmul.f32.gmra.mxu0 %v508
      %v584 = vpop.f32.mrf.mxu0
      %v585 = vadd.f32 0.0, %v584
      %586 = vmatmul.f32.gmra.mxu0 %v511
      %v587 = vpop.f32.mrf.mxu0
      %v588 = vadd.f32 0.0, %v587
      %589 = vdwg.mxu0
      %v590 = vmax.f32 %v579, 0.0
      %v591 = vmax.f32 %v582, 0.0
      %v592 = vmax.f32 %v585, 0.0
      %v593 = vmax.f32 %v588, 0.0
      %v594 = vperm.slane %v417, 0
      %v595 = vmul.f32 %v458, %v594
      %v596 = vmul.f32 %v463, %v594
      %v597 = vperm.slane %v417, 1
      %v598 = vmul.f32 %v470, %v597
      %v599 = vmul.f32 %v474, %v597
      %v600 = vadd.f32 %v595, %v598
      %v601 = vadd.f32 %v596, %v599
      %v602 = vperm.slane %v417, 2
      %v603 = vmul.f32 %v483, %v602
      %v604 = vmul.f32 %v487, %v602
      %v605 = vadd.f32 %v600, %v603
      %v606 = vadd.f32 %v601, %v604
      %v607 = vmax.f32 %v605, 0.0
      %v608 = vmax.f32 %v606, 0.0
      %609 = vmatpush.msra.mxu0 0.0
      %610 = vmatpush.msra.mxu0 0.0
      %611 = vmatpush.msra.mxu0 0.0
      %612 = vmatpush.msra.mxu0 0.0
      %613 = vmatpush.msra.mxu0 0.0
      %614 = vmatpush.msra.mxu0 0.0
      %615 = vmatpush.msra.mxu0 0.0
      %616 = vmatpush.msra.mxu0 0.0
      %617 = vmatpush.msra.mxu0 0.0
      %618 = vmatpush.msra.mxu0 0.0
      %619 = vmatpush.msra.mxu0 0.0
      %620 = vmatpush.msra.mxu0 0.0
      %621 = vmatpush.msra.mxu0 0.0
      %622 = vmatpush.msra.mxu0 0.0
      %623 = vmatpush.msra.mxu0 %v608
      %624 = vmatpush.msra.mxu0 %v607
      %625 = vmatmul.f32.gmra.mxu0 %v502
      %v626 = vpop.f32.mrf.mxu0
      %v627 = vadd.f32 0.0, %v626
      %628 = vmatmul.f32.gmra.mxu0 %v505
      %v629 = vpop.f32.mrf.mxu0
      %v630 = vadd.f32 0.0, %v629
      %631 = vmatmul.f32.gmra.mxu0 %v508
      %v632 = vpop.f32.mrf.mxu0
      %v633 = vadd.f32 0.0, %v632
      %634 = vmatmul.f32.gmra.mxu0 %v511
      %v635 = vpop.f32.mrf.mxu0
      %v636 = vadd.f32 0.0, %v635
      %637 = vdwg.mxu0
      %v638 = vmax.f32 %v627, 0.0
      %v639 = vmax.f32 %v630, 0.0
      %v640 = vmax.f32 %v633, 0.0
      %v641 = vmax.f32 %v636, 0.0
      %v642 = vsub.f32 %v590, %v638
      %v643 = vsub.f32 %v591, %v639
      %v644 = vsub.f32 %v592, %v640
      %v645 = vsub.f32 %v593, %v641
      %v646 = vand.u32 2147483647, %v642
      %v647 = vand.u32 2147483647, %v643
      %v648 = vand.u32 2147483647, %v644
      %v649 = vand.u32 2147483647, %v645
      %vm650 = vcmask 523264
      %v651 = vsel %vm650, %v646, 0.0
      %v652 = vsel %vm650, %v647, 0.0
      %v653 = vadd.f32 %v651, %v652
      %v654 = vsel %vm650, %v648, 0.0
      %v655 = vadd.f32 %v653, %v654
      %v656 = vsel %vm650, %v649, 0.0
      %v657 = vadd.f32 %v655, %v656
      %658 = vadd.xlane.f32.xlu0 %v657
      %v659 = vpop.xlane.xlu0 %658
      %v660 = vrot.slane %v659, 4
      %v661 = vadd.f32 %v659, %v660
      %v662 = vrot.slane %v661, 2
      %v663 = vadd.f32 %v661, %v662
      %v664 = vrot.slane %v663, 1
      %v665 = vadd.f32 %v663, %v664
      %s666 = vtos %v665
      %v667 = vsub.f32 %v542, %v638
      %v668 = vsub.f32 %v543, %v639
      %v669 = vsub.f32 %v544, %v640
      %v670 = vsub.f32 %v545, %v641
      %v671 = vand.u32 2147483647, %v667
      %v672 = vand.u32 2147483647, %v668
      %v673 = vand.u32 2147483647, %v669
      %v674 = vand.u32 2147483647, %v670
      %v675 = vsel %vm650, %v671, 0.0
      %v676 = vsel %vm650, %v672, 0.0
      %v677 = vadd.f32 %v675, %v676
      %v678 = vsel %vm650, %v673, 0.0
      %v679 = vadd.f32 %v677, %v678
      %v680 = vsel %vm650, %v674, 0.0
      %v681 = vadd.f32 %v679, %v680
      %682 = vadd.xlane.f32.xlu0 %v681
      %v683 = vpop.xlane.xlu0 %682
      %v684 = vrot.slane %v683, 4
      %v685 = vadd.f32 %v683, %v684
      %v686 = vrot.slane %v685, 2
      %v687 = vadd.f32 %v685, %v686
      %v688 = vrot.slane %v687, 1
      %v689 = vadd.f32 %v687, %v688
      %s690 = vtos %v689
      %p691 = scmp.eq.s32.totalorder %s23, 0
      // Predicated region
      $region49: #{loss_forward.5} parent=47 // pred_check
        %p692 = pneg %p691
      $region50: #{loss_forward.5} parent=47 // pred_check_branch
        %694 = sbr.rel (%p692) target = $region52
      $region51: #{loss_forward.5} parent=47 // pred_region
        %vm695 = vcmask 261120
        %696 = vst.msk [vmem:[#allocation2] sm:$0xff] %vm695, 0.0
        %697 = vst.msk [vmem:[#allocation2 + $0x8] sm:$0xff] %vm695, 0.0
        %698 = vst.msk [vmem:[#allocation2 + $0x10] sm:$0xff] %vm695, 0.0
        %699 = vst.msk [vmem:[#allocation2 + $0x18] sm:$0xff] %vm695, 0.0
        %700 = vst.msk [vmem:[#allocation2 + $0x20] sm:$0xff] %vm695, 0.0
        %701 = vst.msk [vmem:[#allocation2 + $0x28] sm:$0xff] %vm695, 0.0
        %702 = vst.msk [vmem:[#allocation2 + $0x30] sm:$0xff] %vm695, 0.0
        %703 = vst.msk [vmem:[#allocation2 + $0x38] sm:$0xff] %vm695, 0.0
        %704 = vst.msk [vmem:[#allocation2 + $0x40] sm:$0xff] %vm695, 0.0
        %705 = vst.msk [vmem:[#allocation2 + $0x48] sm:$0xff] %vm695, 0.0
        %706 = vst.msk [vmem:[#allocation2 + $0x50] sm:$0xff] %vm695, 0.0
        %707 = vst.msk [vmem:[#allocation2 + $0x58] sm:$0xff] %vm695, 0.0
      $region52: #{loss_forward.5} parent=47 // pred_fallthru
        _
      %v708 = vld [vmem:[#allocation2] sm:$0xff]
      %v709 = vld [vmem:[#allocation2 + $0x8] sm:$0xff]
      %v710 = vld [vmem:[#allocation2 + $0x10] sm:$0xff]
      %v711 = vld [vmem:[#allocation2 + $0x18] sm:$0xff]
      %v713 = vsel %vm650, %v542, 0
      %v716 = vsel %vm650, %v543, 0
      %v719 = vsel %vm650, %v544, 0
      %v722 = vsel %vm650, %v545, 0
      %724 = vmatpush.xpose.msra.mxu0 0.0
      %725 = vmatpush.xpose.msra.mxu0 0.0
      %726 = vmatpush.xpose.msra.mxu0 0.0
      %727 = vmatpush.xpose.msra.mxu0 0.0
      %728 = vmatpush.xpose.msra.mxu0 0.0
      %729 = vmatpush.xpose.msra.mxu0 0.0
      %730 = vmatpush.xpose.msra.mxu0 0.0
      %731 = vmatpush.xpose.msra.mxu0 0.0
      %732 = vmatpush.xpose.msra.mxu0 0.0
      %733 = vmatpush.xpose.msra.mxu0 0.0
      %734 = vmatpush.xpose.msra.mxu0 0.0
      %735 = vmatpush.xpose.msra.mxu0 0.0
      %736 = vmatpush.xpose.msra.mxu0 %v722
      %737 = vmatpush.xpose.msra.mxu0 %v719
      %738 = vmatpush.xpose.msra.mxu0 %v716
      %739 = vmatpush.xpose.msra.mxu0 %v713
      %740 = vmatmul.f32.gmra.mxu0 %v713
      %v741 = vpop.f32.mrf.mxu0
      %v742 = vadd.f32 0.0, %v741
      %743 = vmatmul.f32.gmra.mxu0 %v716
      %v744 = vpop.f32.mrf.mxu0
      %v745 = vadd.f32 0.0, %v744
      %746 = vmatmul.f32.gmra.mxu0 %v719
      %v747 = vpop.f32.mrf.mxu0
      %v748 = vadd.f32 0.0, %v747
      %749 = vmatmul.f32.gmra.mxu0 %v722
      %v750 = vpop.f32.mrf.mxu0
      %v751 = vadd.f32 0.0, %v750
      %752 = vdwg.mxu0
      %v753 = vadd.f32 %v708, %v742
      %v754 = vadd.f32 %v709, %v745
      %v755 = vadd.f32 %v710, %v748
      %v756 = vadd.f32 %v711, %v751
      %vm757 = vcmask 261120
      %758 = vst.msk [vmem:[#allocation2] sm:$0xff] %vm757, %v753
      %759 = vst.msk [vmem:[#allocation2 + $0x8] sm:$0xff] %vm757, %v754
      %760 = vst.msk [vmem:[#allocation2 + $0x10] sm:$0xff] %vm757, %v755
      %761 = vst.msk [vmem:[#allocation2 + $0x18] sm:$0xff] %vm757, %v756
      %s762 = scalar_lea.vmem [#allocation2], 32
      %v763 = vld [vmem:[%s762] sm:$0xff]
      %v764 = vld [vmem:[%s762 + $0x8] sm:$0xff]
      %v765 = vld [vmem:[%s762 + $0x10] sm:$0xff]
      %v766 = vld [vmem:[%s762 + $0x18] sm:$0xff]
      %v768 = vsel %vm650, %v590, 0
      %v771 = vsel %vm650, %v591, 0
      %v774 = vsel %vm650, %v592, 0
      %v777 = vsel %vm650, %v593, 0
      %779 = vmatpush.xpose.msra.mxu0 0.0
      %780 = vmatpush.xpose.msra.mxu0 0.0
      %781 = vmatpush.xpose.msra.mxu0 0.0
      %782 = vmatpush.xpose.msra.mxu0 0.0
      %783 = vmatpush.xpose.msra.mxu0 0.0
      %784 = vmatpush.xpose.msra.mxu0 0.0
      %785 = vmatpush.xpose.msra.mxu0 0.0
      %786 = vmatpush.xpose.msra.mxu0 0.0
      %787 = vmatpush.xpose.msra.mxu0 0.0
      %788 = vmatpush.xpose.msra.mxu0 0.0
      %789 = vmatpush.xpose.msra.mxu0 0.0
      %790 = vmatpush.xpose.msra.mxu0 0.0
      %791 = vmatpush.xpose.msra.mxu0 %v777
      %792 = vmatpush.xpose.msra.mxu0 %v774
      %793 = vmatpush.xpose.msra.mxu0 %v771
      %794 = vmatpush.xpose.msra.mxu0 %v768
      %795 = vmatmul.f32.gmra.mxu0 %v768
      %v796 = vpop.f32.mrf.mxu0
      %v797 = vadd.f32 0.0, %v796
      %798 = vmatmul.f32.gmra.mxu0 %v771
      %v799 = vpop.f32.mrf.mxu0
      %v800 = vadd.f32 0.0, %v799
      %801 = vmatmul.f32.gmra.mxu0 %v774
      %v802 = vpop.f32.mrf.mxu0
      %v803 = vadd.f32 0.0, %v802
      %804 = vmatmul.f32.gmra.mxu0 %v777
      %v805 = vpop.f32.mrf.mxu0
      %v806 = vadd.f32 0.0, %v805
      %807 = vdwg.mxu0
      %v808 = vadd.f32 %v763, %v797
      %v809 = vadd.f32 %v764, %v800
      %v810 = vadd.f32 %v765, %v803
      %v811 = vadd.f32 %v766, %v806
      %812 = vst.msk [vmem:[%s762] sm:$0xff] %vm757, %v808
      %813 = vst.msk [vmem:[%s762 + $0x8] sm:$0xff] %vm757, %v809
      %814 = vst.msk [vmem:[%s762 + $0x10] sm:$0xff] %vm757, %v810
      %815 = vst.msk [vmem:[%s762 + $0x18] sm:$0xff] %vm757, %v811
      %s816 = scalar_lea.vmem [#allocation2], 64
      %v817 = vld [vmem:[%s816] sm:$0xff]
      %v818 = vld [vmem:[%s816 + $0x8] sm:$0xff]
      %v819 = vld [vmem:[%s816 + $0x10] sm:$0xff]
      %v820 = vld [vmem:[%s816 + $0x18] sm:$0xff]
      %v822 = vsel %vm650, %v638, 0
      %v825 = vsel %vm650, %v639, 0
      %v828 = vsel %vm650, %v640, 0
      %v831 = vsel %vm650, %v641, 0
      %833 = vmatpush.xpose.msra.mxu0 0.0
      %834 = vmatpush.xpose.msra.mxu0 0.0
      %835 = vmatpush.xpose.msra.mxu0 0.0
      %836 = vmatpush.xpose.msra.mxu0 0.0
      %837 = vmatpush.xpose.msra.mxu0 0.0
      %838 = vmatpush.xpose.msra.mxu0 0.0
      %839 = vmatpush.xpose.msra.mxu0 0.0
      %840 = vmatpush.xpose.msra.mxu0 0.0
      %841 = vmatpush.xpose.msra.mxu0 0.0
      %842 = vmatpush.xpose.msra.mxu0 0.0
      %843 = vmatpush.xpose.msra.mxu0 0.0
      %844 = vmatpush.xpose.msra.mxu0 0.0
      %845 = vmatpush.xpose.msra.mxu0 %v831
      %846 = vmatpush.xpose.msra.mxu0 %v828
      %847 = vmatpush.xpose.msra.mxu0 %v825
      %848 = vmatpush.xpose.msra.mxu0 %v822
      %849 = vmatmul.f32.gmra.mxu0 %v822
      %v850 = vpop.f32.mrf.mxu0
      %v851 = vadd.f32 0.0, %v850
      %852 = vmatmul.f32.gmra.mxu0 %v825
      %v853 = vpop.f32.mrf.mxu0
      %v854 = vadd.f32 0.0, %v853
      %855 = vmatmul.f32.gmra.mxu0 %v828
      %v856 = vpop.f32.mrf.mxu0
      %v857 = vadd.f32 0.0, %v856
      %858 = vmatmul.f32.gmra.mxu0 %v831
      %v859 = vpop.f32.mrf.mxu0
      %v860 = vadd.f32 0.0, %v859
      %861 = vdwg.mxu0
      %v862 = vadd.f32 %v817, %v851
      %v863 = vadd.f32 %v818, %v854
      %v864 = vadd.f32 %v819, %v857
      %v865 = vadd.f32 %v820, %v860
      %866 = vst.msk [vmem:[%s816] sm:$0xff] %vm757, %v862
      %867 = vst.msk [vmem:[%s816 + $0x8] sm:$0xff] %vm757, %v863
      %868 = vst.msk [vmem:[%s816 + $0x10] sm:$0xff] %vm757, %v864
      %869 = vst.msk [vmem:[%s816 + $0x18] sm:$0xff] %vm757, %v865
      %v870 = vlaneseq
      %v871 = vshrl.u32 %v870, 7
      %v872 = vlaneseq
      %v873 = vand.u32 %v872, 127
      %vm874 = vcmp.eq.s32.totalorder %v871, 0
      %vm875 = vcmp.eq.s32.totalorder %v873, 0
      %vm876 = vmand %vm874, %vm875
      %v877 = vstv %s431
      %v878 = vsel %vm876, %v877, 0.0
      %v879 = vadd.f32 %v878, 0.0
      %vm880 = vcmp.eq.s32.totalorder %v873, 1
      %vm881 = vmand %vm874, %vm880
      %v882 = vstv %s445
      %v883 = vsel %vm881, %v882, 0.0
      %v884 = vadd.f32 %v879, %v883
      %vm885 = vcmp.eq.s32.totalorder %v873, 2
      %vm886 = vmand %vm874, %vm885
      %v887 = vstv %s666
      %v888 = vsel %vm886, %v887, 0.0
      %v889 = vadd.f32 %v884, %v888
      %vm890 = vcmp.eq.s32.totalorder %v873, 3
      %vm891 = vmand %vm874, %vm890
      %v892 = vstv %s690
      %v893 = vsel %vm891, %v892, 0.0
      %v894 = vadd.f32 %v889, %v893
      %895 = vst [vmem:[%s413] sm:$0xff] %v894
      // Predicated region
      $region53: #{loss_forward.5} parent=47 // pred_check
        %p896 = pneg %p691
      $region54: #{loss_forward.5} parent=47 // pred_check_branch
        %898 = sbr.rel (%p896) target = $region56
      $region55: #{loss_forward.5} parent=47 // pred_region
        %v899 = vld [vmem:[#allocation2] sm:$0xff]
        %v900 = vld [vmem:[#allocation2 + $0x8] sm:$0xff]
        %v901 = vld [vmem:[#allocation2 + $0x10] sm:$0xff]
        %v902 = vld [vmem:[#allocation2 + $0x18] sm:$0xff]
        %v903 = vld [vmem:[#allocation2 + $0x20] sm:$0xff]
        %v904 = vld [vmem:[#allocation2 + $0x28] sm:$0xff]
        %v905 = vld [vmem:[#allocation2 + $0x30] sm:$0xff]
        %v906 = vld [vmem:[#allocation2 + $0x38] sm:$0xff]
        %v907 = vld [vmem:[#allocation2 + $0x40] sm:$0xff]
        %v908 = vld [vmem:[#allocation2 + $0x48] sm:$0xff]
        %v909 = vld [vmem:[#allocation2 + $0x50] sm:$0xff]
        %v910 = vld [vmem:[#allocation2 + $0x58] sm:$0xff]
        %v911 = vsub.f32 %v903, %v907
        %v912 = vsub.f32 %v904, %v908
        %v913 = vsub.f32 %v905, %v909
        %v914 = vsub.f32 %v906, %v910
        %v915 = vand.u32 2147483647, %v911
        %v916 = vand.u32 2147483647, %v912
        %v917 = vand.u32 2147483647, %v913
        %v918 = vand.u32 2147483647, %v914
        %v919 = vsel %vm757, %v915, 0.0
        %v920 = vsel %vm757, %v916, 0.0
        %v921 = vadd.f32 %v919, %v920
        %v922 = vsel %vm757, %v917, 0.0
        %v923 = vadd.f32 %v921, %v922
        %v924 = vsel %vm757, %v918, 0.0
        %v925 = vadd.f32 %v923, %v924
        %926 = vadd.xlane.f32.xlu0 %v925
        %v927 = vpop.xlane.xlu0 %926
        %v928 = vrot.slane %v927, 4
        %v929 = vadd.f32 %v927, %v928
        %v930 = vrot.slane %v929, 2
        %v931 = vadd.f32 %v929, %v930
        %v932 = vrot.slane %v931, 1
        %v933 = vadd.f32 %v931, %v932
        %s934 = vtos %v933
        %s935 = smul.f32 %s934, 0.00048828125
        %v936 = vsub.f32 %v899, %v907
        %v937 = vsub.f32 %v900, %v908
        %v938 = vsub.f32 %v901, %v909
        %v939 = vsub.f32 %v902, %v910
        %v940 = vand.u32 2147483647, %v936
        %v941 = vand.u32 2147483647, %v937
        %v942 = vand.u32 2147483647, %v938
        %v943 = vand.u32 2147483647, %v939
        %v944 = vsel %vm757, %v940, 0.0
        %v945 = vsel %vm757, %v941, 0.0
        %v946 = vadd.f32 %v944, %v945
        %v947 = vsel %vm757, %v942, 0.0
        %v948 = vadd.f32 %v946, %v947
        %v949 = vsel %vm757, %v943, 0.0
        %v950 = vadd.f32 %v948, %v949
        %951 = vadd.xlane.f32.xlu0 %v950
        %v952 = vpop.xlane.xlu0 %951
        %v953 = vrot.slane %v952, 4
        %v954 = vadd.f32 %v952, %v953
        %v955 = vrot.slane %v954, 2
        %v956 = vadd.f32 %v954, %v955
        %v957 = vrot.slane %v956, 1
        %v958 = vadd.f32 %v956, %v957
        %s959 = vtos %v958
        %s960 = smul.f32 %s959, 0.00048828125
        %v961 = vld [vmem:[%s413] sm:$0xff]
        %vm962 = vcmp.eq.s32.totalorder %v873, 7
        %vm963 = vmand %vm874, %vm962
        %v964 = vstv %s935
        %v965 = vsel %vm963, %v964, 0.0
        %v966 = vadd.f32 %v961, %v965
        %vm967 = vcmp.eq.s32.totalorder %v873, 8
        %vm968 = vmand %vm874, %vm967
        %v969 = vstv %s960
        %v970 = vsel %vm968, %v969, 0.0
        %v971 = vadd.f32 %v966, %v970
        %972 = vst [vmem:[%s413] sm:$0xff] %v971
      $region56: #{loss_forward.5} parent=47 // pred_fallthru
        _
      %p973 = scmp.lt.s32.totalorder %s22, 1
      %s974 = scalar_select %p973, %s22, 1
      %p975 = scmp.lt.s32.totalorder %s23, 0
      %s976 = scalar_select %p975, %s23, 0
      %s977 = sadd.s32 %s976, %s974
      %s978 = smul.addr %s977, 8
      %s979 = scalar_lea.vmem %s7, %s978
      // Predicated region
      $region57: #{loss_forward.5} parent=47 // pred_check
        %p980 = pneg %p232
      $region58: #{loss_forward.5} parent=47 // pred_check_branch
        %982 = sbr.rel (%p980) target = $region60
      $region59: #{loss_forward.5} parent=47 // pred_region
        _
      $region60: #{loss_forward.5} parent=47 // pred_fallthru
        _
    $region48: #{loss_forward.5} parent=5 // pred_fallthru
      _
    %p983 = scmp.le.s32.totalorder 2, %s13
    // Predicated region
    $region61: #{loss_forward.5} parent=5 // pred_check
      %p984 = pneg %p983
    $region62: #{loss_forward.5} parent=5 // pred_check_branch
      %986 = sbr.rel (%p984) target = $region64
    $region63: #{loss_forward.5} parent=5 // pred_region
      %s987 = ssub.s32 %s13, 2
      // Predicated region
      $region65: #{loss_forward.5} parent=63 // pred_check
        %p988 = pneg %p238
      $region66: #{loss_forward.5} parent=63 // pred_check_branch
        %990 = sbr.rel (%p988) target = $region68
      $region67: #{loss_forward.5} parent=63 // pred_region
        %p991 = scmp.lt.s32.totalorder %s24, 1
        %s992 = scalar_select %p991, %s24, 1
        %p993 = scmp.lt.s32.totalorder %s25, 0
        %s994 = scalar_select %p993, %s25, 0
        %s995 = sadd.s32 %s994, %s992
        %s996 = smul.addr %s995, 8
        %s997 = scalar_lea.vmem %s7, %s996
      $region68: #{loss_forward.5} parent=63 // pred_fallthru
        _
    $region64: #{loss_forward.5} parent=5 // pred_fallthru
      _
  $region6: #{loss_forward.5} parent=0 // loop_footer
    %s17 = sadd.s32 1, %s13
  $region7: #{loss_forward.5} parent=0 // loop_footer_branch
    %12 = sbr.rel target = $region3
  $region8: #{loss_forward.5} parent=0 // loop_exit
    _

// kernel: loss_forward.6
$region0: #{loss_forward.6}
  #allocation0 [shape = 'u32[]', space=smem, size = 0x4, offset = 0x4, fixed_abs, tag = 'smem constant byte address 0x4 - core index']
  #allocation1 [shape = 'u32[72,128]{1,0:T(1,128)}', space=vmem, size = 0x9000, scoped, tag = 'internal scratch']
  #allocation2 [shape = 'f32[3,64,64]{2,1,0:T(8,128)}', space=vmem, size = 0x18000, scoped, tag = 'scratch operand']
  %s0 = inlined_call_operand.vmem [shape: f32[2,1,16], index: 0, kind: input, shape index: {}]
  %s1 = inlined_call_operand.vmem [shape: f32[2,3,16], index: 1, kind: input, shape index: {}]
  %s2 = inlined_call_operand.vmem [shape: f32[2,3,16], index: 2, kind: input, shape index: {}]
  %s3 = inlined_call_operand.vmem [shape: f32[2,3,16], index: 3, kind: input, shape index: {}]
  %s4 = inlined_call_operand.vmem [shape: f32[2,3,16], index: 4, kind: input, shape index: {}]
  %s5 = inlined_call_operand.vmem [shape: f32[16,3], index: 5, kind: input, shape index: {}]
  %s6 = inlined_call_operand.vmem [shape: f32[32,16], index: 6, kind: input, shape index: {}]
  %s7 = inlined_call_operand.vmem [shape: f32[64,32], index: 7, kind: input, shape index: {}]
  %s8 = inlined_call_operand.vmem [shape: f32[2,1,8,128], index: 8, kind: output, shape index: {}]
  %s9 = sld [smem:[#allocation0]]
  $region73: #{loss_forward.6} parent=0
    _
  %s11 = ssub.s32 1, %s9
  %s12 = scalar_select 0, %s11, %s9
  loop: start=0, step=1, limit=4
  $region2: #{loss_forward.6} parent=0 // loop_pre_header
    _
  $region3: #{loss_forward.6} parent=0 // loop_header
    %s14 = sphi 0, %s18
    %p15 = scmp.ge.s32.totalorder %s14, 4
    %s21 = sphi 0, %s33
    %s22 = sphi 0, %s29
    %s23 = sphi 0, %s21
    %s24 = sphi 0, %s22
    %s25 = sphi 0, %s23
    %s26 = sphi 0, %s24
    %s38 = sphi 0, %s40
    %s41 = sphi 0, %s38
    %s42 = sphi 0, %s41
    %s58 = sphi 0, %s42
    %s66 = sphi 0, %s68
    %s69 = sphi 0, %s66
    %s70 = sphi 0, %s69
    %s86 = sphi 0, %s70
    %s94 = sphi 0, %s96
    %s97 = sphi 0, %s94
    %s98 = sphi 0, %s97
    %s114 = sphi 0, %s98
    %s122 = sphi 0, %s124
    %s125 = sphi 0, %s122
    %s126 = sphi 0, %s125
    %s142 = sphi 0, %s126
    %s150 = sphi 0, %s152
    %s153 = sphi 0, %s150
    %s154 = sphi 0, %s153
    %s170 = sphi 0, %s154
    %s174 = sphi 0, %s174
    %s176 = sphi 0, %s174
    %s177 = sphi 0, %s176
    %s191 = sphi 0, %s177
    %s195 = sphi 0, %s195
    %s197 = sphi 0, %s195
    %s198 = sphi 0, %s197
    %s212 = sphi 0, %s198
    %s216 = sphi 0, %s216
    %s218 = sphi 0, %s216
    %s219 = sphi 0, %s218
    %s233 = sphi 0, %s219
    %s241 = sphi 0, %s243
    %s244 = sphi 0, %s241
    %s245 = sphi 0, %s244
    %s261 = sphi 0, %s245
  $region4: #{loss_forward.6} parent=0 // loop_header_branch
    %17 = sbr.rel (%p15) target = $region8
  $region5: #{loss_forward.6} parent=0 // loop_body
    %s19 = ssub.s32 %s14, 1
    %s20 = ssub.s32 %s14, 2
    %s27 = sadd.s32 1, %s22
    %p28 = scmp.ge.s32.totalorder %s27, 1
    %s29 = scalar_select %p28, 0, %s27
    %s30 = sadd.s32 1, %s21
    %s31 = scalar_select %p28, %s30, %s21
    %p32 = scmp.ge.s32.totalorder %s31, 2
    %s33 = scalar_select %p32, 0, %s31
    %s34 = ssub.s32 %s21, %s33
    %s35 = ssub.s32 %s22, %s29
    %s36 = sor.u32 %s34, %s35
    %p37 = scmp.eq.s32.totalorder %s36, 0
    %s39 = sadd.s32 %s38, 1
    %s40 = scalar_select %p37, %s38, %s39
    %p43 = pneg %p37
    %p44 = scmp.eq.s32.totalorder %s14, 1
    %p45 = por %p43, %p44
    %p46 = scmp.ne.s32.totalorder %s38, %s41
    %p47 = scmp.eq.s32.totalorder %s14, 0
    %p48 = por %p46, %p47
    %p49 = scmp.ne.s32.totalorder %s38, %s41
    %p50 = scmp.eq.s32.totalorder %s19, 1
    %p51 = por %p49, %p50
    %p52 = scmp.ne.s32.totalorder %s41, %s42
    %p53 = scmp.eq.s32.totalorder %s19, 0
    %p54 = por %p52, %p53
    %p55 = scmp.ne.s32.totalorder %s41, %s42
    %p56 = scmp.eq.s32.totalorder %s20, 1
    %p57 = por %p55, %p56
    %p59 = scmp.ne.s32.totalorder %s42, %s58
    %p60 = scmp.eq.s32.totalorder %s20, 0
    %p61 = por %p59, %p60
    %s62 = ssub.s32 %s21, %s33
    %s63 = ssub.s32 %s22, %s29
    %s64 = sor.u32 %s62, %s63
    %p65 = scmp.eq.s32.totalorder %s64, 0
    %s67 = sadd.s32 %s66, 1
    %s68 = scalar_select %p65, %s66, %s67
    %p71 = pneg %p65
    %p72 = scmp.eq.s32.totalorder %s14, 1
    %p73 = por %p71, %p72
    %p74 = scmp.ne.s32.totalorder %s66, %s69
    %p75 = scmp.eq.s32.totalorder %s14, 0
    %p76 = por %p74, %p75
    %p77 = scmp.ne.s32.totalorder %s66, %s69
    %p78 = scmp.eq.s32.totalorder %s19, 1
    %p79 = por %p77, %p78
    %p80 = scmp.ne.s32.totalorder %s69, %s70
    %p81 = scmp.eq.s32.totalorder %s19, 0
    %p82 = por %p80, %p81
    %p83 = scmp.ne.s32.totalorder %s69, %s70
    %p84 = scmp.eq.s32.totalorder %s20, 1
    %p85 = por %p83, %p84
    %p87 = scmp.ne.s32.totalorder %s70, %s86
    %p88 = scmp.eq.s32.totalorder %s20, 0
    %p89 = por %p87, %p88
    %s90 = ssub.s32 %s21, %s33
    %s91 = ssub.s32 %s22, %s29
    %s92 = sor.u32 %s90, %s91
    %p93 = scmp.eq.s32.totalorder %s92, 0
    %s95 = sadd.s32 %s94, 1
    %s96 = scalar_select %p93, %s94, %s95
    %p99 = pneg %p93
    %p100 = scmp.eq.s32.totalorder %s14, 1
    %p101 = por %p99, %p100
    %p102 = scmp.ne.s32.totalorder %s94, %s97
    %p103 = scmp.eq.s32.totalorder %s14, 0
    %p104 = por %p102, %p103
    %p105 = scmp.ne.s32.totalorder %s94, %s97
    %p106 = scmp.eq.s32.totalorder %s19, 1
    %p107 = por %p105, %p106
    %p108 = scmp.ne.s32.totalorder %s97, %s98
    %p109 = scmp.eq.s32.totalorder %s19, 0
    %p110 = por %p108, %p109
    %p111 = scmp.ne.s32.totalorder %s97, %s98
    %p112 = scmp.eq.s32.totalorder %s20, 1
    %p113 = por %p111, %p112
    %p115 = scmp.ne.s32.totalorder %s98, %s114
    %p116 = scmp.eq.s32.totalorder %s20, 0
    %p117 = por %p115, %p116
    %s118 = ssub.s32 %s21, %s33
    %s119 = ssub.s32 %s22, %s29
    %s120 = sor.u32 %s118, %s119
    %p121 = scmp.eq.s32.totalorder %s120, 0
    %s123 = sadd.s32 %s122, 1
    %s124 = scalar_select %p121, %s122, %s123
    %p127 = pneg %p121
    %p128 = scmp.eq.s32.totalorder %s14, 1
    %p129 = por %p127, %p128
    %p130 = scmp.ne.s32.totalorder %s122, %s125
    %p131 = scmp.eq.s32.totalorder %s14, 0
    %p132 = por %p130, %p131
    %p133 = scmp.ne.s32.totalorder %s122, %s125
    %p134 = scmp.eq.s32.totalorder %s19, 1
    %p135 = por %p133, %p134
    %p136 = scmp.ne.s32.totalorder %s125, %s126
    %p137 = scmp.eq.s32.totalorder %s19, 0
    %p138 = por %p136, %p137
    %p139 = scmp.ne.s32.totalorder %s125, %s126
    %p140 = scmp.eq.s32.totalorder %s20, 1
    %p141 = por %p139, %p140
    %p143 = scmp.ne.s32.totalorder %s126, %s142
    %p144 = scmp.eq.s32.totalorder %s20, 0
    %p145 = por %p143, %p144
    %s146 = ssub.s32 %s21, %s33
    %s147 = ssub.s32 %s22, %s29
    %s148 = sor.u32 %s146, %s147
    %p149 = scmp.eq.s32.totalorder %s148, 0
    %s151 = sadd.s32 %s150, 1
    %s152 = scalar_select %p149, %s150, %s151
    %p155 = pneg %p149
    %p156 = scmp.eq.s32.totalorder %s14, 1
    %p157 = por %p155, %p156
    %p158 = scmp.ne.s32.totalorder %s150, %s153
    %p159 = scmp.eq.s32.totalorder %s14, 0
    %p160 = por %p158, %p159
    %p161 = scmp.ne.s32.totalorder %s150, %s153
    %p162 = scmp.eq.s32.totalorder %s19, 1
    %p163 = por %p161, %p162
    %p164 = scmp.ne.s32.totalorder %s153, %s154
    %p165 = scmp.eq.s32.totalorder %s19, 0
    %p166 = por %p164, %p165
    %p167 = scmp.ne.s32.totalorder %s153, %s154
    %p168 = scmp.eq.s32.totalorder %s20, 1
    %p169 = por %p167, %p168
    %p171 = scmp.ne.s32.totalorder %s154, %s170
    %p172 = scmp.eq.s32.totalorder %s20, 0
    %p173 = por %p171, %p172
    %s175 = sadd.s32 %s174, 1
    %p178 = scmp.eq.s32.totalorder %s14, 1
    %p179 = scmp.ne.s32.totalorder %s174, %s176
    %p180 = scmp.eq.s32.totalorder %s14, 0
    %p181 = por %p179, %p180
    %p182 = scmp.ne.s32.totalorder %s174, %s176
    %p183 = scmp.eq.s32.totalorder %s19, 1
    %p184 = por %p182, %p183
    %p185 = scmp.ne.s32.totalorder %s176, %s177
    %p186 = scmp.eq.s32.totalorder %s19, 0
    %p187 = por %p185, %p186
    %p188 = scmp.ne.s32.totalorder %s176, %s177
    %p189 = scmp.eq.s32.totalorder %s20, 1
    %p190 = por %p188, %p189
    %p192 = scmp.ne.s32.totalorder %s177, %s191
    %p193 = scmp.eq.s32.totalorder %s20, 0
    %p194 = por %p192, %p193
    %s196 = sadd.s32 %s195, 1
    %p199 = scmp.eq.s32.totalorder %s14, 1
    %p200 = scmp.ne.s32.totalorder %s195, %s197
    %p201 = scmp.eq.s32.totalorder %s14, 0
    %p202 = por %p200, %p201
    %p203 = scmp.ne.s32.totalorder %s195, %s197
    %p204 = scmp.eq.s32.totalorder %s19, 1
    %p205 = por %p203, %p204
    %p206 = scmp.ne.s32.totalorder %s197, %s198
    %p207 = scmp.eq.s32.totalorder %s19, 0
    %p208 = por %p206, %p207
    %p209 = scmp.ne.s32.totalorder %s197, %s198
    %p210 = scmp.eq.s32.totalorder %s20, 1
    %p211 = por %p209, %p210
    %p213 = scmp.ne.s32.totalorder %s198, %s212
    %p214 = scmp.eq.s32.totalorder %s20, 0
    %p215 = por %p213, %p214
    %s217 = sadd.s32 %s216, 1
    %p220 = scmp.eq.s32.totalorder %s14, 1
    %p221 = scmp.ne.s32.totalorder %s216, %s218
    %p222 = scmp.eq.s32.totalorder %s14, 0
    %p223 = por %p221, %p222
    %p224 = scmp.ne.s32.totalorder %s216, %s218
    %p225 = scmp.eq.s32.totalorder %s19, 1
    %p226 = por %p224, %p225
    %p227 = scmp.ne.s32.totalorder %s218, %s219
    %p228 = scmp.eq.s32.totalorder %s19, 0
    %p229 = por %p227, %p228
    %p230 = scmp.ne.s32.totalorder %s218, %s219
    %p231 = scmp.eq.s32.totalorder %s20, 1
    %p232 = por %p230, %p231
    %p234 = scmp.ne.s32.totalorder %s219, %s233
    %p235 = scmp.eq.s32.totalorder %s20, 0
    %p236 = por %p234, %p235
    %s237 = ssub.s32 %s21, %s33
    %s238 = ssub.s32 %s22, %s29
    %s239 = sor.u32 %s237, %s238
    %p240 = scmp.eq.s32.totalorder %s239, 0
    %s242 = sadd.s32 %s241, 1
    %s243 = scalar_select %p240, %s241, %s242
    %p246 = pneg %p240
    %p247 = scmp.eq.s32.totalorder %s14, 1
    %p248 = por %p246, %p247
    %p249 = scmp.ne.s32.totalorder %s241, %s244
    %p250 = scmp.eq.s32.totalorder %s14, 0
    %p251 = por %p249, %p250
    %p252 = scmp.ne.s32.totalorder %s241, %s244
    %p253 = scmp.eq.s32.totalorder %s19, 1
    %p254 = por %p252, %p253
    %p255 = scmp.ne.s32.totalorder %s244, %s245
    %p256 = scmp.eq.s32.totalorder %s19, 0
    %p257 = por %p255, %p256
    %p258 = scmp.ne.s32.totalorder %s244, %s245
    %p259 = scmp.eq.s32.totalorder %s20, 1
    %p260 = por %p258, %p259
    %p262 = scmp.ne.s32.totalorder %s245, %s261
    %p263 = scmp.eq.s32.totalorder %s20, 0
    %p264 = por %p262, %p263
    %p265 = scmp.le.s32.totalorder 1, %s14
    %p266 = scmp.lt.s32.totalorder %s14, 3
    %p267 = pnand %p265, %p266
    %p268 = pneg %p267
    // Predicated region
    $region9: #{loss_forward.6} parent=5 // pred_check
      _
    $region10: #{loss_forward.6} parent=5 // pred_check_branch
      %270 = sbr.rel (%p267) target = $region12
    $region11: #{loss_forward.6} parent=5 // pred_region
      %s271 = ssub.s32 %s14, 1
      // Predicated region
      $region13: #{loss_forward.6} parent=11 // pred_check
        %p272 = pneg %p187
      $region14: #{loss_forward.6} parent=11 // pred_check_branch
        %274 = sbr.rel (%p272) target = $region16
      $region15: #{loss_forward.6} parent=11 // pred_region
        _
      $region16: #{loss_forward.6} parent=11 // pred_fallthru
        _
      // Predicated region
      $region17: #{loss_forward.6} parent=11 // pred_check
        %p275 = pneg %p208
      $region18: #{loss_forward.6} parent=11 // pred_check_branch
        %277 = sbr.rel (%p275) target = $region20
      $region19: #{loss_forward.6} parent=11 // pred_region
        _
      $region20: #{loss_forward.6} parent=11 // pred_fallthru
        _
      // Predicated region
      $region21: #{loss_forward.6} parent=11 // pred_check
        %p278 = pneg %p229
      $region22: #{loss_forward.6} parent=11 // pred_check_branch
        %280 = sbr.rel (%p278) target = $region24
      $region23: #{loss_forward.6} parent=11 // pred_region
        _
      $region24: #{loss_forward.6} parent=11 // pred_fallthru
        _
    $region12: #{loss_forward.6} parent=5 // pred_fallthru
      _
    %p281 = scmp.lt.s32.totalorder %s14, 2
    // Predicated region
    $region25: #{loss_forward.6} parent=5 // pred_check
      %p282 = pneg %p281
    $region26: #{loss_forward.6} parent=5 // pred_check_branch
      %284 = sbr.rel (%p282) target = $region28
    $region27: #{loss_forward.6} parent=5 // pred_region
      // Predicated region
      $region29: #{loss_forward.6} parent=27 // pred_check
        %p285 = pneg %p48
      $region30: #{loss_forward.6} parent=27 // pred_check_branch
        %287 = sbr.rel (%p285) target = $region32
      $region31: #{loss_forward.6} parent=27 // pred_region
        %p288 = scmp.lt.s32.totalorder %s21, 1
        %s289 = scalar_select %p288, %s21, 1
        %p290 = scmp.lt.s32.totalorder %s22, 0
        %s291 = scalar_select %p290, %s22, 0
        %s292 = sadd.s32 %s291, %s289
        %s293 = scalar_lea.vmem %s0, %s292
      $region32: #{loss_forward.6} parent=27 // pred_fallthru
        _
      // Predicated region
      $region33: #{loss_forward.6} parent=27 // pred_check
        %p294 = pneg %p76
      $region34: #{loss_forward.6} parent=27 // pred_check_branch
        %296 = sbr.rel (%p294) target = $region36
      $region35: #{loss_forward.6} parent=27 // pred_region
        %p297 = scmp.lt.s32.totalorder %s21, 1
        %s298 = scalar_select %p297, %s21, 1
        %p299 = scmp.lt.s32.totalorder %s22, 0
        %s300 = scalar_select %p299, %s22, 0
        %s301 = sadd.s32 %s300, %s298
        %s302 = smul.addr %s301, 4
        %s303 = scalar_lea.vmem %s1, %s302
      $region36: #{loss_forward.6} parent=27 // pred_fallthru
        _
      // Predicated region
      $region37: #{loss_forward.6} parent=27 // pred_check
        %p304 = pneg %p104
      $region38: #{loss_forward.6} parent=27 // pred_check_branch
        %306 = sbr.rel (%p304) target = $region40
      $region39: #{loss_forward.6} parent=27 // pred_region
        %p307 = scmp.lt.s32.totalorder %s21, 1
        %s308 = scalar_select %p307, %s21, 1
        %p309 = scmp.lt.s32.totalorder %s22, 0
        %s310 = scalar_select %p309, %s22, 0
        %s311 = sadd.s32 %s310, %s308
        %s312 = smul.addr %s311, 4
        %s313 = scalar_lea.vmem %s2, %s312
      $region40: #{loss_forward.6} parent=27 // pred_fallthru
        _
      // Predicated region
      $region41: #{loss_forward.6} parent=27 // pred_check
        %p314 = pneg %p132
      $region42: #{loss_forward.6} parent=27 // pred_check_branch
        %316 = sbr.rel (%p314) target = $region44
      $region43: #{loss_forward.6} parent=27 // pred_region
        %p317 = scmp.lt.s32.totalorder %s21, 1
        %s318 = scalar_select %p317, %s21, 1
        %p319 = scmp.lt.s32.totalorder %s22, 0
        %s320 = scalar_select %p319, %s22, 0
        %s321 = sadd.s32 %s320, %s318
        %s322 = smul.addr %s321, 4
        %s323 = scalar_lea.vmem %s3, %s322
      $region44: #{loss_forward.6} parent=27 // pred_fallthru
        _
      // Predicated region
      $region45: #{loss_forward.6} parent=27 // pred_check
        %p324 = pneg %p160
      $region46: #{loss_forward.6} parent=27 // pred_check_branch
        %326 = sbr.rel (%p324) target = $region48
      $region47: #{loss_forward.6} parent=27 // pred_region
        %p327 = scmp.lt.s32.totalorder %s21, 1
        %s328 = scalar_select %p327, %s21, 1
        %p329 = scmp.lt.s32.totalorder %s22, 0
        %s330 = scalar_select %p329, %s22, 0
        %s331 = sadd.s32 %s330, %s328
        %s332 = smul.addr %s331, 4
        %s333 = scalar_lea.vmem %s4, %s332
      $region48: #{loss_forward.6} parent=27 // pred_fallthru
        _
    $region28: #{loss_forward.6} parent=5 // pred_fallthru
      _
    %p334 = scmp.le.s32.totalorder 1, %s14
    %p335 = scmp.lt.s32.totalorder %s14, 3
    %p336 = pnand %p334, %p335
    %p337 = pneg %p336
    // Predicated region
    $region49: #{loss_forward.6} parent=5 // pred_check
      _
    $region50: #{loss_forward.6} parent=5 // pred_check_branch
      %339 = sbr.rel (%p336) target = $region52
    $region51: #{loss_forward.6} parent=5 // pred_region
      %s340 = ssub.s32 %s14, 1
      %p341 = scmp.lt.s32.totalorder %s23, 1
      %s342 = scalar_select %p341, %s23, 1
      %p343 = scmp.lt.s32.totalorder %s24, 0
      %s344 = scalar_select %p343, %s24, 0
      %s345 = sadd.s32 %s344, %s342
      %s346 = scalar_lea.vmem %s0, %s345
      %p347 = pneg %p54
      %p348 = pneg %p51
      %p349 = scmp.lt.s32.totalorder %s23, 1
      %s350 = scalar_select %p349, %s23, 1
      %p351 = scmp.lt.s32.totalorder %s24, 0
      %s352 = scalar_select %p351, %s24, 0
      %s353 = sadd.s32 %s352, %s350
      %s354 = smul.addr %s353, 4
      %s355 = scalar_lea.vmem %s1, %s354
      %p356 = pneg %p82
      %p357 = pneg %p79
      %p358 = scmp.lt.s32.totalorder %s23, 1
      %s359 = scalar_select %p358, %s23, 1
      %p360 = scmp.lt.s32.totalorder %s24, 0
      %s361 = scalar_select %p360, %s24, 0
      %s362 = sadd.s32 %s361, %s359
      %s363 = smul.addr %s362, 4
      %s364 = scalar_lea.vmem %s2, %s363
      %p365 = pneg %p110
      %p366 = pneg %p107
      %p367 = scmp.lt.s32.totalorder %s23, 1
      %s368 = scalar_select %p367, %s23, 1
      %p369 = scmp.lt.s32.totalorder %s24, 0
      %s370 = scalar_select %p369, %s24, 0
      %s371 = sadd.s32 %s370, %s368
      %s372 = smul.addr %s371, 4
      %s373 = scalar_lea.vmem %s3, %s372
      %p374 = pneg %p138
      %p375 = pneg %p135
      %p376 = scmp.lt.s32.totalorder %s23, 1
      %s377 = scalar_select %p376, %s23, 1
      %p378 = scmp.lt.s32.totalorder %s24, 0
      %s379 = scalar_select %p378, %s24, 0
      %s380 = sadd.s32 %s379, %s377
      %s381 = smul.addr %s380, 4
      %s382 = scalar_lea.vmem %s4, %s381
      %p383 = pneg %p166
      %p384 = pneg %p163
      %p385 = pneg %p187
      %p386 = pneg %p184
      %p387 = pneg %p208
      %p388 = pneg %p205
      %p389 = pneg %p229
      %p390 = pneg %p226
      %p391 = pneg %p257
      %p392 = pneg %p254
      %p393 = scmp.lt.s32.totalorder %s23, 1
      %s394 = scalar_select %p393, %s23, 1
      %p395 = scmp.lt.s32.totalorder %s24, 0
      %s396 = scalar_select %p395, %s24, 0
      %s397 = sadd.s32 %s396, %s394
      %s398 = smul.addr %s397, 8
      %s399 = scalar_lea.vmem %s8, %s398
      %p400 = scmp.lt.s32.totalorder %s23, 1
      %s401 = scalar_select %p400, %s23, 1
      %p402 = scmp.lt.s32.totalorder %s24, 0
      %s403 = scalar_select %p402, %s24, 0
      %s404 = sadd.s32 %s403, %s401
      %s405 = scalar_lea.vmem %s0, %s404
      %p406 = scmp.lt.s32.totalorder %s23, 1
      %s407 = scalar_select %p406, %s23, 1
      %p408 = scmp.lt.s32.totalorder %s24, 0
      %s409 = scalar_select %p408, %s24, 0
      %s410 = sadd.s32 %s409, %s407
      %s411 = smul.addr %s410, 4
      %s412 = scalar_lea.vmem %s1, %s411
      %p413 = scmp.lt.s32.totalorder %s23, 1
      %s414 = scalar_select %p413, %s23, 1
      %p415 = scmp.lt.s32.totalorder %s24, 0
      %s416 = scalar_select %p415, %s24, 0
      %s417 = sadd.s32 %s416, %s414
      %s418 = smul.addr %s417, 4
      %s419 = scalar_lea.vmem %s2, %s418
      %p420 = scmp.lt.s32.totalorder %s23, 1
      %s421 = scalar_select %p420, %s23, 1
      %p422 = scmp.lt.s32.totalorder %s24, 0
      %s423 = scalar_select %p422, %s24, 0
      %s424 = sadd.s32 %s423, %s421
      %s425 = smul.addr %s424, 4
      %s426 = scalar_lea.vmem %s3, %s425
      %p427 = scmp.lt.s32.totalorder %s23, 1
      %s428 = scalar_select %p427, %s23, 1
      %p429 = scmp.lt.s32.totalorder %s24, 0
      %s430 = scalar_select %p429, %s24, 0
      %s431 = sadd.s32 %s430, %s428
      %s432 = smul.addr %s431, 4
      %s433 = scalar_lea.vmem %s4, %s432
      %p434 = scmp.lt.s32.totalorder %s23, 1
      %s435 = scalar_select %p434, %s23, 1
      %p436 = scmp.lt.s32.totalorder %s24, 0
      %s437 = scalar_select %p436, %s24, 0
      %s438 = sadd.s32 %s437, %s435
      %s439 = smul.addr %s438, 8
      %s440 = scalar_lea.vmem %s8, %s439
      %v441 = vld [vmem:[%s405] sm:$0x1]
      %v442 = vld [vmem:[%s412] sm:$0x7]
      %v443 = vld [vmem:[%s419] sm:$0x7]
      %v444 = vld [vmem:[%s426] sm:$0x7]
      %v445 = vld [vmem:[%s433] sm:$0x7]
      %v446 = vsub.f32 %v445, %v444
      %v447 = vand.u32 2147483647, %v446
      %vm448 = vcmask 124928
      %v449 = vsel %vm448, %v447, 0.0
      %450 = vadd.xlane.f32.xlu0 %v449
      %v451 = vpop.xlane.xlu0 %450
      %v452 = vrot.slane %v451, 4
      %v453 = vadd.f32 %v451, %v452
      %v454 = vrot.slane %v453, 2
      %v455 = vadd.f32 %v453, %v454
      %v456 = vrot.slane %v455, 1
      %v457 = vadd.f32 %v455, %v456
      %s458 = vtos %v457
      %v460 = vperm.slane %v441, 0
      %v462 = vmul.f32 %v460, %v447
      %v463 = vsel %vm448, %v462, 0.0
      %464 = vadd.xlane.f32.xlu0 %v463
      %v465 = vpop.xlane.xlu0 %464
      %v466 = vrot.slane %v465, 4
      %v467 = vadd.f32 %v465, %v466
      %v468 = vrot.slane %v467, 2
      %v469 = vadd.f32 %v467, %v468
      %v470 = vrot.slane %v469, 1
      %v471 = vadd.f32 %v469, %v470
      %s472 = vtos %v471
      %v473 = vmul.f32 %v460, %v442
      %v474 = vsub.f32 1.0, %v441
      %v476 = vperm.slane %v474, 0
      %v478 = vmul.f32 %v476, %v443
      %v479 = vadd.f32 %v473, %v478
      %v480 = vld [vmem:[%s5] sm:$0xff]
      %v481 = vld [vmem:[%s5 + $0x8] sm:$0xff]
      %483 = vset.pattern.permute.xlu0 0
      %484 = vperm.xlu0 %483, %v480
      %v485 = vpop.permute.xlu0 %484
      %488 = vset.pattern.permute.xlu0 0
      %489 = vperm.xlu0 %488, %v481
      %v490 = vpop.permute.xlu0 %489
      %v492 = vperm.slane %v479, 0
      %v493 = vmul.f32 %v485, %v492
      %v494 = vmul.f32 %v490, %v492
      %495 = vset.pattern.permute.xlu0 1
      %496 = vperm.xlu0 %495, %v480
      %v497 = vpop.permute.xlu0 %496
      %499 = vset.pattern.permute.xlu0 1
      %500 = vperm.xlu0 %499, %v481
      %v501 = vpop.permute.xlu0 %500
      %v503 = vperm.slane %v479, 1
      %v504 = vmul.f32 %v497, %v503
      %v505 = vmul.f32 %v501, %v503
      %v506 = vadd.f32 %v493, %v504
      %v507 = vadd.f32 %v494, %v505
      %508 = vset.pattern.permute.xlu0 2
      %509 = vperm.xlu0 %508, %v480
      %v510 = vpop.permute.xlu0 %509
      %512 = vset.pattern.permute.xlu0 2
      %513 = vperm.xlu0 %512, %v481
      %v514 = vpop.permute.xlu0 %513
      %v516 = vperm.slane %v479, 2
      %v517 = vmul.f32 %v510, %v516
      %v518 = vmul.f32 %v514, %v516
      %v519 = vadd.f32 %v506, %v517
      %v520 = vadd.f32 %v507, %v518
      %v521 = vmax.f32 %v519, 0.0
      %v522 = vmax.f32 %v520, 0.0
      %v523 = vld [vmem:[%s6] sm:$0xff]
      %v524 = vld [vmem:[%s6 + $0x8] sm:$0xff]
      %v525 = vld [vmem:[%s6 + $0x10] sm:$0xff]
      %v526 = vld [vmem:[%s6 + $0x18] sm:$0xff]
      %vm527 = vcmask 130048
      %v529 = vsel %vm527, %v523, 0
      %v532 = vsel %vm527, %v524, 0
      %v535 = vsel %vm527, %v525, 0
      %v538 = vsel %vm527, %v526, 0
      %540 = vmatpush.msra.mxu0 0.0
      %541 = vmatpush.msra.mxu0 0.0
      %542 = vmatpush.msra.mxu0 0.0
      %543 = vmatpush.msra.mxu0 0.0
      %544 = vmatpush.msra.mxu0 0.0
      %545 = vmatpush.msra.mxu0 0.0
      %546 = vmatpush.msra.mxu0 0.0
      %547 = vmatpush.msra.mxu0 0.0
      %548 = vmatpush.msra.mxu0 0.0
      %549 = vmatpush.msra.mxu0 0.0
      %550 = vmatpush.msra.mxu0 0.0
      %551 = vmatpush.msra.mxu0 0.0
      %552 = vmatpush.msra.mxu0 0.0
      %553 = vmatpush.msra.mxu0 0.0
      %554 = vmatpush.msra.mxu0 %v522
      %555 = vmatpush.msra.mxu0 %v521
      %556 = vmatmul.f32.gmra.mxu0 %v529
      %v557 = vpop.f32.mrf.mxu0
      %v558 = vadd.f32 0.0, %v557
      %559 = vmatmul.f32.gmra.mxu0 %v532
      %v560 = vpop.f32.mrf.mxu0
      %v561 = vadd.f32 0.0, %v560
      %562 = vmatmul.f32.gmra.mxu0 %v535
      %v563 = vpop.f32.mrf.mxu0
      %v564 = vadd.f32 0.0, %v563
      %565 = vmatmul.f32.gmra.mxu0 %v538
      %v566 = vpop.f32.mrf.mxu0
      %v567 = vadd.f32 0.0, %v566
      %568 = vdwg.mxu0
      %v569 = vmax.f32 %v558, 0.0
      %v570 = vmax.f32 %v561, 0.0
      %v571 = vmax.f32 %v564, 0.0
      %v572 = vmax.f32 %v567, 0.0
      %v573 = vld [vmem:[%s7] sm:$0xff]
      %v574 = vld [vmem:[%s7 + $0x8] sm:$0xff]
      %v575 = vld [vmem:[%s7 + $0x10] sm:$0xff]
      %v576 = vld [vmem:[%s7 + $0x18] sm:$0xff]
      %v577 = vld [vmem:[%s7 + $0x20] sm:$0xff]
      %v578 = vld [vmem:[%s7 + $0x28] sm:$0xff]
      %v579 = vld [vmem:[%s7 + $0x30] sm:$0xff]
      %v580 = vld [vmem:[%s7 + $0x38] sm:$0xff]
      %vm581 = vcmask 261120
      %v583 = vsel %vm581, %v573, 0
      %v586 = vsel %vm581, %v574, 0
      %v589 = vsel %vm581, %v575, 0
      %v592 = vsel %vm581, %v576, 0
      %v595 = vsel %vm581, %v577, 0
      %v598 = vsel %vm581, %v578, 0
      %v601 = vsel %vm581, %v579, 0
      %v604 = vsel %vm581, %v580, 0
      %606 = vmatpush.msra.mxu0 0.0
      %607 = vmatpush.msra.mxu0 0.0
      %608 = vmatpush.msra.mxu0 0.0
      %609 = vmatpush.msra.mxu0 0.0
      %610 = vmatpush.msra.mxu0 0.0
      %611 = vmatpush.msra.mxu0 0.0
      %612 = vmatpush.msra.mxu0 0.0
      %613 = vmatpush.msra.mxu0 0.0
      %614 = vmatpush.msra.mxu0 0.0
      %615 = vmatpush.msra.mxu0 0.0
      %616 = vmatpush.msra.mxu0 0.0
      %617 = vmatpush.msra.mxu0 0.0
      %618 = vmatpush.msra.mxu0 %v572
      %619 = vmatpush.msra.mxu0 %v571
      %620 = vmatpush.msra.mxu0 %v570
      %621 = vmatpush.msra.mxu0 %v569
      %622 = vmatmul.f32.gmra.mxu0 %v583
      %v623 = vpop.f32.mrf.mxu0
      %v624 = vadd.f32 0.0, %v623
      %625 = vmatmul.f32.gmra.mxu0 %v586
      %v626 = vpop.f32.mrf.mxu0
      %v627 = vadd.f32 0.0, %v626
      %628 = vmatmul.f32.gmra.mxu0 %v589
      %v629 = vpop.f32.mrf.mxu0
      %v630 = vadd.f32 0.0, %v629
      %631 = vmatmul.f32.gmra.mxu0 %v592
      %v632 = vpop.f32.mrf.mxu0
      %v633 = vadd.f32 0.0, %v632
      %634 = vmatmul.f32.gmra.mxu0 %v595
      %v635 = vpop.f32.mrf.mxu0
      %v636 = vadd.f32 0.0, %v635
      %637 = vmatmul.f32.gmra.mxu0 %v598
      %v638 = vpop.f32.mrf.mxu0
      %v639 = vadd.f32 0.0, %v638
      %640 = vmatmul.f32.gmra.mxu0 %v601
      %v641 = vpop.f32.mrf.mxu0
      %v642 = vadd.f32 0.0, %v641
      %643 = vmatmul.f32.gmra.mxu0 %v604
      %v644 = vpop.f32.mrf.mxu0
      %v645 = vadd.f32 0.0, %v644
      %646 = vdwg.mxu0
      %v647 = vmax.f32 %v624, 0.0
      %v648 = vmax.f32 %v627, 0.0
      %v649 = vmax.f32 %v630, 0.0
      %v650 = vmax.f32 %v633, 0.0
      %v651 = vmax.f32 %v636, 0.0
      %v652 = vmax.f32 %v639, 0.0
      %v653 = vmax.f32 %v642, 0.0
      %v654 = vmax.f32 %v645, 0.0
      %v655 = vperm.slane %v443, 0
      %v656 = vmul.f32 %v485, %v655
      %v657 = vmul.f32 %v490, %v655
      %v658 = vperm.slane %v443, 1
      %v659 = vmul.f32 %v497, %v658
      %v660 = vmul.f32 %v501, %v658
      %v661 = vadd.f32 %v656, %v659
      %v662 = vadd.f32 %v657, %v660
      %v663 = vperm.slane %v443, 2
      %v664 = vmul.f32 %v510, %v663
      %v665 = vmul.f32 %v514, %v663
      %v666 = vadd.f32 %v661, %v664
      %v667 = vadd.f32 %v662, %v665
      %v668 = vmax.f32 %v666, 0.0
      %v669 = vmax.f32 %v667, 0.0
      %670 = vmatpush.msra.mxu0 0.0
      %671 = vmatpush.msra.mxu0 0.0
      %672 = vmatpush.msra.mxu0 0.0
      %673 = vmatpush.msra.mxu0 0.0
      %674 = vmatpush.msra.mxu0 0.0
      %675 = vmatpush.msra.mxu0 0.0
      %676 = vmatpush.msra.mxu0 0.0
      %677 = vmatpush.msra.mxu0 0.0
      %678 = vmatpush.msra.mxu0 0.0
      %679 = vmatpush.msra.mxu0 0.0
      %680 = vmatpush.msra.mxu0 0.0
      %681 = vmatpush.msra.mxu0 0.0
      %682 = vmatpush.msra.mxu0 0.0
      %683 = vmatpush.msra.mxu0 0.0
      %684 = vmatpush.msra.mxu0 %v669
      %685 = vmatpush.msra.mxu0 %v668
      %686 = vmatmul.f32.gmra.mxu0 %v529
      %v687 = vpop.f32.mrf.mxu0
      %v688 = vadd.f32 0.0, %v687
      %689 = vmatmul.f32.gmra.mxu0 %v532
      %v690 = vpop.f32.mrf.mxu0
      %v691 = vadd.f32 0.0, %v690
      %692 = vmatmul.f32.gmra.mxu0 %v535
      %v693 = vpop.f32.mrf.mxu0
      %v694 = vadd.f32 0.0, %v693
      %695 = vmatmul.f32.gmra.mxu0 %v538
      %v696 = vpop.f32.mrf.mxu0
      %v697 = vadd.f32 0.0, %v696
      %698 = vdwg.mxu0
      %v699 = vmax.f32 %v688, 0.0
      %v700 = vmax.f32 %v691, 0.0
      %v701 = vmax.f32 %v694, 0.0
      %v702 = vmax.f32 %v697, 0.0
      %703 = vmatpush.msra.mxu0 0.0
      %704 = vmatpush.msra.mxu0 0.0
      %705 = vmatpush.msra.mxu0 0.0
      %706 = vmatpush.msra.mxu0 0.0
      %707 = vmatpush.msra.mxu0 0.0
      %708 = vmatpush.msra.mxu0 0.0
      %709 = vmatpush.msra.mxu0 0.0
      %710 = vmatpush.msra.mxu0 0.0
      %711 = vmatpush.msra.mxu0 0.0
      %712 = vmatpush.msra.mxu0 0.0
      %713 = vmatpush.msra.mxu0 0.0
      %714 = vmatpush.msra.mxu0 0.0
      %715 = vmatpush.msra.mxu0 %v702
      %716 = vmatpush.msra.mxu0 %v701
      %717 = vmatpush.msra.mxu0 %v700
      %718 = vmatpush.msra.mxu0 %v699
      %719 = vmatmul.f32.gmra.mxu0 %v583
      %v720 = vpop.f32.mrf.mxu0
      %v721 = vadd.f32 0.0, %v720
      %722 = vmatmul.f32.gmra.mxu0 %v586
      %v723 = vpop.f32.mrf.mxu0
      %v724 = vadd.f32 0.0, %v723
      %725 = vmatmul.f32.gmra.mxu0 %v589
      %v726 = vpop.f32.mrf.mxu0
      %v727 = vadd.f32 0.0, %v726
      %728 = vmatmul.f32.gmra.mxu0 %v592
      %v729 = vpop.f32.mrf.mxu0
      %v730 = vadd.f32 0.0, %v729
      %731 = vmatmul.f32.gmra.mxu0 %v595
      %v732 = vpop.f32.mrf.mxu0
      %v733 = vadd.f32 0.0, %v732
      %734 = vmatmul.f32.gmra.mxu0 %v598
      %v735 = vpop.f32.mrf.mxu0
      %v736 = vadd.f32 0.0, %v735
      %737 = vmatmul.f32.gmra.mxu0 %v601
      %v738 = vpop.f32.mrf.mxu0
      %v739 = vadd.f32 0.0, %v738
      %740 = vmatmul.f32.gmra.mxu0 %v604
      %v741 = vpop.f32.mrf.mxu0
      %v742 = vadd.f32 0.0, %v741
      %743 = vdwg.mxu0
      %v744 = vmax.f32 %v721, 0.0
      %v745 = vmax.f32 %v724, 0.0
      %v746 = vmax.f32 %v727, 0.0
      %v747 = vmax.f32 %v730, 0.0
      %v748 = vmax.f32 %v733, 0.0
      %v749 = vmax.f32 %v736, 0.0
      %v750 = vmax.f32 %v739, 0.0
      %v751 = vmax.f32 %v742, 0.0
      %v752 = vperm.slane %v444, 0
      %v753 = vmul.f32 %v485, %v752
      %v754 = vmul.f32 %v490, %v752
      %v755 = vperm.slane %v444, 1
      %v756 = vmul.f32 %v497, %v755
      %v757 = vmul.f32 %v501, %v755
      %v758 = vadd.f32 %v753, %v756
      %v759 = vadd.f32 %v754, %v757
      %v760 = vperm.slane %v444, 2
      %v761 = vmul.f32 %v510, %v760
      %v762 = vmul.f32 %v514, %v760
      %v763 = vadd.f32 %v758, %v761
      %v764 = vadd.f32 %v759, %v762
      %v765 = vmax.f32 %v763, 0.0
      %v766 = vmax.f32 %v764, 0.0
      %767 = vmatpush.msra.mxu0 0.0
      %768 = vmatpush.msra.mxu0 0.0
      %769 = vmatpush.msra.mxu0 0.0
      %770 = vmatpush.msra.mxu0 0.0
      %771 = vmatpush.msra.mxu0 0.0
      %772 = vmatpush.msra.mxu0 0.0
      %773 = vmatpush.msra.mxu0 0.0
      %774 = vmatpush.msra.mxu0 0.0
      %775 = vmatpush.msra.mxu0 0.0
      %776 = vmatpush.msra.mxu0 0.0
      %777 = vmatpush.msra.mxu0 0.0
      %778 = vmatpush.msra.mxu0 0.0
      %779 = vmatpush.msra.mxu0 0.0
      %780 = vmatpush.msra.mxu0 0.0
      %781 = vmatpush.msra.mxu0 %v766
      %782 = vmatpush.msra.mxu0 %v765
      %783 = vmatmul.f32.gmra.mxu0 %v529
      %v784 = vpop.f32.mrf.mxu0
      %v785 = vadd.f32 0.0, %v784
      %786 = vmatmul.f32.gmra.mxu0 %v532
      %v787 = vpop.f32.mrf.mxu0
      %v788 = vadd.f32 0.0, %v787
      %789 = vmatmul.f32.gmra.mxu0 %v535
      %v790 = vpop.f32.mrf.mxu0
      %v791 = vadd.f32 0.0, %v790
      %792 = vmatmul.f32.gmra.mxu0 %v538
      %v793 = vpop.f32.mrf.mxu0
      %v794 = vadd.f32 0.0, %v793
      %795 = vdwg.mxu0
      %v796 = vmax.f32 %v785, 0.0
      %v797 = vmax.f32 %v788, 0.0
      %v798 = vmax.f32 %v791, 0.0
      %v799 = vmax.f32 %v794, 0.0
      %800 = vmatpush.msra.mxu0 0.0
      %801 = vmatpush.msra.mxu0 0.0
      %802 = vmatpush.msra.mxu0 0.0
      %803 = vmatpush.msra.mxu0 0.0
      %804 = vmatpush.msra.mxu0 0.0
      %805 = vmatpush.msra.mxu0 0.0
      %806 = vmatpush.msra.mxu0 0.0
      %807 = vmatpush.msra.mxu0 0.0
      %808 = vmatpush.msra.mxu0 0.0
      %809 = vmatpush.msra.mxu0 0.0
      %810 = vmatpush.msra.mxu0 0.0
      %811 = vmatpush.msra.mxu0 0.0
      %812 = vmatpush.msra.mxu0 %v799
      %813 = vmatpush.msra.mxu0 %v798
      %814 = vmatpush.msra.mxu0 %v797
      %815 = vmatpush.msra.mxu0 %v796
      %816 = vmatmul.f32.gmra.mxu0 %v583
      %v817 = vpop.f32.mrf.mxu0
      %v818 = vadd.f32 0.0, %v817
      %819 = vmatmul.f32.gmra.mxu0 %v586
      %v820 = vpop.f32.mrf.mxu0
      %v821 = vadd.f32 0.0, %v820
      %822 = vmatmul.f32.gmra.mxu0 %v589
      %v823 = vpop.f32.mrf.mxu0
      %v824 = vadd.f32 0.0, %v823
      %825 = vmatmul.f32.gmra.mxu0 %v592
      %v826 = vpop.f32.mrf.mxu0
      %v827 = vadd.f32 0.0, %v826
      %828 = vmatmul.f32.gmra.mxu0 %v595
      %v829 = vpop.f32.mrf.mxu0
      %v830 = vadd.f32 0.0, %v829
      %831 = vmatmul.f32.gmra.mxu0 %v598
      %v832 = vpop.f32.mrf.mxu0
      %v833 = vadd.f32 0.0, %v832
      %834 = vmatmul.f32.gmra.mxu0 %v601
      %v835 = vpop.f32.mrf.mxu0
      %v836 = vadd.f32 0.0, %v835
      %837 = vmatmul.f32.gmra.mxu0 %v604
      %v838 = vpop.f32.mrf.mxu0
      %v839 = vadd.f32 0.0, %v838
      %840 = vdwg.mxu0
      %v841 = vmax.f32 %v818, 0.0
      %v842 = vmax.f32 %v821, 0.0
      %v843 = vmax.f32 %v824, 0.0
      %v844 = vmax.f32 %v827, 0.0
      %v845 = vmax.f32 %v830, 0.0
      %v846 = vmax.f32 %v833, 0.0
      %v847 = vmax.f32 %v836, 0.0
      %v848 = vmax.f32 %v839, 0.0
      %v849 = vsub.f32 %v744, %v841
      %v850 = vsub.f32 %v745, %v842
      %v851 = vsub.f32 %v746, %v843
      %v852 = vsub.f32 %v747, %v844
      %v853 = vsub.f32 %v748, %v845
      %v854 = vsub.f32 %v749, %v846
      %v855 = vsub.f32 %v750, %v847
      %v856 = vsub.f32 %v751, %v848
      %v857 = vand.u32 2147483647, %v849
      %v858 = vand.u32 2147483647, %v850
      %v859 = vand.u32 2147483647, %v851
      %v860 = vand.u32 2147483647, %v852
      %v861 = vand.u32 2147483647, %v853
      %v862 = vand.u32 2147483647, %v854
      %v863 = vand.u32 2147483647, %v855
      %v864 = vand.u32 2147483647, %v856
      %v865 = vsel %vm527, %v857, 0.0
      %v866 = vsel %vm527, %v858, 0.0
      %v867 = vadd.f32 %v865, %v866
      %v868 = vsel %vm527, %v859, 0.0
      %v869 = vadd.f32 %v867, %v868
      %v870 = vsel %vm527, %v860, 0.0
      %v871 = vadd.f32 %v869, %v870
      %v872 = vsel %vm527, %v861, 0.0
      %v873 = vadd.f32 %v871, %v872
      %v874 = vsel %vm527, %v862, 0.0
      %v875 = vadd.f32 %v873, %v874
      %v876 = vsel %vm527, %v863, 0.0
      %v877 = vadd.f32 %v875, %v876
      %v878 = vsel %vm527, %v864, 0.0
      %v879 = vadd.f32 %v877, %v878
      %880 = vadd.xlane.f32.xlu0 %v879
      %v881 = vpop.xlane.xlu0 %880
      %v882 = vrot.slane %v881, 4
      %v883 = vadd.f32 %v881, %v882
      %v884 = vrot.slane %v883, 2
      %v885 = vadd.f32 %v883, %v884
      %v886 = vrot.slane %v885, 1
      %v887 = vadd.f32 %v885, %v886
      %s888 = vtos %v887
      %v889 = vsub.f32 %v647, %v841
      %v890 = vsub.f32 %v648, %v842
      %v891 = vsub.f32 %v649, %v843
      %v892 = vsub.f32 %v650, %v844
      %v893 = vsub.f32 %v651, %v845
      %v894 = vsub.f32 %v652, %v846
      %v895 = vsub.f32 %v653, %v847
      %v896 = vsub.f32 %v654, %v848
      %v897 = vand.u32 2147483647, %v889
      %v898 = vand.u32 2147483647, %v890
      %v899 = vand.u32 2147483647, %v891
      %v900 = vand.u32 2147483647, %v892
      %v901 = vand.u32 2147483647, %v893
      %v902 = vand.u32 2147483647, %v894
      %v903 = vand.u32 2147483647, %v895
      %v904 = vand.u32 2147483647, %v896
      %v905 = vsel %vm527, %v897, 0.0
      %v906 = vsel %vm527, %v898, 0.0
      %v907 = vadd.f32 %v905, %v906
      %v908 = vsel %vm527, %v899, 0.0
      %v909 = vadd.f32 %v907, %v908
      %v910 = vsel %vm527, %v900, 0.0
      %v911 = vadd.f32 %v909, %v910
      %v912 = vsel %vm527, %v901, 0.0
      %v913 = vadd.f32 %v911, %v912
      %v914 = vsel %vm527, %v902, 0.0
      %v915 = vadd.f32 %v913, %v914
      %v916 = vsel %vm527, %v903, 0.0
      %v917 = vadd.f32 %v915, %v916
      %v918 = vsel %vm527, %v904, 0.0
      %v919 = vadd.f32 %v917, %v918
      %920 = vadd.xlane.f32.xlu0 %v919
      %v921 = vpop.xlane.xlu0 %920
      %v922 = vrot.slane %v921, 4
      %v923 = vadd.f32 %v921, %v922
      %v924 = vrot.slane %v923, 2
      %v925 = vadd.f32 %v923, %v924
      %v926 = vrot.slane %v925, 1
      %v927 = vadd.f32 %v925, %v926
      %s928 = vtos %v927
      %p929 = scmp.eq.s32.totalorder %s24, 0
      // Predicated region
      $region53: #{loss_forward.6} parent=51 // pred_check
        %p930 = pneg %p929
      $region54: #{loss_forward.6} parent=51 // pred_check_branch
        %932 = sbr.rel (%p930) target = $region56
      $region55: #{loss_forward.6} parent=51 // pred_region
        %vm933 = vcmask 523264
        %934 = vst.msk [vmem:[#allocation2] sm:$0xff] %vm933, 0.0
        %935 = vst.msk [vmem:[#allocation2 + $0x8] sm:$0xff] %vm933, 0.0
        %936 = vst.msk [vmem:[#allocation2 + $0x10] sm:$0xff] %vm933, 0.0
        %937 = vst.msk [vmem:[#allocation2 + $0x18] sm:$0xff] %vm933, 0.0
        %938 = vst.msk [vmem:[#allocation2 + $0x20] sm:$0xff] %vm933, 0.0
        %939 = vst.msk [vmem:[#allocation2 + $0x28] sm:$0xff] %vm933, 0.0
        %940 = vst.msk [vmem:[#allocation2 + $0x30] sm:$0xff] %vm933, 0.0
        %941 = vst.msk [vmem:[#allocation2 + $0x38] sm:$0xff] %vm933, 0.0
        %942 = vst.msk [vmem:[#allocation2 + $0x40] sm:$0xff] %vm933, 0.0
        %943 = vst.msk [vmem:[#allocation2 + $0x48] sm:$0xff] %vm933, 0.0
        %944 = vst.msk [vmem:[#allocation2 + $0x50] sm:$0xff] %vm933, 0.0
        %945 = vst.msk [vmem:[#allocation2 + $0x58] sm:$0xff] %vm933, 0.0
        %946 = vst.msk [vmem:[#allocation2 + $0x60] sm:$0xff] %vm933, 0.0
        %947 = vst.msk [vmem:[#allocation2 + $0x68] sm:$0xff] %vm933, 0.0
        %948 = vst.msk [vmem:[#allocation2 + $0x70] sm:$0xff] %vm933, 0.0
        %949 = vst.msk [vmem:[#allocation2 + $0x78] sm:$0xff] %vm933, 0.0
        %950 = vst.msk [vmem:[#allocation2 + $0x80] sm:$0xff] %vm933, 0.0
        %951 = vst.msk [vmem:[#allocation2 + $0x88] sm:$0xff] %vm933, 0.0
        %952 = vst.msk [vmem:[#allocation2 + $0x90] sm:$0xff] %vm933, 0.0
        %953 = vst.msk [vmem:[#allocation2 + $0x98] sm:$0xff] %vm933, 0.0
        %954 = vst.msk [vmem:[#allocation2 + $0xa0] sm:$0xff] %vm933, 0.0
        %955 = vst.msk [vmem:[#allocation2 + $0xa8] sm:$0xff] %vm933, 0.0
        %956 = vst.msk [vmem:[#allocation2 + $0xb0] sm:$0xff] %vm933, 0.0
        %957 = vst.msk [vmem:[#allocation2 + $0xb8] sm:$0xff] %vm933, 0.0
      $region56: #{loss_forward.6} parent=51 // pred_fallthru
        _
      %v958 = vld [vmem:[#allocation2] sm:$0xff]
      %v959 = vld [vmem:[#allocation2 + $0x8] sm:$0xff]
      %v960 = vld [vmem:[#allocation2 + $0x10] sm:$0xff]
      %v961 = vld [vmem:[#allocation2 + $0x18] sm:$0xff]
      %v962 = vld [vmem:[#allocation2 + $0x20] sm:$0xff]
      %v963 = vld [vmem:[#allocation2 + $0x28] sm:$0xff]
      %v964 = vld [vmem:[#allocation2 + $0x30] sm:$0xff]
      %v965 = vld [vmem:[#allocation2 + $0x38] sm:$0xff]
      %v967 = vsel %vm527, %v647, 0
      %v970 = vsel %vm527, %v648, 0
      %v973 = vsel %vm527, %v649, 0
      %v976 = vsel %vm527, %v650, 0
      %v979 = vsel %vm527, %v651, 0
      %v982 = vsel %vm527, %v652, 0
      %v985 = vsel %vm527, %v653, 0
      %v988 = vsel %vm527, %v654, 0
      %990 = vmatpush.xpose.msra.mxu0 0.0
      %991 = vmatpush.xpose.msra.mxu0 0.0
      %992 = vmatpush.xpose.msra.mxu0 0.0
      %993 = vmatpush.xpose.msra.mxu0 0.0
      %994 = vmatpush.xpose.msra.mxu0 0.0
      %995 = vmatpush.xpose.msra.mxu0 0.0
      %996 = vmatpush.xpose.msra.mxu0 0.0
      %997 = vmatpush.xpose.msra.mxu0 0.0
      %998 = vmatpush.xpose.msra.mxu0 %v988
      %999 = vmatpush.xpose.msra.mxu0 %v985
      %1000 = vmatpush.xpose.msra.mxu0 %v982
      %1001 = vmatpush.xpose.msra.mxu0 %v979
      %1002 = vmatpush.xpose.msra.mxu0 %v976
      %1003 = vmatpush.xpose.msra.mxu0 %v973
      %1004 = vmatpush.xpose.msra.mxu0 %v970
      %1005 = vmatpush.xpose.msra.mxu0 %v967
      %1006 = vmatmul.f32.gmra.mxu0 %v967
      %v1007 = vpop.f32.mrf.mxu0
      %v1008 = vadd.f32 0.0, %v1007
      %1009 = vmatmul.f32.gmra.mxu0 %v970
      %v1010 = vpop.f32.mrf.mxu0
      %v1011 = vadd.f32 0.0, %v1010
      %1012 = vmatmul.f32.gmra.mxu0 %v973
      %v1013 = vpop.f32.mrf.mxu0
      %v1014 = vadd.f32 0.0, %v1013
      %1015 = vmatmul.f32.gmra.mxu0 %v976
      %v1016 = vpop.f32.mrf.mxu0
      %v1017 = vadd.f32 0.0, %v1016
      %1018 = vmatmul.f32.gmra.mxu0 %v979
      %v1019 = vpop.f32.mrf.mxu0
      %v1020 = vadd.f32 0.0, %v1019
      %1021 = vmatmul.f32.gmra.mxu0 %v982
      %v1022 = vpop.f32.mrf.mxu0
      %v1023 = vadd.f32 0.0, %v1022
      %1024 = vmatmul.f32.gmra.mxu0 %v985
      %v1025 = vpop.f32.mrf.mxu0
      %v1026 = vadd.f32 0.0, %v1025
      %1027 = vmatmul.f32.gmra.mxu0 %v988
      %v1028 = vpop.f32.mrf.mxu0
      %v1029 = vadd.f32 0.0, %v1028
      %1030 = vdwg.mxu0
      %v1031 = vadd.f32 %v958, %v1008
      %v1032 = vadd.f32 %v959, %v1011
      %v1033 = vadd.f32 %v960, %v1014
      %v1034 = vadd.f32 %v961, %v1017
      %v1035 = vadd.f32 %v962, %v1020
      %v1036 = vadd.f32 %v963, %v1023
      %v1037 = vadd.f32 %v964, %v1026
      %v1038 = vadd.f32 %v965, %v1029
      %vm1039 = vcmask 523264
      %1040 = vst.msk [vmem:[#allocation2] sm:$0xff] %vm1039, %v1031
      %1041 = vst.msk [vmem:[#allocation2 + $0x8] sm:$0xff] %vm1039, %v1032
      %1042 = vst.msk [vmem:[#allocation2 + $0x10] sm:$0xff] %vm1039, %v1033
      %1043 = vst.msk [vmem:[#allocation2 + $0x18] sm:$0xff] %vm1039, %v1034
      %1044 = vst.msk [vmem:[#allocation2 + $0x20] sm:$0xff] %vm1039, %v1035
      %1045 = vst.msk [vmem:[#allocation2 + $0x28] sm:$0xff] %vm1039, %v1036
      %1046 = vst.msk [vmem:[#allocation2 + $0x30] sm:$0xff] %vm1039, %v1037
      %1047 = vst.msk [vmem:[#allocation2 + $0x38] sm:$0xff] %vm1039, %v1038
      %s1048 = scalar_lea.vmem [#allocation2], 64
      %v1049 = vld [vmem:[%s1048] sm:$0xff]
      %v1050 = vld [vmem:[%s1048 + $0x8] sm:$0xff]
      %v1051 = vld [vmem:[%s1048 + $0x10] sm:$0xff]
      %v1052 = vld [vmem:[%s1048 + $0x18] sm:$0xff]
      %v1053 = vld [vmem:[%s1048 + $0x20] sm:$0xff]
      %v1054 = vld [vmem:[%s1048 + $0x28] sm:$0xff]
      %v1055 = vld [vmem:[%s1048 + $0x30] sm:$0xff]
      %v1056 = vld [vmem:[%s1048 + $0x38] sm:$0xff]
      %v1058 = vsel %vm527, %v744, 0
      %v1061 = vsel %vm527, %v745, 0
      %v1064 = vsel %vm527, %v746, 0
      %v1067 = vsel %vm527, %v747, 0
      %v1070 = vsel %vm527, %v748, 0
      %v1073 = vsel %vm527, %v749, 0
      %v1076 = vsel %vm527, %v750, 0
      %v1079 = vsel %vm527, %v751, 0
      %1081 = vmatpush.xpose.msra.mxu0 0.0
      %1082 = vmatpush.xpose.msra.mxu0 0.0
      %1083 = vmatpush.xpose.msra.mxu0 0.0
      %1084 = vmatpush.xpose.msra.mxu0 0.0
      %1085 = vmatpush.xpose.msra.mxu0 0.0
      %1086 = vmatpush.xpose.msra.mxu0 0.0
      %1087 = vmatpush.xpose.msra.mxu0 0.0
      %1088 = vmatpush.xpose.msra.mxu0 0.0
      %1089 = vmatpush.xpose.msra.mxu0 %v1079
      %1090 = vmatpush.xpose.msra.mxu0 %v1076
      %1091 = vmatpush.xpose.msra.mxu0 %v1073
      %1092 = vmatpush.xpose.msra.mxu0 %v1070
      %1093 = vmatpush.xpose.msra.mxu0 %v1067
      %1094 = vmatpush.xpose.msra.mxu0 %v1064
      %1095 = vmatpush.xpose.msra.mxu0 %v1061
      %1096 = vmatpush.xpose.msra.mxu0 %v1058
      %1097 = vmatmul.f32.gmra.mxu0 %v1058
      %v1098 = vpop.f32.mrf.mxu0
      %v1099 = vadd.f32 0.0, %v1098
      %1100 = vmatmul.f32.gmra.mxu0 %v1061
      %v1101 = vpop.f32.mrf.mxu0
      %v1102 = vadd.f32 0.0, %v1101
      %1103 = vmatmul.f32.gmra.mxu0 %v1064
      %v1104 = vpop.f32.mrf.mxu0
      %v1105 = vadd.f32 0.0, %v1104
      %1106 = vmatmul.f32.gmra.mxu0 %v1067
      %v1107 = vpop.f32.mrf.mxu0
      %v1108 = vadd.f32 0.0, %v1107
      %1109 = vmatmul.f32.gmra.mxu0 %v1070
      %v1110 = vpop.f32.mrf.mxu0
      %v1111 = vadd.f32 0.0, %v1110
      %1112 = vmatmul.f32.gmra.mxu0 %v1073
      %v1113 = vpop.f32.mrf.mxu0
      %v1114 = vadd.f32 0.0, %v1113
      %1115 = vmatmul.f32.gmra.mxu0 %v1076
      %v1116 = vpop.f32.mrf.mxu0
      %v1117 = vadd.f32 0.0, %v1116
      %1118 = vmatmul.f32.gmra.mxu0 %v1079
      %v1119 = vpop.f32.mrf.mxu0
      %v1120 = vadd.f32 0.0, %v1119
      %1121 = vdwg.mxu0
      %v1122 = vadd.f32 %v1049, %v1099
      %v1123 = vadd.f32 %v1050, %v1102
      %v1124 = vadd.f32 %v1051, %v1105
      %v1125 = vadd.f32 %v1052, %v1108
      %v1126 = vadd.f32 %v1053, %v1111
      %v1127 = vadd.f32 %v1054, %v1114
      %v1128 = vadd.f32 %v1055, %v1117
      %v1129 = vadd.f32 %v1056, %v1120
      %1130 = vst.msk [vmem:[%s1048] sm:$0xff] %vm1039, %v1122
      %1131 = vst.msk [vmem:[%s1048 + $0x8] sm:$0xff] %vm1039, %v1123
      %1132 = vst.msk [vmem:[%s1048 + $0x10] sm:$0xff] %vm1039, %v1124
      %1133 = vst.msk [vmem:[%s1048 + $0x18] sm:$0xff] %vm1039, %v1125
      %1134 = vst.msk [vmem:[%s1048 + $0x20] sm:$0xff] %vm1039, %v1126
      %1135 = vst.msk [vmem:[%s1048 + $0x28] sm:$0xff] %vm1039, %v1127
      %1136 = vst.msk [vmem:[%s1048 + $0x30] sm:$0xff] %vm1039, %v1128
      %1137 = vst.msk [vmem:[%s1048 + $0x38] sm:$0xff] %vm1039, %v1129
      %s1138 = scalar_lea.vmem [#allocation2], 128
      %v1139 = vld [vmem:[%s1138] sm:$0xff]
      %v1140 = vld [vmem:[%s1138 + $0x8] sm:$0xff]
      %v1141 = vld [vmem:[%s1138 + $0x10] sm:$0xff]
      %v1142 = vld [vmem:[%s1138 + $0x18] sm:$0xff]
      %v1143 = vld [vmem:[%s1138 + $0x20] sm:$0xff]
      %v1144 = vld [vmem:[%s1138 + $0x28] sm:$0xff]
      %v1145 = vld [vmem:[%s1138 + $0x30] sm:$0xff]
      %v1146 = vld [vmem:[%s1138 + $0x38] sm:$0xff]
      %v1148 = vsel %vm527, %v841, 0
      %v1151 = vsel %vm527, %v842, 0
      %v1154 = vsel %vm527, %v843, 0
      %v1157 = vsel %vm527, %v844, 0
      %v1160 = vsel %vm527, %v845, 0
      %v1163 = vsel %vm527, %v846, 0
      %v1166 = vsel %vm527, %v847, 0
      %v1169 = vsel %vm527, %v848, 0
      %1171 = vmatpush.xpose.msra.mxu0 0.0
      %1172 = vmatpush.xpose.msra.mxu0 0.0
      %1173 = vmatpush.xpose.msra.mxu0 0.0
      %1174 = vmatpush.xpose.msra.mxu0 0.0
      %1175 = vmatpush.xpose.msra.mxu0 0.0
      %1176 = vmatpush.xpose.msra.mxu0 0.0
      %1177 = vmatpush.xpose.msra.mxu0 0.0
      %1178 = vmatpush.xpose.msra.mxu0 0.0
      %1179 = vmatpush.xpose.msra.mxu0 %v1169
      %1180 = vmatpush.xpose.msra.mxu0 %v1166
      %1181 = vmatpush.xpose.msra.mxu0 %v1163
      %1182 = vmatpush.xpose.msra.mxu0 %v1160
      %1183 = vmatpush.xpose.msra.mxu0 %v1157
      %1184 = vmatpush.xpose.msra.mxu0 %v1154
      %1185 = vmatpush.xpose.msra.mxu0 %v1151
      %1186 = vmatpush.xpose.msra.mxu0 %v1148
      %1187 = vmatmul.f32.gmra.mxu0 %v1148
      %v1188 = vpop.f32.mrf.mxu0
      %v1189 = vadd.f32 0.0, %v1188
      %1190 = vmatmul.f32.gmra.mxu0 %v1151
      %v1191 = vpop.f32.mrf.mxu0
      %v1192 = vadd.f32 0.0, %v1191
      %1193 = vmatmul.f32.gmra.mxu0 %v1154
      %v1194 = vpop.f32.mrf.mxu0
      %v1195 = vadd.f32 0.0, %v1194
      %1196 = vmatmul.f32.gmra.mxu0 %v1157
      %v1197 = vpop.f32.mrf.mxu0
      %v1198 = vadd.f32 0.0, %v1197
      %1199 = vmatmul.f32.gmra.mxu0 %v1160
      %v1200 = vpop.f32.mrf.mxu0
      %v1201 = vadd.f32 0.0, %v1200
      %1202 = vmatmul.f32.gmra.mxu0 %v1163
      %v1203 = vpop.f32.mrf.mxu0
      %v1204 = vadd.f32 0.0, %v1203
      %1205 = vmatmul.f32.gmra.mxu0 %v1166
      %v1206 = vpop.f32.mrf.mxu0
      %v1207 = vadd.f32 0.0, %v1206
      %1208 = vmatmul.f32.gmra.mxu0 %v1169
      %v1209 = vpop.f32.mrf.mxu0
      %v1210 = vadd.f32 0.0, %v1209
      %1211 = vdwg.mxu0
      %v1212 = vadd.f32 %v1139, %v1189
      %v1213 = vadd.f32 %v1140, %v1192
      %v1214 = vadd.f32 %v1141, %v1195
      %v1215 = vadd.f32 %v1142, %v1198
      %v1216 = vadd.f32 %v1143, %v1201
      %v1217 = vadd.f32 %v1144, %v1204
      %v1218 = vadd.f32 %v1145, %v1207
      %v1219 = vadd.f32 %v1146, %v1210
      %1220 = vst.msk [vmem:[%s1138] sm:$0xff] %vm1039, %v1212
      %1221 = vst.msk [vmem:[%s1138 + $0x8] sm:$0xff] %vm1039, %v1213
      %1222 = vst.msk [vmem:[%s1138 + $0x10] sm:$0xff] %vm1039, %v1214
      %1223 = vst.msk [vmem:[%s1138 + $0x18] sm:$0xff] %vm1039, %v1215
      %1224 = vst.msk [vmem:[%s1138 + $0x20] sm:$0xff] %vm1039, %v1216
      %1225 = vst.msk [vmem:[%s1138 + $0x28] sm:$0xff] %vm1039, %v1217
      %1226 = vst.msk [vmem:[%s1138 + $0x30] sm:$0xff] %vm1039, %v1218
      %1227 = vst.msk [vmem:[%s1138 + $0x38] sm:$0xff] %vm1039, %v1219
      %v1228 = vlaneseq
      %v1229 = vshrl.u32 %v1228, 7
      %v1230 = vlaneseq
      %v1231 = vand.u32 %v1230, 127
      %vm1232 = vcmp.eq.s32.totalorder %v1229, 0
      %vm1233 = vcmp.eq.s32.totalorder %v1231, 0
      %vm1234 = vmand %vm1232, %vm1233
      %v1235 = vstv %s458
      %v1236 = vsel %vm1234, %v1235, 0.0
      %v1237 = vadd.f32 %v1236, 0.0
      %vm1238 = vcmp.eq.s32.totalorder %v1231, 1
      %vm1239 = vmand %vm1232, %vm1238
      %v1240 = vstv %s472
      %v1241 = vsel %vm1239, %v1240, 0.0
      %v1242 = vadd.f32 %v1237, %v1241
      %vm1243 = vcmp.eq.s32.totalorder %v1231, 2
      %vm1244 = vmand %vm1232, %vm1243
      %v1245 = vstv %s888
      %v1246 = vsel %vm1244, %v1245, 0.0
      %v1247 = vadd.f32 %v1242, %v1246
      %vm1248 = vcmp.eq.s32.totalorder %v1231, 3
      %vm1249 = vmand %vm1232, %vm1248
      %v1250 = vstv %s928
      %v1251 = vsel %vm1249, %v1250, 0.0
      %v1252 = vadd.f32 %v1247, %v1251
      %1253 = vst [vmem:[%s440] sm:$0xff] %v1252
      // Predicated region
      $region57: #{loss_forward.6} parent=51 // pred_check
        %p1254 = pneg %p929
      $region58: #{loss_forward.6} parent=51 // pred_check_branch
        %1256 = sbr.rel (%p1254) target = $region60
      $region59: #{loss_forward.6} parent=51 // pred_region
        %v1257 = vld [vmem:[#allocation2] sm:$0xff]
        %v1258 = vld [vmem:[#allocation2 + $0x8] sm:$0xff]
        %v1259 = vld [vmem:[#allocation2 + $0x10] sm:$0xff]
        %v1260 = vld [vmem:[#allocation2 + $0x18] sm:$0xff]
        %v1261 = vld [vmem:[#allocation2 + $0x20] sm:$0xff]
        %v1262 = vld [vmem:[#allocation2 + $0x28] sm:$0xff]
        %v1263 = vld [vmem:[#allocation2 + $0x30] sm:$0xff]
        %v1264 = vld [vmem:[#allocation2 + $0x38] sm:$0xff]
        %v1265 = vld [vmem:[#allocation2 + $0x40] sm:$0xff]
        %v1266 = vld [vmem:[#allocation2 + $0x48] sm:$0xff]
        %v1267 = vld [vmem:[#allocation2 + $0x50] sm:$0xff]
        %v1268 = vld [vmem:[#allocation2 + $0x58] sm:$0xff]
        %v1269 = vld [vmem:[#allocation2 + $0x60] sm:$0xff]
        %v1270 = vld [vmem:[#allocation2 + $0x68] sm:$0xff]
        %v1271 = vld [vmem:[#allocation2 + $0x70] sm:$0xff]
        %v1272 = vld [vmem:[#allocation2 + $0x78] sm:$0xff]
        %v1273 = vld [vmem:[#allocation2 + $0x80] sm:$0xff]
        %v1274 = vld [vmem:[#allocation2 + $0x88] sm:$0xff]
        %v1275 = vld [vmem:[#allocation2 + $0x90] sm:$0xff]
        %v1276 = vld [vmem:[#allocation2 + $0x98] sm:$0xff]
        %v1277 = vld [vmem:[#allocation2 + $0xa0] sm:$0xff]
        %v1278 = vld [vmem:[#allocation2 + $0xa8] sm:$0xff]
        %v1279 = vld [vmem:[#allocation2 + $0xb0] sm:$0xff]
        %v1280 = vld [vmem:[#allocation2 + $0xb8] sm:$0xff]
        %v1281 = vsub.f32 %v1265, %v1273
        %v1282 = vsub.f32 %v1266, %v1274
        %v1283 = vsub.f32 %v1267, %v1275
        %v1284 = vsub.f32 %v1268, %v1276
        %v1285 = vsub.f32 %v1269, %v1277
        %v1286 = vsub.f32 %v1270, %v1278
        %v1287 = vsub.f32 %v1271, %v1279
        %v1288 = vsub.f32 %v1272, %v1280
        %v1289 = vand.u32 2147483647, %v1281
        %v1290 = vand.u32 2147483647, %v1282
        %v1291 = vand.u32 2147483647, %v1283
        %v1292 = vand.u32 2147483647, %v1284
        %v1293 = vand.u32 2147483647, %v1285
        %v1294 = vand.u32 2147483647, %v1286
        %v1295 = vand.u32 2147483647, %v1287
        %v1296 = vand.u32 2147483647, %v1288
        %v1297 = vsel %vm1039, %v1289, 0.0
        %v1298 = vsel %vm1039, %v1290, 0.0
        %v1299 = vadd.f32 %v1297, %v1298
        %v1300 = vsel %vm1039, %v1291, 0.0
        %v1301 = vadd.f32 %v1299, %v1300
        %v1302 = vsel %vm1039, %v1292, 0.0
        %v1303 = vadd.f32 %v1301, %v1302
        %v1304 = vsel %vm1039, %v1293, 0.0
        %v1305 = vadd.f32 %v1303, %v1304
        %v1306 = vsel %vm1039, %v1294, 0.0
        %v1307 = vadd.f32 %v1305, %v1306
        %v1308 = vsel %vm1039, %v1295, 0.0
        %v1309 = vadd.f32 %v1307, %v1308
        %v1310 = vsel %vm1039, %v1296, 0.0
        %v1311 = vadd.f32 %v1309, %v1310
        %1312 = vadd.xlane.f32.xlu0 %v1311
        %v1313 = vpop.xlane.xlu0 %1312
        %v1314 = vrot.slane %v1313, 4
        %v1315 = vadd.f32 %v1313, %v1314
        %v1316 = vrot.slane %v1315, 2
        %v1317 = vadd.f32 %v1315, %v1316
        %v1318 = vrot.slane %v1317, 1
        %v1319 = vadd.f32 %v1317, %v1318
        %s1320 = vtos %v1319
        %s1321 = smul.f32 %s1320, 0.0009765625
        %v1322 = vsub.f32 %v1257, %v1273
        %v1323 = vsub.f32 %v1258, %v1274
        %v1324 = vsub.f32 %v1259, %v1275
        %v1325 = vsub.f32 %v1260, %v1276
        %v1326 = vsub.f32 %v1261, %v1277
        %v1327 = vsub.f32 %v1262, %v1278
        %v1328 = vsub.f32 %v1263, %v1279
        %v1329 = vsub.f32 %v1264, %v1280
        %v1330 = vand.u32 2147483647, %v1322
        %v1331 = vand.u32 2147483647, %v1323
        %v1332 = vand.u32 2147483647, %v1324
        %v1333 = vand.u32 2147483647, %v1325
        %v1334 = vand.u32 2147483647, %v1326
        %v1335 = vand.u32 2147483647, %v1327
        %v1336 = vand.u32 2147483647, %v1328
        %v1337 = vand.u32 2147483647, %v1329
        %v1338 = vsel %vm1039, %v1330, 0.0
        %v1339 = vsel %vm1039, %v1331, 0.0
        %v1340 = vadd.f32 %v1338, %v1339
        %v1341 = vsel %vm1039, %v1332, 0.0
        %v1342 = vadd.f32 %v1340, %v1341
        %v1343 = vsel %vm1039, %v1333, 0.0
        %v1344 = vadd.f32 %v1342, %v1343
        %v1345 = vsel %vm1039, %v1334, 0.0
        %v1346 = vadd.f32 %v1344, %v1345
        %v1347 = vsel %vm1039, %v1335, 0.0
        %v1348 = vadd.f32 %v1346, %v1347
        %v1349 = vsel %vm1039, %v1336, 0.0
        %v1350 = vadd.f32 %v1348, %v1349
        %v1351 = vsel %vm1039, %v1337, 0.0
        %v1352 = vadd.f32 %v1350, %v1351
        %1353 = vadd.xlane.f32.xlu0 %v1352
        %v1354 = vpop.xlane.xlu0 %1353
        %v1355 = vrot.slane %v1354, 4
        %v1356 = vadd.f32 %v1354, %v1355
        %v1357 = vrot.slane %v1356, 2
        %v1358 = vadd.f32 %v1356, %v1357
        %v1359 = vrot.slane %v1358, 1
        %v1360 = vadd.f32 %v1358, %v1359
        %s1361 = vtos %v1360
        %s1362 = smul.f32 %s1361, 0.0009765625
        %v1363 = vld [vmem:[%s440] sm:$0xff]
        %vm1364 = vcmp.eq.s32.totalorder %v1231, 7
        %vm1365 = vmand %vm1232, %vm1364
        %v1366 = vstv %s1321
        %v1367 = vsel %vm1365, %v1366, 0.0
        %v1368 = vadd.f32 %v1363, %v1367
        %vm1369 = vcmp.eq.s32.totalorder %v1231, 8
        %vm1370 = vmand %vm1232, %vm1369
        %v1371 = vstv %s1362
        %v1372 = vsel %vm1370, %v1371, 0.0
        %v1373 = vadd.f32 %v1368, %v1372
        %1374 = vst [vmem:[%s440] sm:$0xff] %v1373
      $region60: #{loss_forward.6} parent=51 // pred_fallthru
        _
      %p1375 = scmp.lt.s32.totalorder %s23, 1
      %s1376 = scalar_select %p1375, %s23, 1
      %p1377 = scmp.lt.s32.totalorder %s24, 0
      %s1378 = scalar_select %p1377, %s24, 0
      %s1379 = sadd.s32 %s1378, %s1376
      %s1380 = smul.addr %s1379, 8
      %s1381 = scalar_lea.vmem %s8, %s1380
      // Predicated region
      $region61: #{loss_forward.6} parent=51 // pred_check
        %p1382 = pneg %p254
      $region62: #{loss_forward.6} parent=51 // pred_check_branch
        %1384 = sbr.rel (%p1382) target = $region64
      $region63: #{loss_forward.6} parent=51 // pred_region
        _
      $region64: #{loss_forward.6} parent=51 // pred_fallthru
        _
    $region52: #{loss_forward.6} parent=5 // pred_fallthru
      _
    %p1385 = scmp.le.s32.totalorder 2, %s14
    // Predicated region
    $region65: #{loss_forward.6} parent=5 // pred_check
      %p1386 = pneg %p1385
    $region66: #{loss_forward.6} parent=5 // pred_check_branch
      %1388 = sbr.rel (%p1386) target = $region68
    $region67: #{loss_forward.6} parent=5 // pred_region
      %s1389 = ssub.s32 %s14, 2
      // Predicated region
      $region69: #{loss_forward.6} parent=67 // pred_check
        %p1390 = pneg %p260
      $region70: #{loss_forward.6} parent=67 // pred_check_branch
        %1392 = sbr.rel (%p1390) target = $region72
      $region71: #{loss_forward.6} parent=67 // pred_region
        %p1393 = scmp.lt.s32.totalorder %s25, 1
        %s1394 = scalar_select %p1393, %s25, 1
        %p1395 = scmp.lt.s32.totalorder %s26, 0
        %s1396 = scalar_select %p1395, %s26, 0
        %s1397 = sadd.s32 %s1396, %s1394
        %s1398 = smul.addr %s1397, 8
        %s1399 = scalar_lea.vmem %s8, %s1398
      $region72: #{loss_forward.6} parent=67 // pred_fallthru
        _
    $region68: #{loss_forward.6} parent=5 // pred_fallthru
      _
  $region6: #{loss_forward.6} parent=0 // loop_footer
    %s18 = sadd.s32 1, %s14
  $region7: #{loss_forward.6} parent=0 // loop_footer_branch
    %13 = sbr.rel target = $region3
  $region8: #{loss_forward.6} parent=0 // loop_exit
    _

</llo_original>
